<compile_context>
chip_gen: v6e
topology: v6e:2x2x1
jax: 0.10.0
libtpu: 0.0.40
codegen_flags: <defaults>
</compile_context>

<pallas_src>
import functools

import jax
import jax.numpy as jnp
from jax.experimental import pallas as pl
from jax.experimental.pallas import tpu as pltpu


# Static architecture config (Python ints only -- never traced).
CFG = dict(img_size=32, patch_size=16, in_chans=3, embed_dim=64, depth=2,
           num_heads=2, mlp_ratio=4, num_classes=10, num_classes_padded=128,
           ln_eps=1e-6)

_SUBLANE = 8
_MXU_ROWS = 128


def _seq_pad(cfg):
    num_patches = (cfg["img_size"] // cfg["patch_size"]) ** 2
    s = num_patches + 1                       # patches + CLS
    return -(-s // _SUBLANE) * _SUBLANE       # round up to full sublanes


# ----------------------------------------------------------------------------
# Fused kernel. grid = (batch_blocks, depth); one transformer block per step.
# ----------------------------------------------------------------------------
def _vit_fused_kernel(patches_ref, pos_bias_ref, patch_w_ref, mask_ref,
                      ln1_g_ref, ln1_b_ref, q_w_ref, q_b_ref, k_w_ref,
                      k_b_ref, v_w_ref, v_b_ref, proj_w_ref, proj_b_ref,
                      ln2_g_ref, ln2_b_ref, fc1_w_ref, fc1_b_ref,
                      fc2_w_ref, fc2_b_ref, lnf_g_ref, lnf_b_ref,
                      head_w_ref, head_b_ref, out_ref, x_ref,
                      *, num_heads, head_dim, bblk, s_pad, eps):
    f32 = jnp.float32
    bf16 = jnp.bfloat16
    scale = f32(head_dim ** -0.5)
    D = patch_w_ref.shape[1]
    M = bblk * s_pad
    layer = pl.program_id(1)

    def layer_norm(v, g, b):
        v = v.astype(f32)
        mean = jnp.mean(v, axis=-1, keepdims=True)
        vc = v - mean
        var = jnp.mean(vc * vc, axis=-1, keepdims=True)
        return vc * jax.lax.rsqrt(var + f32(eps)) * g + b

    def erf(v):
        # Abramowitz & Stegun 7.1.26, |err| <= 1.5e-7; plain VPU/EUP ops.
        a1, a2, a3, a4, a5 = (0.254829592, -0.284496736, 1.421413741,
                              -1.453152027, 1.061405429)
        av = jnp.abs(v)
        t = 1.0 / (1.0 + 0.3275911 * av)
        poly = ((((a5 * t + a4) * t + a3) * t + a2) * t + a1) * t
        r = 1.0 - poly * jnp.exp(-av * av)
        return jnp.where(v >= 0.0, r, -r)

    def gelu(v):
        return 0.5 * v * (1.0 + erf(v * f32(0.7071067811865476)))

    # --- patch embed + fused cls/pos/bias add: only on the first depth step --
    @pl.when(layer == 0)
    def _():
        emb = jnp.dot(patches_ref[...], patch_w_ref[...],
                      preferred_element_type=f32)               # (M, D)
        x_ref[...] = emb + pos_bias_ref[...]

    x = x_ref[...]                                              # (M, D) f32 residual
    mask = mask_ref[...]                                        # (1, s_pad): 0 / -1e30

    # --- one pre-norm transformer block (block index == grid axis 1) ---------
    h = layer_norm(x, ln1_g_ref[0], ln1_b_ref[0]).astype(bf16)  # (M, D)

    attn = jnp.zeros((M, D), f32)
    for hh in range(num_heads):
        # Per-head, lane-aligned weight slabs (no lane slicing of activations).
        q = jnp.dot(h, q_w_ref[0, hh], preferred_element_type=f32) + q_b_ref[0, hh]
        k = jnp.dot(h, k_w_ref[0, hh], preferred_element_type=f32) + k_b_ref[0, hh]
        v = jnp.dot(h, v_w_ref[0, hh], preferred_element_type=f32) + v_b_ref[0, hh]
        q3 = q.reshape(bblk, s_pad, head_dim).astype(bf16)
        k3 = k.reshape(bblk, s_pad, head_dim).astype(bf16)
        v3 = v.reshape(bblk, s_pad, head_dim).astype(bf16)

        s = jnp.einsum('bqd,bkd->bqk', q3, k3,
                       preferred_element_type=f32) * scale + mask
        s = s - jnp.max(s, axis=-1, keepdims=True)
        p = jnp.exp(s)
        p = p * pl.reciprocal(jnp.sum(p, axis=-1, keepdims=True), approx=True)
        o = jnp.einsum('bqk,bkd->bqd', p.astype(bf16), v3,
                       preferred_element_type=f32)              # (bblk, s_pad, hd)
        # Fused head-concat + output projection: accumulate per-head slab matmul.
        attn = attn + jnp.dot(o.reshape(M, head_dim).astype(bf16),
                              proj_w_ref[0, hh], preferred_element_type=f32)
    x = x + attn + proj_b_ref[0]

    h2 = layer_norm(x, ln2_g_ref[0], ln2_b_ref[0]).astype(bf16)
    m1 = jnp.dot(h2, fc1_w_ref[0], preferred_element_type=f32) + fc1_b_ref[0]
    m1 = gelu(m1)
    m2 = jnp.dot(m1.astype(bf16), fc2_w_ref[0],
                 preferred_element_type=f32) + fc2_b_ref[0]
    x = x + m2
    x_ref[...] = x

    # --- final LN on CLS rows only + (lane-padded) classifier head -----------
    @pl.when(layer == pl.num_programs(1) - 1)
    def _():
        cls = x.reshape(bblk, s_pad, D)[:, 0, :]                # (bblk, D)
        cls = layer_norm(cls, lnf_g_ref[...], lnf_b_ref[...])
        logits = jnp.dot(cls.astype(bf16), head_w_ref[...],
                         preferred_element_type=f32) + head_b_ref[...]
        out_ref[...] = logits.astype(out_ref.dtype)


# ----------------------------------------------------------------------------
# Synthetic parameters, host-repacked into kernel-friendly layouts.
# ----------------------------------------------------------------------------
def init_params(key, cfg):
    D = cfg["embed_dim"]
    depth = cfg["depth"]
    H = cfg["num_heads"]
    hd = D // H
    p = cfg["patch_size"]
    C = cfg["in_chans"]
    hidden = D * cfg["mlp_ratio"]
    num_patches = (cfg["img_size"] // p) ** 2
    S = num_patches + 1
    S_PAD = _seq_pad(cfg)
    NC, NP = cfg["num_classes"], cfg["num_classes_padded"]
    Cpp = C * p * p
    std = 0.02
    f32, bf16 = jnp.float32, jnp.bfloat16

    keys = list(jax.random.split(key, 16))

    def nrm(shape):
        return std * jax.random.normal(keys.pop(), shape, f32)

    # Torch-style dense weights, then host-side repack (perf feedback #2/#3/#9).
    patch_w = nrm((Cpp, D))                       # conv16x16/s16 as matmul
    patch_b = jnp.zeros((D,), f32)
    cls_token = nrm((D,))
    pos_embed = nrm((S, D))

    # qkv Linear(D, 3D) with output layout [3, H, hd] -> per-head slabs.
    w_qkv = nrm((depth, D, 3 * D)).reshape(depth, D, 3, H, hd)
    q_w = jnp.transpose(w_qkv[:, :, 0], (0, 2, 1, 3)).astype(bf16)   # (depth,H,D,hd)
    k_w = jnp.transpose(w_qkv[:, :, 1], (0, 2, 1, 3)).astype(bf16)
    v_w = jnp.transpose(w_qkv[:, :, 2], (0, 2, 1, 3)).astype(bf16)
    # proj Linear(D, D): rows indexed by (head, hd) -> per-head row slabs.
    proj_w = nrm((depth, D, D)).reshape(depth, H, hd, D).astype(bf16)

    fc1_w = nrm((depth, D, hidden)).astype(bf16)
    fc2_w = nrm((depth, hidden, D)).astype(bf16)

    head_w = jnp.zeros((D, NP), f32).at[:, :NC].set(nrm((D, NC))).astype(bf16)

    # Fused cls_token / conv-bias / pos-embed add, padded to S_PAD rows (#9/#10).
    pos_bias = jnp.zeros((S_PAD, D), f32)
    pos_bias = pos_bias.at[0].set(cls_token + pos_embed[0])
    pos_bias = pos_bias.at[1:S].set(patch_b[None, :] + pos_embed[1:])

    # Additive key mask: 0 on real tokens, -1e30 on padded key columns (#10).
    attn_mask = jnp.where(jnp.arange(S_PAD) < S, 0.0, -1e30
                          ).astype(f32).reshape(1, S_PAD)

    return {
        "patch_w": patch_w.astype(bf16),
        "pos_bias": pos_bias,
        "attn_mask": attn_mask,
        "ln1_g": jnp.ones((depth, 1, D), f32),
        "ln1_b": jnp.zeros((depth, 1, D), f32),
        "q_w": q_w, "q_b": jnp.zeros((depth, H, 1, hd), f32),
        "k_w": k_w, "k_b": jnp.zeros((depth, H, 1, hd), f32),
        "v_w": v_w, "v_b": jnp.zeros((depth, H, 1, hd), f32),
        "proj_w": proj_w, "proj_b": jnp.zeros((depth, 1, D), f32),
        "ln2_g": jnp.ones((depth, 1, D), f32),
        "ln2_b": jnp.zeros((depth, 1, D), f32),
        "fc1_w": fc1_w, "fc1_b": jnp.zeros((depth, 1, hidden), f32),
        "fc2_w": fc2_w, "fc2_b": jnp.zeros((depth, 1, D), f32),
        "lnf_g": jnp.ones((1, D), f32),
        "lnf_b": jnp.zeros((1, D), f32),
        "head_w": head_w,                      # zero-padded cols >= num_classes
        "head_b": jnp.zeros((1, NP), f32),
    }


# Per-layer (depth-streamed) weights vs. constant-resident ones.
_PER_LAYER = ("ln1_g", "ln1_b", "q_w", "q_b", "k_w", "k_b", "v_w", "v_b",
              "proj_w", "proj_b", "ln2_g", "ln2_b",
              "fc1_w", "fc1_b", "fc2_w", "fc2_b")
_CONST_TAIL = ("lnf_g", "lnf_b", "head_w", "head_b")


# ----------------------------------------------------------------------------
# Forward wrapper: XLA glue is only patch extraction (im2col) + final slice.
# ----------------------------------------------------------------------------
def dino_vit_forward(params, x, *, cfg):
    B, C, Himg, Wimg = x.shape
    p = cfg["patch_size"]
    D = cfg["embed_dim"]
    depth = cfg["depth"]
    H = cfg["num_heads"]
    hd = D // H
    hidden = D * cfg["mlp_ratio"]
    gh, gw = Himg // p, Wimg // p
    num_patches = gh * gw
    S = num_patches + 1
    S_PAD = _seq_pad(cfg)
    Cpp = C * p * p
    NC, NP = cfg["num_classes"], cfg["num_classes_padded"]

    # TODO(synk): patch extraction (conv-as-im2col reshape/transpose) stays XLA
    # glue; a strided-DMA gather kernel is not worth it at this size.
    patches = x.reshape(B, C, gh, p, gw, p).transpose(0, 2, 4, 1, 3, 5)
    patches = patches.reshape(B, num_patches, Cpp)
    # Row 0 = zero "CLS row" (embedding supplied by pos_bias); rows S..S_PAD-1
    # are zero token padding so all (token, .) ops are full-sublane (#10).
    patches = jnp.concatenate(
        [jnp.zeros((B, 1, Cpp), patches.dtype), patches,
         jnp.zeros((B, S_PAD - S, Cpp), patches.dtype)], axis=1)
    patches = patches.astype(jnp.bfloat16)

    # Batch block per grid step so matmuls see M = bblk*S_PAD rows (#1).
    bblk = min(B, max(1, _MXU_ROWS // S_PAD))
    n_blocks = -(-B // bblk)
    b_pad = n_blocks * bblk
    if b_pad != B:
        patches = jnp.concatenate(
            [patches, jnp.zeros((b_pad - B, S_PAD, Cpp), patches.dtype)], axis=0)
    patches = patches.reshape(b_pad * S_PAD, Cpp)          # flat (M_total, Cpp)

    # Tile the fused cls/pos/bias add once per batch block (#9).
    pos_bias = jnp.tile(params["pos_bias"], (bblk, 1))      # (bblk*S_PAD, D)

    weights = ([pos_bias, params["patch_w"], params["attn_mask"]]
               + [params[n] for n in _PER_LAYER]
               + [params[n] for n in _CONST_TAIL])

    def const_spec(arr):
        idx = (0,) * arr.ndim
        return pl.BlockSpec(arr.shape, lambda b, l, _idx=idx: _idx)

    def layer_spec(arr):                                    # stream one layer slab (#4)
        blk = (1,) + arr.shape[1:]
        zeros = (0,) * (arr.ndim - 1)
        return pl.BlockSpec(blk, lambda b, l, _z=zeros: (l,) + _z)

    in_specs = ([pl.BlockSpec((bblk * S_PAD, Cpp), lambda b, l: (b, 0)),
                 pl.BlockSpec((bblk * S_PAD, D), lambda b, l: (0, 0)),
                 const_spec(params["patch_w"]),
                 const_spec(params["attn_mask"])]
                + [layer_spec(params[n]) for n in _PER_LAYER]
                + [const_spec(params[n]) for n in _CONST_TAIL])

    # Explicit scoped-VMEM budget from the actual resident footprint (#6).
    M = bblk * S_PAD
    weight_bytes = sum(int(w.size) * w.dtype.itemsize for w in weights)
    act_bytes = M * Cpp * 2 + M * D * 4 + bblk * NP * 4
    vmem_limit = int(min(48 * 2 ** 20,
                         max(32 * 2 ** 20, 4 * (weight_bytes + act_bytes))))

    # Advisory cost estimate so XLA overlaps the im2col glue with the call (#12).
    flops = 2 * M * Cpp * D * n_blocks
    flops += depth * n_blocks * (2 * M * D * 3 * D
                                 + 2 * bblk * H * S_PAD * S_PAD * hd * 2
                                 + 2 * M * hd * D * H
                                 + 2 * M * D * hidden * 2)
    flops += 2 * bblk * n_blocks * D * NP
    transcendentals = depth * n_blocks * (bblk * H * S_PAD * S_PAD + M * hidden)
    bytes_accessed = int(patches.size) * 2 + weight_bytes + b_pad * NP * 4
    cost = pl.CostEstimate(flops=int(flops),
                           transcendentals=int(transcendentals),
                           bytes_accessed=int(bytes_accessed))

    kernel = functools.partial(
        _vit_fused_kernel,
        num_heads=H, head_dim=hd, bblk=bblk, s_pad=S_PAD, eps=cfg["ln_eps"])

    out = pl.pallas_call(
        kernel,
        grid=(n_blocks, depth),
        out_shape=jax.ShapeDtypeStruct((b_pad, NP), jnp.float32),
        in_specs=in_specs,
        out_specs=pl.BlockSpec((bblk, NP), lambda b, l: (b, 0)),
        scratch_shapes=[pltpu.VMEM((M, D), jnp.float32)],    # residual carry
        compiler_params=pltpu.CompilerParams(
            dimension_semantics=("parallel", "arbitrary"),
            vmem_limit_bytes=vmem_limit),
        cost_estimate=cost,
    )(patches, *weights)

    # Drop batch padding + the lane padding of the classifier head.
    return out[:B, :NC]


# ----------------------------------------------------------------------------
if __name__ == "__main__":
    key = jax.random.PRNGKey(0)
    k_params, k_x = jax.random.split(key)

    params = init_params(k_params, CFG)

    # NCHW input, like the PyTorch module.
    x = jax.random.normal(k_x, (2, CFG["in_chans"], CFG["img_size"],
                                CFG["img_size"]), dtype=jnp.float32)

    fwd = jax.jit(functools.partial(dino_vit_forward, cfg=CFG))
    logits = fwd(params, x)
    jax.block_until_ready(logits)

    assert logits.shape == (2, CFG["num_classes"]), logits.shape
    assert bool(jnp.all(jnp.isfinite(logits)))
    print("KERNEL_OK")
</pallas_src>

<mosaic_0001>
module attributes {stable_mosaic.version = 11 : i64} {
  func.func @_vit_fused_kernel(%arg0: i32, %arg1: i32, %arg2: memref<16x768xbf16, #tpu.memory_space<vmem>>, %arg3: memref<16x64xf32, #tpu.memory_space<vmem>>, %arg4: memref<768x64xbf16, #tpu.memory_space<vmem>>, %arg5: memref<1x8xf32, #tpu.memory_space<vmem>>, %arg6: memref<1x1x64xf32, #tpu.memory_space<vmem>>, %arg7: memref<1x1x64xf32, #tpu.memory_space<vmem>>, %arg8: memref<1x2x64x32xbf16, #tpu.memory_space<vmem>>, %arg9: memref<1x2x1x32xf32, #tpu.memory_space<vmem>>, %arg10: memref<1x2x64x32xbf16, #tpu.memory_space<vmem>>, %arg11: memref<1x2x1x32xf32, #tpu.memory_space<vmem>>, %arg12: memref<1x2x64x32xbf16, #tpu.memory_space<vmem>>, %arg13: memref<1x2x1x32xf32, #tpu.memory_space<vmem>>, %arg14: memref<1x2x32x64xbf16, #tpu.memory_space<vmem>>, %arg15: memref<1x1x64xf32, #tpu.memory_space<vmem>>, %arg16: memref<1x1x64xf32, #tpu.memory_space<vmem>>, %arg17: memref<1x1x64xf32, #tpu.memory_space<vmem>>, %arg18: memref<1x64x256xbf16, #tpu.memory_space<vmem>>, %arg19: memref<1x1x256xf32, #tpu.memory_space<vmem>>, %arg20: memref<1x256x64xbf16, #tpu.memory_space<vmem>>, %arg21: memref<1x1x64xf32, #tpu.memory_space<vmem>>, %arg22: memref<1x64xf32, #tpu.memory_space<vmem>>, %arg23: memref<1x64xf32, #tpu.memory_space<vmem>>, %arg24: memref<64x128xbf16, #tpu.memory_space<vmem>>, %arg25: memref<1x128xf32, #tpu.memory_space<vmem>>, %arg26: memref<2x128xf32, #tpu.memory_space<vmem>>, %arg27: memref<16x64xf32, #tpu.memory_space<vmem>>) attributes {dimension_semantics = [#tpu.dimension_semantics<parallel>, #tpu.dimension_semantics<arbitrary>], iteration_bounds = array<i64: 1, 2>, scalar_prefetch = 0 : i64, scratch_operands = 1 : i64, tpu.core_type = #tpu.core_type<tc>, window_params = [{transform_indices = @transform_0, window_bounds = array<i64: 16, 768>}, {pipeline_mode = #tpu.pipeline_mode<synchronous>, transform_indices = @transform_1, window_bounds = array<i64: 16, 64>}, {pipeline_mode = #tpu.pipeline_mode<synchronous>, transform_indices = @transform_2, window_bounds = array<i64: 768, 64>}, {pipeline_mode = #tpu.pipeline_mode<synchronous>, transform_indices = @transform_3, window_bounds = array<i64: 1, 8>}, {transform_indices = @transform_4, window_bounds = array<i64: 1, 1, 64>}, {transform_indices = @transform_5, window_bounds = array<i64: 1, 1, 64>}, {transform_indices = @transform_6, window_bounds = array<i64: 1, 2, 64, 32>}, {transform_indices = @transform_7, window_bounds = array<i64: 1, 2, 1, 32>}, {transform_indices = @transform_8, window_bounds = array<i64: 1, 2, 64, 32>}, {transform_indices = @transform_9, window_bounds = array<i64: 1, 2, 1, 32>}, {transform_indices = @transform_10, window_bounds = array<i64: 1, 2, 64, 32>}, {transform_indices = @transform_11, window_bounds = array<i64: 1, 2, 1, 32>}, {transform_indices = @transform_12, window_bounds = array<i64: 1, 2, 32, 64>}, {transform_indices = @transform_13, window_bounds = array<i64: 1, 1, 64>}, {transform_indices = @transform_14, window_bounds = array<i64: 1, 1, 64>}, {transform_indices = @transform_15, window_bounds = array<i64: 1, 1, 64>}, {transform_indices = @transform_16, window_bounds = array<i64: 1, 64, 256>}, {transform_indices = @transform_17, window_bounds = array<i64: 1, 1, 256>}, {transform_indices = @transform_18, window_bounds = array<i64: 1, 256, 64>}, {transform_indices = @transform_19, window_bounds = array<i64: 1, 1, 64>}, {pipeline_mode = #tpu.pipeline_mode<synchronous>, transform_indices = @transform_20, window_bounds = array<i64: 1, 64>}, {pipeline_mode = #tpu.pipeline_mode<synchronous>, transform_indices = @transform_21, window_bounds = array<i64: 1, 64>}, {pipeline_mode = #tpu.pipeline_mode<synchronous>, transform_indices = @transform_22, window_bounds = array<i64: 64, 128>}, {pipeline_mode = #tpu.pipeline_mode<synchronous>, transform_indices = @transform_23, window_bounds = array<i64: 1, 128>}, {transform_indices = @transform_24, window_bounds = array<i64: 2, 128>}]} {
    %c0_i32 = arith.constant 0 : i32
    %0 = arith.cmpi eq, %arg1, %c0_i32 : i32
    %1 = arith.extui %0 : i1 to i32
    %c0_i32_0 = arith.constant 0 : i32
    %2 = arith.cmpi ne, %1, %c0_i32_0 : i32
    scf.if %2 {
      %c0_134 = arith.constant 0 : index
      %c0_135 = arith.constant 0 : index
      %223 = vector.load %arg2[%c0_134, %c0_135] : memref<16x768xbf16, #tpu.memory_space<vmem>>, vector<16x768xbf16>
      %c0_136 = arith.constant 0 : index
      %c0_137 = arith.constant 0 : index
      %224 = vector.load %arg4[%c0_136, %c0_137] : memref<768x64xbf16, #tpu.memory_space<vmem>>, vector<768x64xbf16>
      %cst_138 = arith.constant dense<0.000000e+00> : vector<16x64xf32>
      %225 = tpu.matmul %223, %224, %cst_138 {dimension_numbers = #tpu.dot_dimension_numbers<[1], [0], [0], [1], [0, 0, 1, 1], [], []>} : vector<16x768xbf16>, vector<768x64xbf16>, vector<16x64xf32> -> vector<16x64xf32>
      %c0_139 = arith.constant 0 : index
      %c0_140 = arith.constant 0 : index
      %226 = vector.load %arg3[%c0_139, %c0_140] : memref<16x64xf32, #tpu.memory_space<vmem>>, vector<16x64xf32>
      %227 = arith.addf %225, %226 : vector<16x64xf32>
      %c0_141 = arith.constant 0 : index
      %c0_142 = arith.constant 0 : index
      %228 = vector.load %arg27[%c0_141, %c0_142] : memref<16x64xf32, #tpu.memory_space<vmem>>, vector<16x64xf32>
      tpu.vector_store %arg27[%c0_141, %c0_142], %227 {strides = array<i32>} : memref<16x64xf32, #tpu.memory_space<vmem>>, vector<16x64xf32>,
    } else {
    }
    %c0 = arith.constant 0 : index
    %c0_1 = arith.constant 0 : index
    %3 = vector.load %arg27[%c0, %c0_1] : memref<16x64xf32, #tpu.memory_space<vmem>>, vector<16x64xf32>
    %c0_2 = arith.constant 0 : index
    %c0_3 = arith.constant 0 : index
    %4 = vector.load %arg5[%c0_2, %c0_3] : memref<1x8xf32, #tpu.memory_space<vmem>>, vector<1x8xf32>
    %c0_4 = arith.constant 0 : index
    %c0_5 = arith.constant 0 : index
    %c0_6 = arith.constant 0 : index
    %5 = vector.load %arg6[%c0_4, %c0_5, %c0_6] : memref<1x1x64xf32, #tpu.memory_space<vmem>>, vector<1x1x64xf32>
    %6 = vector.shape_cast %5 : vector<1x1x64xf32> to vector<1x64xf32>
    %c0_7 = arith.constant 0 : index
    %c0_8 = arith.constant 0 : index
    %c0_9 = arith.constant 0 : index
    %7 = vector.load %arg7[%c0_7, %c0_8, %c0_9] : memref<1x1x64xf32, #tpu.memory_space<vmem>>, vector<1x1x64xf32>
    %8 = vector.shape_cast %7 : vector<1x1x64xf32> to vector<1x64xf32>
    %cst = arith.constant dense<0.000000e+00> : vector<16xf32>
    %9 = vector.multi_reduction <add>, %3, %cst [1] : vector<16x64xf32> to vector<16xf32>
    %10 = vector.shape_cast %9 : vector<16xf32> to vector<16x1xf32>
    %cst_10 = arith.constant 6.400000e+01 : f32
    %11 = vector.broadcast %cst_10 : f32 to vector<16x1xf32>
    %12 = arith.divf %10, %11 : vector<16x1xf32>
    %13 = vector.broadcast %12 : vector<16x1xf32> to vector<16x64xf32>
    %14 = arith.subf %3, %13 : vector<16x64xf32>
    %15 = arith.mulf %14, %14 : vector<16x64xf32>
    %cst_11 = arith.constant dense<0.000000e+00> : vector<16xf32>
    %16 = vector.multi_reduction <add>, %15, %cst_11 [1] : vector<16x64xf32> to vector<16xf32>
    %17 = vector.shape_cast %16 : vector<16xf32> to vector<16x1xf32>
    %cst_12 = arith.constant 6.400000e+01 : f32
    %18 = vector.broadcast %cst_12 : f32 to vector<16x1xf32>
    %19 = arith.divf %17, %18 : vector<16x1xf32>
    %cst_13 = arith.constant 9.99999997E-7 : f32
    %20 = vector.broadcast %cst_13 : f32 to vector<16x1xf32>
    %21 = arith.addf %19, %20 : vector<16x1xf32>
    %22 = math.rsqrt %21 : vector<16x1xf32>
    %23 = vector.broadcast %22 : vector<16x1xf32> to vector<16x64xf32>
    %24 = arith.mulf %14, %23 : vector<16x64xf32>
    %25 = vector.broadcast %6 : vector<1x64xf32> to vector<16x64xf32>
    %26 = arith.mulf %24, %25 : vector<16x64xf32>
    %27 = vector.broadcast %8 : vector<1x64xf32> to vector<16x64xf32>
    %28 = arith.addf %26, %27 : vector<16x64xf32>
    %29 = arith.truncf %28 : vector<16x64xf32> to vector<16x64xbf16>
    %cst_14 = arith.constant 0.000000e+00 : f32
    %30 = vector.broadcast %cst_14 : f32 to vector<16x64xf32>
    %c0_15 = arith.constant 0 : index
    %c0_16 = arith.constant 0 : index
    %c0_17 = arith.constant 0 : index
    %c0_18 = arith.constant 0 : index
    %31 = vector.load %arg8[%c0_15, %c0_16, %c0_17, %c0_18] : memref<1x2x64x32xbf16, #tpu.memory_space<vmem>>, vector<1x1x64x32xbf16>
    %32 = vector.shape_cast %31 : vector<1x1x64x32xbf16> to vector<64x32xbf16>
    %cst_19 = arith.constant dense<0.000000e+00> : vector<16x32xf32>
    %33 = tpu.matmul %29, %32, %cst_19 {dimension_numbers = #tpu.dot_dimension_numbers<[1], [0], [0], [1], [0, 0, 1, 1], [], []>} : vector<16x64xbf16>, vector<64x32xbf16>, vector<16x32xf32> -> vector<16x32xf32>
    %c0_20 = arith.constant 0 : index
    %c0_21 = arith.constant 0 : index
    %c0_22 = arith.constant 0 : index
    %c0_23 = arith.constant 0 : index
    %34 = vector.load %arg9[%c0_20, %c0_21, %c0_22, %c0_23] : memref<1x2x1x32xf32, #tpu.memory_space<vmem>>, vector<1x1x1x32xf32>
    %35 = vector.shape_cast %34 : vector<1x1x1x32xf32> to vector<1x32xf32>
    %36 = vector.broadcast %35 : vector<1x32xf32> to vector<16x32xf32>
    %37 = arith.addf %33, %36 : vector<16x32xf32>
    %c0_24 = arith.constant 0 : index
    %c0_25 = arith.constant 0 : index
    %c0_26 = arith.constant 0 : index
    %c0_27 = arith.constant 0 : index
    %38 = vector.load %arg10[%c0_24, %c0_25, %c0_26, %c0_27] : memref<1x2x64x32xbf16, #tpu.memory_space<vmem>>, vector<1x1x64x32xbf16>
    %39 = vector.shape_cast %38 : vector<1x1x64x32xbf16> to vector<64x32xbf16>
    %cst_28 = arith.constant dense<0.000000e+00> : vector<16x32xf32>
    %40 = tpu.matmul %29, %39, %cst_28 {dimension_numbers = #tpu.dot_dimension_numbers<[1], [0], [0], [1], [0, 0, 1, 1], [], []>} : vector<16x64xbf16>, vector<64x32xbf16>, vector<16x32xf32> -> vector<16x32xf32>
    %c0_29 = arith.constant 0 : index
    %c0_30 = arith.constant 0 : index
    %c0_31 = arith.constant 0 : index
    %c0_32 = arith.constant 0 : index
    %41 = vector.load %arg11[%c0_29, %c0_30, %c0_31, %c0_32] : memref<1x2x1x32xf32, #tpu.memory_space<vmem>>, vector<1x1x1x32xf32>
    %42 = vector.shape_cast %41 : vector<1x1x1x32xf32> to vector<1x32xf32>
    %43 = vector.broadcast %42 : vector<1x32xf32> to vector<16x32xf32>
    %44 = arith.addf %40, %43 : vector<16x32xf32>
    %c0_33 = arith.constant 0 : index
    %c0_34 = arith.constant 0 : index
    %c0_35 = arith.constant 0 : index
    %c0_36 = arith.constant 0 : index
    %45 = vector.load %arg12[%c0_33, %c0_34, %c0_35, %c0_36] : memref<1x2x64x32xbf16, #tpu.memory_space<vmem>>, vector<1x1x64x32xbf16>
    %46 = vector.shape_cast %45 : vector<1x1x64x32xbf16> to vector<64x32xbf16>
    %cst_37 = arith.constant dense<0.000000e+00> : vector<16x32xf32>
    %47 = tpu.matmul %29, %46, %cst_37 {dimension_numbers = #tpu.dot_dimension_numbers<[1], [0], [0], [1], [0, 0, 1, 1], [], []>} : vector<16x64xbf16>, vector<64x32xbf16>, vector<16x32xf32> -> vector<16x32xf32>
    %c0_38 = arith.constant 0 : index
    %c0_39 = arith.constant 0 : index
    %c0_40 = arith.constant 0 : index
    %c0_41 = arith.constant 0 : index
    %48 = vector.load %arg13[%c0_38, %c0_39, %c0_40, %c0_41] : memref<1x2x1x32xf32, #tpu.memory_space<vmem>>, vector<1x1x1x32xf32>
    %49 = vector.shape_cast %48 : vector<1x1x1x32xf32> to vector<1x32xf32>
    %50 = vector.broadcast %49 : vector<1x32xf32> to vector<16x32xf32>
    %51 = arith.addf %47, %50 : vector<16x32xf32>
    %52 = vector.shape_cast %37 : vector<16x32xf32> to vector<2x8x32xf32>
    %53 = arith.truncf %52 : vector<2x8x32xf32> to vector<2x8x32xbf16>
    %54 = vector.shape_cast %44 : vector<16x32xf32> to vector<2x8x32xf32>
    %55 = arith.truncf %54 : vector<2x8x32xf32> to vector<2x8x32xbf16>
    %56 = vector.shape_cast %51 : vector<16x32xf32> to vector<2x8x32xf32>
    %57 = arith.truncf %56 : vector<2x8x32xf32> to vector<2x8x32xbf16>
    "tpu.trace_start"() <{level = 10 : i32, message = "bqd,bkd->bqk"}> : () -> ()
    %cst_42 = arith.constant dense<0.000000e+00> : vector<2x8x8xf32>
    %58 = tpu.matmul %53, %55, %cst_42 {dimension_numbers = #tpu.dot_dimension_numbers<[2], [2], [1], [1], [0, 0, 0, 1, 1, 1], [0], [0]>} : vector<2x8x32xbf16>, vector<2x8x32xbf16>, vector<2x8x8xf32> -> vector<2x8x8xf32>
    "tpu.trace_stop"() : () -> ()
    %cst_43 = arith.constant 0.176776692 : f32
    %59 = vector.broadcast %cst_43 : f32 to vector<2x8x8xf32>
    %60 = arith.mulf %58, %59 : vector<2x8x8xf32>
    %61 = vector.shape_cast %4 : vector<1x8xf32> to vector<1x1x8xf32>
    %62 = vector.broadcast %61 : vector<1x1x8xf32> to vector<2x8x8xf32>
    %63 = arith.addf %60, %62 : vector<2x8x8xf32>
    %cst_44 = arith.constant dense<0xFF800000> : vector<2x8xf32>
    %64 = vector.multi_reduction <maximumf>, %63, %cst_44 [2] : vector<2x8x8xf32> to vector<2x8xf32>
    %65 = vector.shape_cast %64 : vector<2x8xf32> to vector<2x8x1xf32>
    %66 = vector.broadcast %65 : vector<2x8x1xf32> to vector<2x8x8xf32>
    %67 = arith.subf %63, %66 : vector<2x8x8xf32>
    %68 = math.exp %67 : vector<2x8x8xf32>
    %cst_45 = arith.constant dense<0.000000e+00> : vector<2x8xf32>
    %69 = vector.multi_reduction <add>, %68, %cst_45 [2] : vector<2x8x8xf32> to vector<2x8xf32>
    %70 = vector.shape_cast %69 : vector<2x8xf32> to vector<2x8x1xf32>
    %71 = tpu.reciprocal %70 {approx = true} : vector<2x8x1xf32> -> vector<2x8x1xf32>
    %72 = vector.broadcast %71 : vector<2x8x1xf32> to vector<2x8x8xf32>
    %73 = arith.mulf %68, %72 : vector<2x8x8xf32>
    %74 = arith.truncf %73 : vector<2x8x8xf32> to vector<2x8x8xbf16>
    "tpu.trace_start"() <{level = 10 : i32, message = "bqk,bkd->bqd"}> : () -> ()
    %cst_46 = arith.constant dense<0.000000e+00> : vector<2x8x32xf32>
    %75 = tpu.matmul %74, %57, %cst_46 {dimension_numbers = #tpu.dot_dimension_numbers<[2], [1], [1], [2], [0, 0, 0, 1, 1, 2], [0], [0]>} : vector<2x8x8xbf16>, vector<2x8x32xbf16>, vector<2x8x32xf32> -> vector<2x8x32xf32>
    "tpu.trace_stop"() : () -> ()
    %76 = vector.shape_cast %75 : vector<2x8x32xf32> to vector<16x32xf32>
    %77 = arith.truncf %76 : vector<16x32xf32> to vector<16x32xbf16>
    %c0_47 = arith.constant 0 : index
    %c0_48 = arith.constant 0 : index
    %c0_49 = arith.constant 0 : index
    %c0_50 = arith.constant 0 : index
    %78 = vector.load %arg14[%c0_47, %c0_48, %c0_49, %c0_50] : memref<1x2x32x64xbf16, #tpu.memory_space<vmem>>, vector<1x1x32x64xbf16>
    %79 = vector.shape_cast %78 : vector<1x1x32x64xbf16> to vector<32x64xbf16>
    %cst_51 = arith.constant dense<0.000000e+00> : vector<16x64xf32>
    %80 = tpu.matmul %77, %79, %cst_51 {dimension_numbers = #tpu.dot_dimension_numbers<[1], [0], [0], [1], [0, 0, 1, 1], [], []>} : vector<16x32xbf16>, vector<32x64xbf16>, vector<16x64xf32> -> vector<16x64xf32>
    %81 = arith.addf %30, %80 : vector<16x64xf32>
    %c0_52 = arith.constant 0 : index
    %c1 = arith.constant 1 : index
    %c0_53 = arith.constant 0 : index
    %c0_54 = arith.constant 0 : index
    %82 = vector.load %arg8[%c0_52, %c1, %c0_53, %c0_54] : memref<1x2x64x32xbf16, #tpu.memory_space<vmem>>, vector<1x1x64x32xbf16>
    %83 = vector.shape_cast %82 : vector<1x1x64x32xbf16> to vector<64x32xbf16>
    %cst_55 = arith.constant dense<0.000000e+00> : vector<16x32xf32>
    %84 = tpu.matmul %29, %83, %cst_55 {dimension_numbers = #tpu.dot_dimension_numbers<[1], [0], [0], [1], [0, 0, 1, 1], [], []>} : vector<16x64xbf16>, vector<64x32xbf16>, vector<16x32xf32> -> vector<16x32xf32>
    %c0_56 = arith.constant 0 : index
    %c1_57 = arith.constant 1 : index
    %c0_58 = arith.constant 0 : index
    %c0_59 = arith.constant 0 : index
    %85 = vector.load %arg9[%c0_56, %c1_57, %c0_58, %c0_59] : memref<1x2x1x32xf32, #tpu.memory_space<vmem>>, vector<1x1x1x32xf32>
    %86 = vector.shape_cast %85 : vector<1x1x1x32xf32> to vector<1x32xf32>
    %87 = vector.broadcast %86 : vector<1x32xf32> to vector<16x32xf32>
    %88 = arith.addf %84, %87 : vector<16x32xf32>
    %c0_60 = arith.constant 0 : index
    %c1_61 = arith.constant 1 : index
    %c0_62 = arith.constant 0 : index
    %c0_63 = arith.constant 0 : index
    %89 = vector.load %arg10[%c0_60, %c1_61, %c0_62, %c0_63] : memref<1x2x64x32xbf16, #tpu.memory_space<vmem>>, vector<1x1x64x32xbf16>
    %90 = vector.shape_cast %89 : vector<1x1x64x32xbf16> to vector<64x32xbf16>
    %cst_64 = arith.constant dense<0.000000e+00> : vector<16x32xf32>
    %91 = tpu.matmul %29, %90, %cst_64 {dimension_numbers = #tpu.dot_dimension_numbers<[1], [0], [0], [1], [0, 0, 1, 1], [], []>} : vector<16x64xbf16>, vector<64x32xbf16>, vector<16x32xf32> -> vector<16x32xf32>
    %c0_65 = arith.constant 0 : index
    %c1_66 = arith.constant 1 : index
    %c0_67 = arith.constant 0 : index
    %c0_68 = arith.constant 0 : index
    %92 = vector.load %arg11[%c0_65, %c1_66, %c0_67, %c0_68] : memref<1x2x1x32xf32, #tpu.memory_space<vmem>>, vector<1x1x1x32xf32>
    %93 = vector.shape_cast %92 : vector<1x1x1x32xf32> to vector<1x32xf32>
    %94 = vector.broadcast %93 : vector<1x32xf32> to vector<16x32xf32>
    %95 = arith.addf %91, %94 : vector<16x32xf32>
    %c0_69 = arith.constant 0 : index
    %c1_70 = arith.constant 1 : index
    %c0_71 = arith.constant 0 : index
    %c0_72 = arith.constant 0 : index
    %96 = vector.load %arg12[%c0_69, %c1_70, %c0_71, %c0_72] : memref<1x2x64x32xbf16, #tpu.memory_space<vmem>>, vector<1x1x64x32xbf16>
    %97 = vector.shape_cast %96 : vector<1x1x64x32xbf16> to vector<64x32xbf16>
    %cst_73 = arith.constant dense<0.000000e+00> : vector<16x32xf32>
    %98 = tpu.matmul %29, %97, %cst_73 {dimension_numbers = #tpu.dot_dimension_numbers<[1], [0], [0], [1], [0, 0, 1, 1], [], []>} : vector<16x64xbf16>, vector<64x32xbf16>, vector<16x32xf32> -> vector<16x32xf32>
    %c0_74 = arith.constant 0 : index
    %c1_75 = arith.constant 1 : index
    %c0_76 = arith.constant 0 : index
    %c0_77 = arith.constant 0 : index
    %99 = vector.load %arg13[%c0_74, %c1_75, %c0_76, %c0_77] : memref<1x2x1x32xf32, #tpu.memory_space<vmem>>, vector<1x1x1x32xf32>
    %100 = vector.shape_cast %99 : vector<1x1x1x32xf32> to vector<1x32xf32>
    %101 = vector.broadcast %100 : vector<1x32xf32> to vector<16x32xf32>
    %102 = arith.addf %98, %101 : vector<16x32xf32>
    %103 = vector.shape_cast %88 : vector<16x32xf32> to vector<2x8x32xf32>
    %104 = arith.truncf %103 : vector<2x8x32xf32> to vector<2x8x32xbf16>
    %105 = vector.shape_cast %95 : vector<16x32xf32> to vector<2x8x32xf32>
    %106 = arith.truncf %105 : vector<2x8x32xf32> to vector<2x8x32xbf16>
    %107 = vector.shape_cast %102 : vector<16x32xf32> to vector<2x8x32xf32>
    %108 = arith.truncf %107 : vector<2x8x32xf32> to vector<2x8x32xbf16>
    "tpu.trace_start"() <{level = 10 : i32, message = "bqd,bkd->bqk"}> : () -> ()
    %cst_78 = arith.constant dense<0.000000e+00> : vector<2x8x8xf32>
    %109 = tpu.matmul %104, %106, %cst_78 {dimension_numbers = #tpu.dot_dimension_numbers<[2], [2], [1], [1], [0, 0, 0, 1, 1, 1], [0], [0]>} : vector<2x8x32xbf16>, vector<2x8x32xbf16>, vector<2x8x8xf32> -> vector<2x8x8xf32>
    "tpu.trace_stop"() : () -> ()
    %cst_79 = arith.constant 0.176776692 : f32
    %110 = vector.broadcast %cst_79 : f32 to vector<2x8x8xf32>
    %111 = arith.mulf %109, %110 : vector<2x8x8xf32>
    %112 = vector.shape_cast %4 : vector<1x8xf32> to vector<1x1x8xf32>
    %113 = vector.broadcast %112 : vector<1x1x8xf32> to vector<2x8x8xf32>
    %114 = arith.addf %111, %113 : vector<2x8x8xf32>
    %cst_80 = arith.constant dense<0xFF800000> : vector<2x8xf32>
    %115 = vector.multi_reduction <maximumf>, %114, %cst_80 [2] : vector<2x8x8xf32> to vector<2x8xf32>
    %116 = vector.shape_cast %115 : vector<2x8xf32> to vector<2x8x1xf32>
    %117 = vector.broadcast %116 : vector<2x8x1xf32> to vector<2x8x8xf32>
    %118 = arith.subf %114, %117 : vector<2x8x8xf32>
    %119 = math.exp %118 : vector<2x8x8xf32>
    %cst_81 = arith.constant dense<0.000000e+00> : vector<2x8xf32>
    %120 = vector.multi_reduction <add>, %119, %cst_81 [2] : vector<2x8x8xf32> to vector<2x8xf32>
    %121 = vector.shape_cast %120 : vector<2x8xf32> to vector<2x8x1xf32>
    %122 = tpu.reciprocal %121 {approx = true} : vector<2x8x1xf32> -> vector<2x8x1xf32>
    %123 = vector.broadcast %122 : vector<2x8x1xf32> to vector<2x8x8xf32>
    %124 = arith.mulf %119, %123 : vector<2x8x8xf32>
    %125 = arith.truncf %124 : vector<2x8x8xf32> to vector<2x8x8xbf16>
    "tpu.trace_start"() <{level = 10 : i32, message = "bqk,bkd->bqd"}> : () -> ()
    %cst_82 = arith.constant dense<0.000000e+00> : vector<2x8x32xf32>
    %126 = tpu.matmul %125, %108, %cst_82 {dimension_numbers = #tpu.dot_dimension_numbers<[2], [1], [1], [2], [0, 0, 0, 1, 1, 2], [0], [0]>} : vector<2x8x8xbf16>, vector<2x8x32xbf16>, vector<2x8x32xf32> -> vector<2x8x32xf32>
    "tpu.trace_stop"() : () -> ()
    %127 = vector.shape_cast %126 : vector<2x8x32xf32> to vector<16x32xf32>
    %128 = arith.truncf %127 : vector<16x32xf32> to vector<16x32xbf16>
    %c0_83 = arith.constant 0 : index
    %c1_84 = arith.constant 1 : index
    %c0_85 = arith.constant 0 : index
    %c0_86 = arith.constant 0 : index
    %129 = vector.load %arg14[%c0_83, %c1_84, %c0_85, %c0_86] : memref<1x2x32x64xbf16, #tpu.memory_space<vmem>>, vector<1x1x32x64xbf16>
    %130 = vector.shape_cast %129 : vector<1x1x32x64xbf16> to vector<32x64xbf16>
    %cst_87 = arith.constant dense<0.000000e+00> : vector<16x64xf32>
    %131 = tpu.matmul %128, %130, %cst_87 {dimension_numbers = #tpu.dot_dimension_numbers<[1], [0], [0], [1], [0, 0, 1, 1], [], []>} : vector<16x32xbf16>, vector<32x64xbf16>, vector<16x64xf32> -> vector<16x64xf32>
    %132 = arith.addf %81, %131 : vector<16x64xf32>
    %133 = arith.addf %3, %132 : vector<16x64xf32>
    %c0_88 = arith.constant 0 : index
    %c0_89 = arith.constant 0 : index
    %c0_90 = arith.constant 0 : index
    %134 = vector.load %arg15[%c0_88, %c0_89, %c0_90] : memref<1x1x64xf32, #tpu.memory_space<vmem>>, vector<1x1x64xf32>
    %135 = vector.shape_cast %134 : vector<1x1x64xf32> to vector<1x64xf32>
    %136 = vector.broadcast %135 : vector<1x64xf32> to vector<16x64xf32>
    %137 = arith.addf %133, %136 : vector<16x64xf32>
    %c0_91 = arith.constant 0 : index
    %c0_92 = arith.constant 0 : index
    %c0_93 = arith.constant 0 : index
    %138 = vector.load %arg16[%c0_91, %c0_92, %c0_93] : memref<1x1x64xf32, #tpu.memory_space<vmem>>, vector<1x1x64xf32>
    %139 = vector.shape_cast %138 : vector<1x1x64xf32> to vector<1x64xf32>
    %c0_94 = arith.constant 0 : index
    %c0_95 = arith.constant 0 : index
    %c0_96 = arith.constant 0 : index
    %140 = vector.load %arg17[%c0_94, %c0_95, %c0_96] : memref<1x1x64xf32, #tpu.memory_space<vmem>>, vector<1x1x64xf32>
    %141 = vector.shape_cast %140 : vector<1x1x64xf32> to vector<1x64xf32>
    %cst_97 = arith.constant dense<0.000000e+00> : vector<16xf32>
    %142 = vector.multi_reduction <add>, %137, %cst_97 [1] : vector<16x64xf32> to vector<16xf32>
    %143 = vector.shape_cast %142 : vector<16xf32> to vector<16x1xf32>
    %cst_98 = arith.constant 6.400000e+01 : f32
    %144 = vector.broadcast %cst_98 : f32 to vector<16x1xf32>
    %145 = arith.divf %143, %144 : vector<16x1xf32>
    %146 = vector.broadcast %145 : vector<16x1xf32> to vector<16x64xf32>
    %147 = arith.subf %137, %146 : vector<16x64xf32>
    %148 = arith.mulf %147, %147 : vector<16x64xf32>
    %cst_99 = arith.constant dense<0.000000e+00> : vector<16xf32>
    %149 = vector.multi_reduction <add>, %148, %cst_99 [1] : vector<16x64xf32> to vector<16xf32>
    %150 = vector.shape_cast %149 : vector<16xf32> to vector<16x1xf32>
    %cst_100 = arith.constant 6.400000e+01 : f32
    %151 = vector.broadcast %cst_100 : f32 to vector<16x1xf32>
    %152 = arith.divf %150, %151 : vector<16x1xf32>
    %cst_101 = arith.constant 9.99999997E-7 : f32
    %153 = vector.broadcast %cst_101 : f32 to vector<16x1xf32>
    %154 = arith.addf %152, %153 : vector<16x1xf32>
    %155 = math.rsqrt %154 : vector<16x1xf32>
    %156 = vector.broadcast %155 : vector<16x1xf32> to vector<16x64xf32>
    %157 = arith.mulf %147, %156 : vector<16x64xf32>
    %158 = vector.broadcast %139 : vector<1x64xf32> to vector<16x64xf32>
    %159 = arith.mulf %157, %158 : vector<16x64xf32>
    %160 = vector.broadcast %141 : vector<1x64xf32> to vector<16x64xf32>
    %161 = arith.addf %159, %160 : vector<16x64xf32>
    %162 = arith.truncf %161 : vector<16x64xf32> to vector<16x64xbf16>
    %c0_102 = arith.constant 0 : index
    %c0_103 = arith.constant 0 : index
    %c0_104 = arith.constant 0 : index
    %163 = vector.load %arg18[%c0_102, %c0_103, %c0_104] : memref<1x64x256xbf16, #tpu.memory_space<vmem>>, vector<1x64x256xbf16>
    %164 = vector.shape_cast %163 : vector<1x64x256xbf16> to vector<64x256xbf16>
    %cst_105 = arith.constant dense<0.000000e+00> : vector<16x256xf32>
    %165 = tpu.matmul %162, %164, %cst_105 {dimension_numbers = #tpu.dot_dimension_numbers<[1], [0], [0], [1], [0, 0, 1, 1], [], []>} : vector<16x64xbf16>, vector<64x256xbf16>, vector<16x256xf32> -> vector<16x256xf32>
    %c0_106 = arith.constant 0 : index
    %c0_107 = arith.constant 0 : index
    %c0_108 = arith.constant 0 : index
    %166 = vector.load %arg19[%c0_106, %c0_107, %c0_108] : memref<1x1x256xf32, #tpu.memory_space<vmem>>, vector<1x1x256xf32>
    %167 = vector.shape_cast %166 : vector<1x1x256xf32> to vector<1x256xf32>
    %168 = vector.broadcast %167 : vector<1x256xf32> to vector<16x256xf32>
    %169 = arith.addf %165, %168 : vector<16x256xf32>
    %cst_109 = arith.constant 5.000000e-01 : f32
    %170 = vector.broadcast %cst_109 : f32 to vector<16x256xf32>
    %171 = arith.mulf %170, %169 : vector<16x256xf32>
    %cst_110 = arith.constant 0.707106769 : f32
    %172 = vector.broadcast %cst_110 : f32 to vector<16x256xf32>
    %173 = arith.mulf %169, %172 : vector<16x256xf32>
    %174 = math.absf %173 : vector<16x256xf32>
    %cst_111 = arith.constant 0.327591091 : f32
    %175 = vector.broadcast %cst_111 : f32 to vector<16x256xf32>
    %176 = arith.mulf %175, %174 : vector<16x256xf32>
    %cst_112 = arith.constant 1.000000e+00 : f32
    %177 = vector.broadcast %cst_112 : f32 to vector<16x256xf32>
    %178 = arith.addf %177, %176 : vector<16x256xf32>
    %cst_113 = arith.constant 1.000000e+00 : f32
    %179 = vector.broadcast %cst_113 : f32 to vector<16x256xf32>
    %180 = arith.divf %179, %178 : vector<16x256xf32>
    %cst_114 = arith.constant 1.06140542 : f32
    %181 = vector.broadcast %cst_114 : f32 to vector<16x256xf32>
    %182 = arith.mulf %181, %180 : vector<16x256xf32>
    %cst_115 = arith.constant -1.45315206 : f32
    %183 = vector.broadcast %cst_115 : f32 to vector<16x256xf32>
    %184 = arith.addf %182, %183 : vector<16x256xf32>
    %185 = arith.mulf %184, %180 : vector<16x256xf32>
    %cst_116 = arith.constant 1.42141378 : f32
    %186 = vector.broadcast %cst_116 : f32 to vector<16x256xf32>
    %187 = arith.addf %185, %186 : vector<16x256xf32>
    %188 = arith.mulf %187, %180 : vector<16x256xf32>
    %cst_117 = arith.constant -0.284496725 : f32
    %189 = vector.broadcast %cst_117 : f32 to vector<16x256xf32>
    %190 = arith.addf %188, %189 : vector<16x256xf32>
    %191 = arith.mulf %190, %180 : vector<16x256xf32>
    %cst_118 = arith.constant 0.254829586 : f32
    %192 = vector.broadcast %cst_118 : f32 to vector<16x256xf32>
    %193 = arith.addf %191, %192 : vector<16x256xf32>
    %194 = arith.mulf %193, %180 : vector<16x256xf32>
    %cst_119 = arith.constant 0.000000e+00 : f32
    %195 = vector.broadcast %cst_119 : f32 to vector<16x256xf32>
    %196 = arith.subf %195, %174 : vector<16x256xf32>
    %197 = arith.mulf %196, %174 : vector<16x256xf32>
    %198 = math.exp %197 : vector<16x256xf32>
    %199 = arith.mulf %194, %198 : vector<16x256xf32>
    %cst_120 = arith.constant 1.000000e+00 : f32
    %200 = vector.broadcast %cst_120 : f32 to vector<16x256xf32>
    %201 = arith.subf %200, %199 : vector<16x256xf32>
    %cst_121 = arith.constant 0.000000e+00 : f32
    %202 = vector.broadcast %cst_121 : f32 to vector<16x256xf32>
    %203 = arith.cmpf oge, %173, %202 : vector<16x256xf32>
    %cst_122 = arith.constant 0.000000e+00 : f32
    %204 = vector.broadcast %cst_122 : f32 to vector<16x256xf32>
    %205 = arith.subf %204, %201 : vector<16x256xf32>
    %206 = arith.select %203, %201, %205 : vector<16x256xi1>, vector<16x256xf32>
    %cst_123 = arith.constant 1.000000e+00 : f32
    %207 = vector.broadcast %cst_123 : f32 to vector<16x256xf32>
    %208 = arith.addf %207, %206 : vector<16x256xf32>
    %209 = arith.mulf %171, %208 : vector<16x256xf32>
    %210 = arith.truncf %209 : vector<16x256xf32> to vector<16x256xbf16>
    %c0_124 = arith.constant 0 : index
    %c0_125 = arith.constant 0 : index
    %c0_126 = arith.constant 0 : index
    %211 = vector.load %arg20[%c0_124, %c0_125, %c0_126] : memref<1x256x64xbf16, #tpu.memory_space<vmem>>, vector<1x256x64xbf16>
    %212 = vector.shape_cast %211 : vector<1x256x64xbf16> to vector<256x64xbf16>
    %cst_127 = arith.constant dense<0.000000e+00> : vector<16x64xf32>
    %213 = tpu.matmul %210, %212, %cst_127 {dimension_numbers = #tpu.dot_dimension_numbers<[1], [0], [0], [1], [0, 0, 1, 1], [], []>} : vector<16x256xbf16>, vector<256x64xbf16>, vector<16x64xf32> -> vector<16x64xf32>
    %c0_128 = arith.constant 0 : index
    %c0_129 = arith.constant 0 : index
    %c0_130 = arith.constant 0 : index
    %214 = vector.load %arg21[%c0_128, %c0_129, %c0_130] : memref<1x1x64xf32, #tpu.memory_space<vmem>>, vector<1x1x64xf32>
    %215 = vector.shape_cast %214 : vector<1x1x64xf32> to vector<1x64xf32>
    %216 = vector.broadcast %215 : vector<1x64xf32> to vector<16x64xf32>
    %217 = arith.addf %213, %216 : vector<16x64xf32>
    %218 = arith.addf %137, %217 : vector<16x64xf32>
    %c0_131 = arith.constant 0 : index
    %c0_132 = arith.constant 0 : index
    %219 = vector.load %arg27[%c0_131, %c0_132] : memref<16x64xf32, #tpu.memory_space<vmem>>, vector<16x64xf32>
    tpu.vector_store %arg27[%c0_131, %c0_132], %218 {strides = array<i32>} : memref<16x64xf32, #tpu.memory_space<vmem>>, vector<16x64xf32>,
    %c1_i32 = arith.constant 1 : i32
    %220 = arith.cmpi eq, %arg1, %c1_i32 : i32
    %221 = arith.extui %220 : i1 to i32
    %c0_i32_133 = arith.constant 0 : i32
    %222 = arith.cmpi ne, %221, %c0_i32_133 : i32
    scf.if %222 {
      %223 = vector.shape_cast %218 : vector<16x64xf32> to vector<2x8x64xf32>
      %224 = vector.extract_strided_slice %223 {offsets = [0, 0, 0], sizes = [2, 1, 64], strides = [1, 1, 1]} : vector<2x8x64xf32> to vector<2x1x64xf32>
      %225 = vector.shape_cast %224 : vector<2x1x64xf32> to vector<2x64xf32>
      %c0_134 = arith.constant 0 : index
      %c0_135 = arith.constant 0 : index
      %226 = vector.load %arg22[%c0_134, %c0_135] : memref<1x64xf32, #tpu.memory_space<vmem>>, vector<1x64xf32>
      %c0_136 = arith.constant 0 : index
      %c0_137 = arith.constant 0 : index
      %227 = vector.load %arg23[%c0_136, %c0_137] : memref<1x64xf32, #tpu.memory_space<vmem>>, vector<1x64xf32>
      %cst_138 = arith.constant dense<0.000000e+00> : vector<2xf32>
      %228 = vector.multi_reduction <add>, %225, %cst_138 [1] : vector<2x64xf32> to vector<2xf32>
      %229 = vector.shape_cast %228 : vector<2xf32> to vector<2x1xf32>
      %cst_139 = arith.constant 6.400000e+01 : f32
      %230 = vector.broadcast %cst_139 : f32 to vector<2x1xf32>
      %231 = arith.divf %229, %230 : vector<2x1xf32>
      %232 = vector.broadcast %231 : vector<2x1xf32> to vector<2x64xf32>
      %233 = arith.subf %225, %232 : vector<2x64xf32>
      %234 = arith.mulf %233, %233 : vector<2x64xf32>
      %cst_140 = arith.constant dense<0.000000e+00> : vector<2xf32>
      %235 = vector.multi_reduction <add>, %234, %cst_140 [1] : vector<2x64xf32> to vector<2xf32>
      %236 = vector.shape_cast %235 : vector<2xf32> to vector<2x1xf32>
      %cst_141 = arith.constant 6.400000e+01 : f32
      %237 = vector.broadcast %cst_141 : f32 to vector<2x1xf32>
      %238 = arith.divf %236, %237 : vector<2x1xf32>
      %cst_142 = arith.constant 9.99999997E-7 : f32
      %239 = vector.broadcast %cst_142 : f32 to vector<2x1xf32>
      %240 = arith.addf %238, %239 : vector<2x1xf32>
      %241 = math.rsqrt %240 : vector<2x1xf32>
      %242 = vector.broadcast %241 : vector<2x1xf32> to vector<2x64xf32>
      %243 = arith.mulf %233, %242 : vector<2x64xf32>
      %244 = vector.broadcast %226 : vector<1x64xf32> to vector<2x64xf32>
      %245 = arith.mulf %243, %244 : vector<2x64xf32>
      %246 = vector.broadcast %227 : vector<1x64xf32> to vector<2x64xf32>
      %247 = arith.addf %245, %246 : vector<2x64xf32>
      %248 = arith.truncf %247 : vector<2x64xf32> to vector<2x64xbf16>
      %c0_143 = arith.constant 0 : index
      %c0_144 = arith.constant 0 : index
      %249 = vector.load %arg24[%c0_143, %c0_144] : memref<64x128xbf16, #tpu.memory_space<vmem>>, vector<64x128xbf16>
      %cst_145 = arith.constant dense<0.000000e+00> : vector<2x128xf32>
      %250 = tpu.matmul %248, %249, %cst_145 {dimension_numbers = #tpu.dot_dimension_numbers<[1], [0], [0], [1], [0, 0, 1, 1], [], []>} : vector<2x64xbf16>, vector<64x128xbf16>, vector<2x128xf32> -> vector<2x128xf32>
      %c0_146 = arith.constant 0 : index
      %c0_147 = arith.constant 0 : index
      %251 = vector.load %arg25[%c0_146, %c0_147] : memref<1x128xf32, #tpu.memory_space<vmem>>, vector<1x128xf32>
      %252 = vector.broadcast %251 : vector<1x128xf32> to vector<2x128xf32>
      %253 = arith.addf %250, %252 : vector<2x128xf32>
      %c0_148 = arith.constant 0 : index
      %c0_149 = arith.constant 0 : index
      %254 = vector.load %arg26[%c0_148, %c0_149] : memref<2x128xf32, #tpu.memory_space<vmem>>, vector<2x128xf32>
      tpu.vector_store %arg26[%c0_148, %c0_149], %253 {strides = array<i32>} : memref<2x128xf32, #tpu.memory_space<vmem>>, vector<2x128xf32>,
    } else {
    }
    return
  }
  func.func @transform_0(%arg0: i32, %arg1: i32) -> (i32, i32) {
    %c0_i32 = arith.constant 0 : i32
    %c0_i32_0 = arith.constant 0 : i32
    return %arg0, %c0_i32 : i32, i32
  }
  func.func @transform_1(%arg0: i32, %arg1: i32) -> (i32, i32) {
    %c0_i32 = arith.constant 0 : i32
    %c0_i32_0 = arith.constant 0 : i32
    %c0_i32_1 = arith.constant 0 : i32
    return %c0_i32, %c0_i32_0 : i32, i32
  }
  func.func @transform_2(%arg0: i32, %arg1: i32) -> (i32, i32) {
    %c0_i32 = arith.constant 0 : i32
    %c0_i32_0 = arith.constant 0 : i32
    %c0_i32_1 = arith.constant 0 : i32
    return %c0_i32, %c0_i32_0 : i32, i32
  }
  func.func @transform_3(%arg0: i32, %arg1: i32) -> (i32, i32) {
    %c0_i32 = arith.constant 0 : i32
    %c0_i32_0 = arith.constant 0 : i32
    %c0_i32_1 = arith.constant 0 : i32
    return %c0_i32, %c0_i32_0 : i32, i32
  }
  func.func @transform_4(%arg0: i32, %arg1: i32) -> (i32, i32, i32) {
    %c0_i32 = arith.constant 0 : i32
    %c0_i32_0 = arith.constant 0 : i32
    %c0_i32_1 = arith.constant 0 : i32
    return %arg1, %c0_i32, %c0_i32_0 : i32, i32, i32
  }
  func.func @transform_5(%arg0: i32, %arg1: i32) -> (i32, i32, i32) {
    %c0_i32 = arith.constant 0 : i32
    %c0_i32_0 = arith.constant 0 : i32
    %c0_i32_1 = arith.constant 0 : i32
    return %arg1, %c0_i32, %c0_i32_0 : i32, i32, i32
  }
  func.func @transform_6(%arg0: i32, %arg1: i32) -> (i32, i32, i32, i32) {
    %c0_i32 = arith.constant 0 : i32
    %c0_i32_0 = arith.constant 0 : i32
    %c0_i32_1 = arith.constant 0 : i32
    %c0_i32_2 = arith.constant 0 : i32
    return %arg1, %c0_i32, %c0_i32_0, %c0_i32_1 : i32, i32, i32, i32
  }
  func.func @transform_7(%arg0: i32, %arg1: i32) -> (i32, i32, i32, i32) {
    %c0_i32 = arith.constant 0 : i32
    %c0_i32_0 = arith.constant 0 : i32
    %c0_i32_1 = arith.constant 0 : i32
    %c0_i32_2 = arith.constant 0 : i32
    return %arg1, %c0_i32, %c0_i32_0, %c0_i32_1 : i32, i32, i32, i32
  }
  func.func @transform_8(%arg0: i32, %arg1: i32) -> (i32, i32, i32, i32) {
    %c0_i32 = arith.constant 0 : i32
    %c0_i32_0 = arith.constant 0 : i32
    %c0_i32_1 = arith.constant 0 : i32
    %c0_i32_2 = arith.constant 0 : i32
    return %arg1, %c0_i32, %c0_i32_0, %c0_i32_1 : i32, i32, i32, i32
  }
  func.func @transform_9(%arg0: i32, %arg1: i32) -> (i32, i32, i32, i32) {
    %c0_i32 = arith.constant 0 : i32
    %c0_i32_0 = arith.constant 0 : i32
    %c0_i32_1 = arith.constant 0 : i32
    %c0_i32_2 = arith.constant 0 : i32
    return %arg1, %c0_i32, %c0_i32_0, %c0_i32_1 : i32, i32, i32, i32
  }
  func.func @transform_10(%arg0: i32, %arg1: i32) -> (i32, i32, i32, i32) {
    %c0_i32 = arith.constant 0 : i32
    %c0_i32_0 = arith.constant 0 : i32
    %c0_i32_1 = arith.constant 0 : i32
    %c0_i32_2 = arith.constant 0 : i32
    return %arg1, %c0_i32, %c0_i32_0, %c0_i32_1 : i32, i32, i32, i32
  }
  func.func @transform_11(%arg0: i32, %arg1: i32) -> (i32, i32, i32, i32) {
    %c0_i32 = arith.constant 0 : i32
    %c0_i32_0 = arith.constant 0 : i32
    %c0_i32_1 = arith.constant 0 : i32
    %c0_i32_2 = arith.constant 0 : i32
    return %arg1, %c0_i32, %c0_i32_0, %c0_i32_1 : i32, i32, i32, i32
  }
  func.func @transform_12(%arg0: i32, %arg1: i32) -> (i32, i32, i32, i32) {
    %c0_i32 = arith.constant 0 : i32
    %c0_i32_0 = arith.constant 0 : i32
    %c0_i32_1 = arith.constant 0 : i32
    %c0_i32_2 = arith.constant 0 : i32
    return %arg1, %c0_i32, %c0_i32_0, %c0_i32_1 : i32, i32, i32, i32
  }
  func.func @transform_13(%arg0: i32, %arg1: i32) -> (i32, i32, i32) {
    %c0_i32 = arith.constant 0 : i32
    %c0_i32_0 = arith.constant 0 : i32
    %c0_i32_1 = arith.constant 0 : i32
    return %arg1, %c0_i32, %c0_i32_0 : i32, i32, i32
  }
  func.func @transform_14(%arg0: i32, %arg1: i32) -> (i32, i32, i32) {
    %c0_i32 = arith.constant 0 : i32
    %c0_i32_0 = arith.constant 0 : i32
    %c0_i32_1 = arith.constant 0 : i32
    return %arg1, %c0_i32, %c0_i32_0 : i32, i32, i32
  }
  func.func @transform_15(%arg0: i32, %arg1: i32) -> (i32, i32, i32) {
    %c0_i32 = arith.constant 0 : i32
    %c0_i32_0 = arith.constant 0 : i32
    %c0_i32_1 = arith.constant 0 : i32
    return %arg1, %c0_i32, %c0_i32_0 : i32, i32, i32
  }
  func.func @transform_16(%arg0: i32, %arg1: i32) -> (i32, i32, i32) {
    %c0_i32 = arith.constant 0 : i32
    %c0_i32_0 = arith.constant 0 : i32
    %c0_i32_1 = arith.constant 0 : i32
    return %arg1, %c0_i32, %c0_i32_0 : i32, i32, i32
  }
  func.func @transform_17(%arg0: i32, %arg1: i32) -> (i32, i32, i32) {
    %c0_i32 = arith.constant 0 : i32
    %c0_i32_0 = arith.constant 0 : i32
    %c0_i32_1 = arith.constant 0 : i32
    return %arg1, %c0_i32, %c0_i32_0 : i32, i32, i32
  }
  func.func @transform_18(%arg0: i32, %arg1: i32) -> (i32, i32, i32) {
    %c0_i32 = arith.constant 0 : i32
    %c0_i32_0 = arith.constant 0 : i32
    %c0_i32_1 = arith.constant 0 : i32
    return %arg1, %c0_i32, %c0_i32_0 : i32, i32, i32
  }
  func.func @transform_19(%arg0: i32, %arg1: i32) -> (i32, i32, i32) {
    %c0_i32 = arith.constant 0 : i32
    %c0_i32_0 = arith.constant 0 : i32
    %c0_i32_1 = arith.constant 0 : i32
    return %arg1, %c0_i32, %c0_i32_0 : i32, i32, i32
  }
  func.func @transform_20(%arg0: i32, %arg1: i32) -> (i32, i32) {
    %c0_i32 = arith.constant 0 : i32
    %c0_i32_0 = arith.constant 0 : i32
    %c0_i32_1 = arith.constant 0 : i32
    return %c0_i32, %c0_i32_0 : i32, i32
  }
  func.func @transform_21(%arg0: i32, %arg1: i32) -> (i32, i32) {
    %c0_i32 = arith.constant 0 : i32
    %c0_i32_0 = arith.constant 0 : i32
    %c0_i32_1 = arith.constant 0 : i32
    return %c0_i32, %c0_i32_0 : i32, i32
  }
  func.func @transform_22(%arg0: i32, %arg1: i32) -> (i32, i32) {
    %c0_i32 = arith.constant 0 : i32
    %c0_i32_0 = arith.constant 0 : i32
    %c0_i32_1 = arith.constant 0 : i32
    return %c0_i32, %c0_i32_0 : i32, i32
  }
  func.func @transform_23(%arg0: i32, %arg1: i32) -> (i32, i32) {
    %c0_i32 = arith.constant 0 : i32
    %c0_i32_0 = arith.constant 0 : i32
    %c0_i32_1 = arith.constant 0 : i32
    return %c0_i32, %c0_i32_0 : i32, i32
  }
  func.func @transform_24(%arg0: i32, %arg1: i32) -> (i32, i32) {
    %c0_i32 = arith.constant 0 : i32
    %c0_i32_0 = arith.constant 0 : i32
    return %arg0, %c0_i32 : i32, i32
  }
}

</mosaic_0001>

<llo_original>
// kernel: dino_vit_forward.1
$region0: #{dino_vit_forward.1}
  #allocation0 [shape = 'u32[]', space=smem, size = 0x4, offset = 0x4, fixed_abs, tag = 'smem constant byte address 0x4 - core index']
  #allocation1 [shape = 'u32[144,128]{1,0:T(1,128)}', space=vmem, size = 0x12000, scoped, tag = 'internal scratch']
  #allocation2 [shape = 'f32[16,64]{1,0:T(8,128)}', space=vmem, size = 0x2000, scoped, tag = 'scratch operand']
  %s0 = inlined_call_operand.vmem [shape: bf16[16,768], index: 0, kind: input, shape index: {}]
  %s1 = inlined_call_operand.vmem [shape: f32[16,64], index: 1, kind: input, shape index: {}]
  %s2 = inlined_call_operand.vmem [shape: bf16[768,64], index: 2, kind: input, shape index: {}]
  %s3 = inlined_call_operand.vmem [shape: f32[1,8], index: 3, kind: input, shape index: {}]
  %s4 = inlined_call_operand.vmem [shape: f32[2,1,64], index: 4, kind: input, shape index: {}]
  %s5 = inlined_call_operand.vmem [shape: f32[2,1,64], index: 5, kind: input, shape index: {}]
  %s6 = inlined_call_operand.vmem [shape: bf16[2,2,64,32], index: 6, kind: input, shape index: {}]
  %s7 = inlined_call_operand.vmem [shape: f32[2,2,1,32], index: 7, kind: input, shape index: {}]
  %s8 = inlined_call_operand.vmem [shape: bf16[2,2,64,32], index: 8, kind: input, shape index: {}]
  %s9 = inlined_call_operand.vmem [shape: f32[2,2,1,32], index: 9, kind: input, shape index: {}]
  %s10 = inlined_call_operand.vmem [shape: bf16[2,2,64,32], index: 10, kind: input, shape index: {}]
  %s11 = inlined_call_operand.vmem [shape: f32[2,2,1,32], index: 11, kind: input, shape index: {}]
  %s12 = inlined_call_operand.vmem [shape: bf16[2,2,32,64], index: 12, kind: input, shape index: {}]
  %s13 = inlined_call_operand.vmem [shape: f32[2,1,64], index: 13, kind: input, shape index: {}]
  %s14 = inlined_call_operand.vmem [shape: f32[2,1,64], index: 14, kind: input, shape index: {}]
  %s15 = inlined_call_operand.vmem [shape: f32[2,1,64], index: 15, kind: input, shape index: {}]
  %s16 = inlined_call_operand.vmem [shape: bf16[2,64,256], index: 16, kind: input, shape index: {}]
  %s17 = inlined_call_operand.vmem [shape: f32[2,1,256], index: 17, kind: input, shape index: {}]
  %s18 = inlined_call_operand.vmem [shape: bf16[2,256,64], index: 18, kind: input, shape index: {}]
  %s19 = inlined_call_operand.vmem [shape: f32[2,1,64], index: 19, kind: input, shape index: {}]
  %s20 = inlined_call_operand.vmem [shape: f32[1,64], index: 20, kind: input, shape index: {}]
  %s21 = inlined_call_operand.vmem [shape: f32[1,64], index: 21, kind: input, shape index: {}]
  %s22 = inlined_call_operand.vmem [shape: bf16[64,128], index: 22, kind: input, shape index: {}]
  %s23 = inlined_call_operand.vmem [shape: f32[1,128], index: 23, kind: input, shape index: {}]
  %s24 = inlined_call_operand.hbm [shape: f32[2,128], index: 24, kind: output, shape index: {}]
  %s25 = sld [smem:[#allocation0]]
  $region137: #{dino_vit_forward.1} parent=0
    _
  %s27 = ssub.s32 1, %s25
  %s28 = scalar_select 0, %s27, %s25
  $region1: #{dino_vit_forward.1} parent=0
    #allocation3 [shape = 'u8[1024]{0}', space=vmem, size = 0x400, scoped, tag = 'output window, operand 0, single buffered']
    #allocation4 [shape = 's32[2]{0}', space=sflag, size = 0x8, scoped, tag = 'scoped memory for dino_vit_forward.1']
    %29 = vsyncpa [#allocation4], 0
    loop: start=0, step=1, limit=4
    $region2: #{dino_vit_forward.1} parent=1 // loop_pre_header
      _
    $region3: #{dino_vit_forward.1} parent=1 // loop_header
      %s31 = sphi 0, %s35
      %p32 = scmp.ge.s32.totalorder %s31, 4
      %s38 = sphi 0, %s50
      %s39 = sphi 0, %s46
      %s40 = sphi 0, %s38
      %s41 = sphi 0, %s39
      %s42 = sphi 0, %s40
      %s43 = sphi 0, %s41
      %s53 = sphi 0, %s55
      %s56 = sphi 0, %s53
      %s57 = sphi 0, %s56
      %s73 = sphi 0, %s57
      %s77 = sphi 0, %s77
      %s79 = sphi 0, %s77
      %s80 = sphi 0, %s79
      %s94 = sphi 0, %s80
      %s98 = sphi 0, %s98
      %s100 = sphi 0, %s98
      %s101 = sphi 0, %s100
      %s115 = sphi 0, %s101
      %s119 = sphi 0, %s119
      %s121 = sphi 0, %s119
      %s122 = sphi 0, %s121
      %s136 = sphi 0, %s122
      %s142 = sphi 0, %s144
      %s145 = sphi 0, %s142
      %s146 = sphi 0, %s145
      %s162 = sphi 0, %s146
      %s168 = sphi 0, %s170
      %s171 = sphi 0, %s168
      %s172 = sphi 0, %s171
      %s188 = sphi 0, %s172
      %s194 = sphi 0, %s196
      %s197 = sphi 0, %s194
      %s198 = sphi 0, %s197
      %s214 = sphi 0, %s198
      %s220 = sphi 0, %s222
      %s223 = sphi 0, %s220
      %s224 = sphi 0, %s223
      %s240 = sphi 0, %s224
      %s246 = sphi 0, %s248
      %s249 = sphi 0, %s246
      %s250 = sphi 0, %s249
      %s266 = sphi 0, %s250
      %s272 = sphi 0, %s274
      %s275 = sphi 0, %s272
      %s276 = sphi 0, %s275
      %s292 = sphi 0, %s276
      %s298 = sphi 0, %s300
      %s301 = sphi 0, %s298
      %s302 = sphi 0, %s301
      %s318 = sphi 0, %s302
      %s324 = sphi 0, %s326
      %s327 = sphi 0, %s324
      %s328 = sphi 0, %s327
      %s344 = sphi 0, %s328
      %s350 = sphi 0, %s352
      %s353 = sphi 0, %s350
      %s354 = sphi 0, %s353
      %s370 = sphi 0, %s354
      %s376 = sphi 0, %s378
      %s379 = sphi 0, %s376
      %s380 = sphi 0, %s379
      %s396 = sphi 0, %s380
      %s402 = sphi 0, %s404
      %s405 = sphi 0, %s402
      %s406 = sphi 0, %s405
      %s422 = sphi 0, %s406
      %s428 = sphi 0, %s430
      %s431 = sphi 0, %s428
      %s432 = sphi 0, %s431
      %s448 = sphi 0, %s432
      %s454 = sphi 0, %s456
      %s457 = sphi 0, %s454
      %s458 = sphi 0, %s457
      %s474 = sphi 0, %s458
      %s480 = sphi 0, %s482
      %s483 = sphi 0, %s480
      %s484 = sphi 0, %s483
      %s500 = sphi 0, %s484
      %s506 = sphi 0, %s508
      %s509 = sphi 0, %s506
      %s510 = sphi 0, %s509
      %s526 = sphi 0, %s510
      %s532 = sphi 0, %s534
      %s535 = sphi 0, %s532
      %s536 = sphi 0, %s535
      %s552 = sphi 0, %s536
      %s556 = sphi 0, %s556
      %s558 = sphi 0, %s556
      %s559 = sphi 0, %s558
      %s573 = sphi 0, %s559
      %s577 = sphi 0, %s577
      %s579 = sphi 0, %s577
      %s580 = sphi 0, %s579
      %s594 = sphi 0, %s580
      %s598 = sphi 0, %s598
      %s600 = sphi 0, %s598
      %s601 = sphi 0, %s600
      %s615 = sphi 0, %s601
      %s619 = sphi 0, %s619
      %s621 = sphi 0, %s619
      %s622 = sphi 0, %s621
      %s636 = sphi 0, %s622
      %s642 = sphi 0, %s644
      %s645 = sphi 0, %s642
      %s646 = sphi 0, %s645
      %s662 = sphi 0, %s646
    $region4: #{dino_vit_forward.1} parent=1 // loop_header_branch
      %34 = sbr.rel (%p32) target = $region8
    $region5: #{dino_vit_forward.1} parent=1 // loop_body
      %s36 = ssub.s32 %s31, 1
      %s37 = ssub.s32 %s31, 2
      %s44 = sadd.s32 1, %s39
      %p45 = scmp.ge.s32.totalorder %s44, 2
      %s46 = scalar_select %p45, 0, %s44
      %s47 = sadd.s32 1, %s38
      %s48 = scalar_select %p45, %s47, %s38
      %p49 = scmp.ge.s32.totalorder %s48, 1
      %s50 = scalar_select %p49, 0, %s48
      %s51 = ssub.s32 %s38, %s50
      %p52 = scmp.eq.s32.totalorder %s51, 0
      %s54 = sadd.s32 %s53, 1
      %s55 = scalar_select %p52, %s53, %s54
      %p58 = pneg %p52
      %p59 = scmp.eq.s32.totalorder %s31, 1
      %p60 = por %p58, %p59
      %p61 = scmp.ne.s32.totalorder %s53, %s56
      %p62 = scmp.eq.s32.totalorder %s31, 0
      %p63 = por %p61, %p62
      %p64 = scmp.ne.s32.totalorder %s53, %s56
      %p65 = scmp.eq.s32.totalorder %s36, 1
      %p66 = por %p64, %p65
      %p67 = scmp.ne.s32.totalorder %s56, %s57
      %p68 = scmp.eq.s32.totalorder %s36, 0
      %p69 = por %p67, %p68
      %p70 = scmp.ne.s32.totalorder %s56, %s57
      %p71 = scmp.eq.s32.totalorder %s37, 1
      %p72 = por %p70, %p71
      %p74 = scmp.ne.s32.totalorder %s57, %s73
      %p75 = scmp.eq.s32.totalorder %s37, 0
      %p76 = por %p74, %p75
      %s78 = sadd.s32 %s77, 1
      %p81 = scmp.eq.s32.totalorder %s31, 1
      %p82 = scmp.ne.s32.totalorder %s77, %s79
      %p83 = scmp.eq.s32.totalorder %s31, 0
      %p84 = por %p82, %p83
      %p85 = scmp.ne.s32.totalorder %s77, %s79
      %p86 = scmp.eq.s32.totalorder %s36, 1
      %p87 = por %p85, %p86
      %p88 = scmp.ne.s32.totalorder %s79, %s80
      %p89 = scmp.eq.s32.totalorder %s36, 0
      %p90 = por %p88, %p89
      %p91 = scmp.ne.s32.totalorder %s79, %s80
      %p92 = scmp.eq.s32.totalorder %s37, 1
      %p93 = por %p91, %p92
      %p95 = scmp.ne.s32.totalorder %s80, %s94
      %p96 = scmp.eq.s32.totalorder %s37, 0
      %p97 = por %p95, %p96
      %s99 = sadd.s32 %s98, 1
      %p102 = scmp.eq.s32.totalorder %s31, 1
      %p103 = scmp.ne.s32.totalorder %s98, %s100
      %p104 = scmp.eq.s32.totalorder %s31, 0
      %p105 = por %p103, %p104
      %p106 = scmp.ne.s32.totalorder %s98, %s100
      %p107 = scmp.eq.s32.totalorder %s36, 1
      %p108 = por %p106, %p107
      %p109 = scmp.ne.s32.totalorder %s100, %s101
      %p110 = scmp.eq.s32.totalorder %s36, 0
      %p111 = por %p109, %p110
      %p112 = scmp.ne.s32.totalorder %s100, %s101
      %p113 = scmp.eq.s32.totalorder %s37, 1
      %p114 = por %p112, %p113
      %p116 = scmp.ne.s32.totalorder %s101, %s115
      %p117 = scmp.eq.s32.totalorder %s37, 0
      %p118 = por %p116, %p117
      %s120 = sadd.s32 %s119, 1
      %p123 = scmp.eq.s32.totalorder %s31, 1
      %p124 = scmp.ne.s32.totalorder %s119, %s121
      %p125 = scmp.eq.s32.totalorder %s31, 0
      %p126 = por %p124, %p125
      %p127 = scmp.ne.s32.totalorder %s119, %s121
      %p128 = scmp.eq.s32.totalorder %s36, 1
      %p129 = por %p127, %p128
      %p130 = scmp.ne.s32.totalorder %s121, %s122
      %p131 = scmp.eq.s32.totalorder %s36, 0
      %p132 = por %p130, %p131
      %p133 = scmp.ne.s32.totalorder %s121, %s122
      %p134 = scmp.eq.s32.totalorder %s37, 1
      %p135 = por %p133, %p134
      %p137 = scmp.ne.s32.totalorder %s122, %s136
      %p138 = scmp.eq.s32.totalorder %s37, 0
      %p139 = por %p137, %p138
      %s140 = ssub.s32 %s39, %s46
      %p141 = scmp.eq.s32.totalorder %s140, 0
      %s143 = sadd.s32 %s142, 1
      %s144 = scalar_select %p141, %s142, %s143
      %p147 = pneg %p141
      %p148 = scmp.eq.s32.totalorder %s31, 1
      %p149 = por %p147, %p148
      %p150 = scmp.ne.s32.totalorder %s142, %s145
      %p151 = scmp.eq.s32.totalorder %s31, 0
      %p152 = por %p150, %p151
      %p153 = scmp.ne.s32.totalorder %s142, %s145
      %p154 = scmp.eq.s32.totalorder %s36, 1
      %p155 = por %p153, %p154
      %p156 = scmp.ne.s32.totalorder %s145, %s146
      %p157 = scmp.eq.s32.totalorder %s36, 0
      %p158 = por %p156, %p157
      %p159 = scmp.ne.s32.totalorder %s145, %s146
      %p160 = scmp.eq.s32.totalorder %s37, 1
      %p161 = por %p159, %p160
      %p163 = scmp.ne.s32.totalorder %s146, %s162
      %p164 = scmp.eq.s32.totalorder %s37, 0
      %p165 = por %p163, %p164
      %s166 = ssub.s32 %s39, %s46
      %p167 = scmp.eq.s32.totalorder %s166, 0
      %s169 = sadd.s32 %s168, 1
      %s170 = scalar_select %p167, %s168, %s169
      %p173 = pneg %p167
      %p174 = scmp.eq.s32.totalorder %s31, 1
      %p175 = por %p173, %p174
      %p176 = scmp.ne.s32.totalorder %s168, %s171
      %p177 = scmp.eq.s32.totalorder %s31, 0
      %p178 = por %p176, %p177
      %p179 = scmp.ne.s32.totalorder %s168, %s171
      %p180 = scmp.eq.s32.totalorder %s36, 1
      %p181 = por %p179, %p180
      %p182 = scmp.ne.s32.totalorder %s171, %s172
      %p183 = scmp.eq.s32.totalorder %s36, 0
      %p184 = por %p182, %p183
      %p185 = scmp.ne.s32.totalorder %s171, %s172
      %p186 = scmp.eq.s32.totalorder %s37, 1
      %p187 = por %p185, %p186
      %p189 = scmp.ne.s32.totalorder %s172, %s188
      %p190 = scmp.eq.s32.totalorder %s37, 0
      %p191 = por %p189, %p190
      %s192 = ssub.s32 %s39, %s46
      %p193 = scmp.eq.s32.totalorder %s192, 0
      %s195 = sadd.s32 %s194, 1
      %s196 = scalar_select %p193, %s194, %s195
      %p199 = pneg %p193
      %p200 = scmp.eq.s32.totalorder %s31, 1
      %p201 = por %p199, %p200
      %p202 = scmp.ne.s32.totalorder %s194, %s197
      %p203 = scmp.eq.s32.totalorder %s31, 0
      %p204 = por %p202, %p203
      %p205 = scmp.ne.s32.totalorder %s194, %s197
      %p206 = scmp.eq.s32.totalorder %s36, 1
      %p207 = por %p205, %p206
      %p208 = scmp.ne.s32.totalorder %s197, %s198
      %p209 = scmp.eq.s32.totalorder %s36, 0
      %p210 = por %p208, %p209
      %p211 = scmp.ne.s32.totalorder %s197, %s198
      %p212 = scmp.eq.s32.totalorder %s37, 1
      %p213 = por %p211, %p212
      %p215 = scmp.ne.s32.totalorder %s198, %s214
      %p216 = scmp.eq.s32.totalorder %s37, 0
      %p217 = por %p215, %p216
      %s218 = ssub.s32 %s39, %s46
      %p219 = scmp.eq.s32.totalorder %s218, 0
      %s221 = sadd.s32 %s220, 1
      %s222 = scalar_select %p219, %s220, %s221
      %p225 = pneg %p219
      %p226 = scmp.eq.s32.totalorder %s31, 1
      %p227 = por %p225, %p226
      %p228 = scmp.ne.s32.totalorder %s220, %s223
      %p229 = scmp.eq.s32.totalorder %s31, 0
      %p230 = por %p228, %p229
      %p231 = scmp.ne.s32.totalorder %s220, %s223
      %p232 = scmp.eq.s32.totalorder %s36, 1
      %p233 = por %p231, %p232
      %p234 = scmp.ne.s32.totalorder %s223, %s224
      %p235 = scmp.eq.s32.totalorder %s36, 0
      %p236 = por %p234, %p235
      %p237 = scmp.ne.s32.totalorder %s223, %s224
      %p238 = scmp.eq.s32.totalorder %s37, 1
      %p239 = por %p237, %p238
      %p241 = scmp.ne.s32.totalorder %s224, %s240
      %p242 = scmp.eq.s32.totalorder %s37, 0
      %p243 = por %p241, %p242
      %s244 = ssub.s32 %s39, %s46
      %p245 = scmp.eq.s32.totalorder %s244, 0
      %s247 = sadd.s32 %s246, 1
      %s248 = scalar_select %p245, %s246, %s247
      %p251 = pneg %p245
      %p252 = scmp.eq.s32.totalorder %s31, 1
      %p253 = por %p251, %p252
      %p254 = scmp.ne.s32.totalorder %s246, %s249
      %p255 = scmp.eq.s32.totalorder %s31, 0
      %p256 = por %p254, %p255
      %p257 = scmp.ne.s32.totalorder %s246, %s249
      %p258 = scmp.eq.s32.totalorder %s36, 1
      %p259 = por %p257, %p258
      %p260 = scmp.ne.s32.totalorder %s249, %s250
      %p261 = scmp.eq.s32.totalorder %s36, 0
      %p262 = por %p260, %p261
      %p263 = scmp.ne.s32.totalorder %s249, %s250
      %p264 = scmp.eq.s32.totalorder %s37, 1
      %p265 = por %p263, %p264
      %p267 = scmp.ne.s32.totalorder %s250, %s266
      %p268 = scmp.eq.s32.totalorder %s37, 0
      %p269 = por %p267, %p268
      %s270 = ssub.s32 %s39, %s46
      %p271 = scmp.eq.s32.totalorder %s270, 0
      %s273 = sadd.s32 %s272, 1
      %s274 = scalar_select %p271, %s272, %s273
      %p277 = pneg %p271
      %p278 = scmp.eq.s32.totalorder %s31, 1
      %p279 = por %p277, %p278
      %p280 = scmp.ne.s32.totalorder %s272, %s275
      %p281 = scmp.eq.s32.totalorder %s31, 0
      %p282 = por %p280, %p281
      %p283 = scmp.ne.s32.totalorder %s272, %s275
      %p284 = scmp.eq.s32.totalorder %s36, 1
      %p285 = por %p283, %p284
      %p286 = scmp.ne.s32.totalorder %s275, %s276
      %p287 = scmp.eq.s32.totalorder %s36, 0
      %p288 = por %p286, %p287
      %p289 = scmp.ne.s32.totalorder %s275, %s276
      %p290 = scmp.eq.s32.totalorder %s37, 1
      %p291 = por %p289, %p290
      %p293 = scmp.ne.s32.totalorder %s276, %s292
      %p294 = scmp.eq.s32.totalorder %s37, 0
      %p295 = por %p293, %p294
      %s296 = ssub.s32 %s39, %s46
      %p297 = scmp.eq.s32.totalorder %s296, 0
      %s299 = sadd.s32 %s298, 1
      %s300 = scalar_select %p297, %s298, %s299
      %p303 = pneg %p297
      %p304 = scmp.eq.s32.totalorder %s31, 1
      %p305 = por %p303, %p304
      %p306 = scmp.ne.s32.totalorder %s298, %s301
      %p307 = scmp.eq.s32.totalorder %s31, 0
      %p308 = por %p306, %p307
      %p309 = scmp.ne.s32.totalorder %s298, %s301
      %p310 = scmp.eq.s32.totalorder %s36, 1
      %p311 = por %p309, %p310
      %p312 = scmp.ne.s32.totalorder %s301, %s302
      %p313 = scmp.eq.s32.totalorder %s36, 0
      %p314 = por %p312, %p313
      %p315 = scmp.ne.s32.totalorder %s301, %s302
      %p316 = scmp.eq.s32.totalorder %s37, 1
      %p317 = por %p315, %p316
      %p319 = scmp.ne.s32.totalorder %s302, %s318
      %p320 = scmp.eq.s32.totalorder %s37, 0
      %p321 = por %p319, %p320
      %s322 = ssub.s32 %s39, %s46
      %p323 = scmp.eq.s32.totalorder %s322, 0
      %s325 = sadd.s32 %s324, 1
      %s326 = scalar_select %p323, %s324, %s325
      %p329 = pneg %p323
      %p330 = scmp.eq.s32.totalorder %s31, 1
      %p331 = por %p329, %p330
      %p332 = scmp.ne.s32.totalorder %s324, %s327
      %p333 = scmp.eq.s32.totalorder %s31, 0
      %p334 = por %p332, %p333
      %p335 = scmp.ne.s32.totalorder %s324, %s327
      %p336 = scmp.eq.s32.totalorder %s36, 1
      %p337 = por %p335, %p336
      %p338 = scmp.ne.s32.totalorder %s327, %s328
      %p339 = scmp.eq.s32.totalorder %s36, 0
      %p340 = por %p338, %p339
      %p341 = scmp.ne.s32.totalorder %s327, %s328
      %p342 = scmp.eq.s32.totalorder %s37, 1
      %p343 = por %p341, %p342
      %p345 = scmp.ne.s32.totalorder %s328, %s344
      %p346 = scmp.eq.s32.totalorder %s37, 0
      %p347 = por %p345, %p346
      %s348 = ssub.s32 %s39, %s46
      %p349 = scmp.eq.s32.totalorder %s348, 0
      %s351 = sadd.s32 %s350, 1
      %s352 = scalar_select %p349, %s350, %s351
      %p355 = pneg %p349
      %p356 = scmp.eq.s32.totalorder %s31, 1
      %p357 = por %p355, %p356
      %p358 = scmp.ne.s32.totalorder %s350, %s353
      %p359 = scmp.eq.s32.totalorder %s31, 0
      %p360 = por %p358, %p359
      %p361 = scmp.ne.s32.totalorder %s350, %s353
      %p362 = scmp.eq.s32.totalorder %s36, 1
      %p363 = por %p361, %p362
      %p364 = scmp.ne.s32.totalorder %s353, %s354
      %p365 = scmp.eq.s32.totalorder %s36, 0
      %p366 = por %p364, %p365
      %p367 = scmp.ne.s32.totalorder %s353, %s354
      %p368 = scmp.eq.s32.totalorder %s37, 1
      %p369 = por %p367, %p368
      %p371 = scmp.ne.s32.totalorder %s354, %s370
      %p372 = scmp.eq.s32.totalorder %s37, 0
      %p373 = por %p371, %p372
      %s374 = ssub.s32 %s39, %s46
      %p375 = scmp.eq.s32.totalorder %s374, 0
      %s377 = sadd.s32 %s376, 1
      %s378 = scalar_select %p375, %s376, %s377
      %p381 = pneg %p375
      %p382 = scmp.eq.s32.totalorder %s31, 1
      %p383 = por %p381, %p382
      %p384 = scmp.ne.s32.totalorder %s376, %s379
      %p385 = scmp.eq.s32.totalorder %s31, 0
      %p386 = por %p384, %p385
      %p387 = scmp.ne.s32.totalorder %s376, %s379
      %p388 = scmp.eq.s32.totalorder %s36, 1
      %p389 = por %p387, %p388
      %p390 = scmp.ne.s32.totalorder %s379, %s380
      %p391 = scmp.eq.s32.totalorder %s36, 0
      %p392 = por %p390, %p391
      %p393 = scmp.ne.s32.totalorder %s379, %s380
      %p394 = scmp.eq.s32.totalorder %s37, 1
      %p395 = por %p393, %p394
      %p397 = scmp.ne.s32.totalorder %s380, %s396
      %p398 = scmp.eq.s32.totalorder %s37, 0
      %p399 = por %p397, %p398
      %s400 = ssub.s32 %s39, %s46
      %p401 = scmp.eq.s32.totalorder %s400, 0
      %s403 = sadd.s32 %s402, 1
      %s404 = scalar_select %p401, %s402, %s403
      %p407 = pneg %p401
      %p408 = scmp.eq.s32.totalorder %s31, 1
      %p409 = por %p407, %p408
      %p410 = scmp.ne.s32.totalorder %s402, %s405
      %p411 = scmp.eq.s32.totalorder %s31, 0
      %p412 = por %p410, %p411
      %p413 = scmp.ne.s32.totalorder %s402, %s405
      %p414 = scmp.eq.s32.totalorder %s36, 1
      %p415 = por %p413, %p414
      %p416 = scmp.ne.s32.totalorder %s405, %s406
      %p417 = scmp.eq.s32.totalorder %s36, 0
      %p418 = por %p416, %p417
      %p419 = scmp.ne.s32.totalorder %s405, %s406
      %p420 = scmp.eq.s32.totalorder %s37, 1
      %p421 = por %p419, %p420
      %p423 = scmp.ne.s32.totalorder %s406, %s422
      %p424 = scmp.eq.s32.totalorder %s37, 0
      %p425 = por %p423, %p424
      %s426 = ssub.s32 %s39, %s46
      %p427 = scmp.eq.s32.totalorder %s426, 0
      %s429 = sadd.s32 %s428, 1
      %s430 = scalar_select %p427, %s428, %s429
      %p433 = pneg %p427
      %p434 = scmp.eq.s32.totalorder %s31, 1
      %p435 = por %p433, %p434
      %p436 = scmp.ne.s32.totalorder %s428, %s431
      %p437 = scmp.eq.s32.totalorder %s31, 0
      %p438 = por %p436, %p437
      %p439 = scmp.ne.s32.totalorder %s428, %s431
      %p440 = scmp.eq.s32.totalorder %s36, 1
      %p441 = por %p439, %p440
      %p442 = scmp.ne.s32.totalorder %s431, %s432
      %p443 = scmp.eq.s32.totalorder %s36, 0
      %p444 = por %p442, %p443
      %p445 = scmp.ne.s32.totalorder %s431, %s432
      %p446 = scmp.eq.s32.totalorder %s37, 1
      %p447 = por %p445, %p446
      %p449 = scmp.ne.s32.totalorder %s432, %s448
      %p450 = scmp.eq.s32.totalorder %s37, 0
      %p451 = por %p449, %p450
      %s452 = ssub.s32 %s39, %s46
      %p453 = scmp.eq.s32.totalorder %s452, 0
      %s455 = sadd.s32 %s454, 1
      %s456 = scalar_select %p453, %s454, %s455
      %p459 = pneg %p453
      %p460 = scmp.eq.s32.totalorder %s31, 1
      %p461 = por %p459, %p460
      %p462 = scmp.ne.s32.totalorder %s454, %s457
      %p463 = scmp.eq.s32.totalorder %s31, 0
      %p464 = por %p462, %p463
      %p465 = scmp.ne.s32.totalorder %s454, %s457
      %p466 = scmp.eq.s32.totalorder %s36, 1
      %p467 = por %p465, %p466
      %p468 = scmp.ne.s32.totalorder %s457, %s458
      %p469 = scmp.eq.s32.totalorder %s36, 0
      %p470 = por %p468, %p469
      %p471 = scmp.ne.s32.totalorder %s457, %s458
      %p472 = scmp.eq.s32.totalorder %s37, 1
      %p473 = por %p471, %p472
      %p475 = scmp.ne.s32.totalorder %s458, %s474
      %p476 = scmp.eq.s32.totalorder %s37, 0
      %p477 = por %p475, %p476
      %s478 = ssub.s32 %s39, %s46
      %p479 = scmp.eq.s32.totalorder %s478, 0
      %s481 = sadd.s32 %s480, 1
      %s482 = scalar_select %p479, %s480, %s481
      %p485 = pneg %p479
      %p486 = scmp.eq.s32.totalorder %s31, 1
      %p487 = por %p485, %p486
      %p488 = scmp.ne.s32.totalorder %s480, %s483
      %p489 = scmp.eq.s32.totalorder %s31, 0
      %p490 = por %p488, %p489
      %p491 = scmp.ne.s32.totalorder %s480, %s483
      %p492 = scmp.eq.s32.totalorder %s36, 1
      %p493 = por %p491, %p492
      %p494 = scmp.ne.s32.totalorder %s483, %s484
      %p495 = scmp.eq.s32.totalorder %s36, 0
      %p496 = por %p494, %p495
      %p497 = scmp.ne.s32.totalorder %s483, %s484
      %p498 = scmp.eq.s32.totalorder %s37, 1
      %p499 = por %p497, %p498
      %p501 = scmp.ne.s32.totalorder %s484, %s500
      %p502 = scmp.eq.s32.totalorder %s37, 0
      %p503 = por %p501, %p502
      %s504 = ssub.s32 %s39, %s46
      %p505 = scmp.eq.s32.totalorder %s504, 0
      %s507 = sadd.s32 %s506, 1
      %s508 = scalar_select %p505, %s506, %s507
      %p511 = pneg %p505
      %p512 = scmp.eq.s32.totalorder %s31, 1
      %p513 = por %p511, %p512
      %p514 = scmp.ne.s32.totalorder %s506, %s509
      %p515 = scmp.eq.s32.totalorder %s31, 0
      %p516 = por %p514, %p515
      %p517 = scmp.ne.s32.totalorder %s506, %s509
      %p518 = scmp.eq.s32.totalorder %s36, 1
      %p519 = por %p517, %p518
      %p520 = scmp.ne.s32.totalorder %s509, %s510
      %p521 = scmp.eq.s32.totalorder %s36, 0
      %p522 = por %p520, %p521
      %p523 = scmp.ne.s32.totalorder %s509, %s510
      %p524 = scmp.eq.s32.totalorder %s37, 1
      %p525 = por %p523, %p524
      %p527 = scmp.ne.s32.totalorder %s510, %s526
      %p528 = scmp.eq.s32.totalorder %s37, 0
      %p529 = por %p527, %p528
      %s530 = ssub.s32 %s39, %s46
      %p531 = scmp.eq.s32.totalorder %s530, 0
      %s533 = sadd.s32 %s532, 1
      %s534 = scalar_select %p531, %s532, %s533
      %p537 = pneg %p531
      %p538 = scmp.eq.s32.totalorder %s31, 1
      %p539 = por %p537, %p538
      %p540 = scmp.ne.s32.totalorder %s532, %s535
      %p541 = scmp.eq.s32.totalorder %s31, 0
      %p542 = por %p540, %p541
      %p543 = scmp.ne.s32.totalorder %s532, %s535
      %p544 = scmp.eq.s32.totalorder %s36, 1
      %p545 = por %p543, %p544
      %p546 = scmp.ne.s32.totalorder %s535, %s536
      %p547 = scmp.eq.s32.totalorder %s36, 0
      %p548 = por %p546, %p547
      %p549 = scmp.ne.s32.totalorder %s535, %s536
      %p550 = scmp.eq.s32.totalorder %s37, 1
      %p551 = por %p549, %p550
      %p553 = scmp.ne.s32.totalorder %s536, %s552
      %p554 = scmp.eq.s32.totalorder %s37, 0
      %p555 = por %p553, %p554
      %s557 = sadd.s32 %s556, 1
      %p560 = scmp.eq.s32.totalorder %s31, 1
      %p561 = scmp.ne.s32.totalorder %s556, %s558
      %p562 = scmp.eq.s32.totalorder %s31, 0
      %p563 = por %p561, %p562
      %p564 = scmp.ne.s32.totalorder %s556, %s558
      %p565 = scmp.eq.s32.totalorder %s36, 1
      %p566 = por %p564, %p565
      %p567 = scmp.ne.s32.totalorder %s558, %s559
      %p568 = scmp.eq.s32.totalorder %s36, 0
      %p569 = por %p567, %p568
      %p570 = scmp.ne.s32.totalorder %s558, %s559
      %p571 = scmp.eq.s32.totalorder %s37, 1
      %p572 = por %p570, %p571
      %p574 = scmp.ne.s32.totalorder %s559, %s573
      %p575 = scmp.eq.s32.totalorder %s37, 0
      %p576 = por %p574, %p575
      %s578 = sadd.s32 %s577, 1
      %p581 = scmp.eq.s32.totalorder %s31, 1
      %p582 = scmp.ne.s32.totalorder %s577, %s579
      %p583 = scmp.eq.s32.totalorder %s31, 0
      %p584 = por %p582, %p583
      %p585 = scmp.ne.s32.totalorder %s577, %s579
      %p586 = scmp.eq.s32.totalorder %s36, 1
      %p587 = por %p585, %p586
      %p588 = scmp.ne.s32.totalorder %s579, %s580
      %p589 = scmp.eq.s32.totalorder %s36, 0
      %p590 = por %p588, %p589
      %p591 = scmp.ne.s32.totalorder %s579, %s580
      %p592 = scmp.eq.s32.totalorder %s37, 1
      %p593 = por %p591, %p592
      %p595 = scmp.ne.s32.totalorder %s580, %s594
      %p596 = scmp.eq.s32.totalorder %s37, 0
      %p597 = por %p595, %p596
      %s599 = sadd.s32 %s598, 1
      %p602 = scmp.eq.s32.totalorder %s31, 1
      %p603 = scmp.ne.s32.totalorder %s598, %s600
      %p604 = scmp.eq.s32.totalorder %s31, 0
      %p605 = por %p603, %p604
      %p606 = scmp.ne.s32.totalorder %s598, %s600
      %p607 = scmp.eq.s32.totalorder %s36, 1
      %p608 = por %p606, %p607
      %p609 = scmp.ne.s32.totalorder %s600, %s601
      %p610 = scmp.eq.s32.totalorder %s36, 0
      %p611 = por %p609, %p610
      %p612 = scmp.ne.s32.totalorder %s600, %s601
      %p613 = scmp.eq.s32.totalorder %s37, 1
      %p614 = por %p612, %p613
      %p616 = scmp.ne.s32.totalorder %s601, %s615
      %p617 = scmp.eq.s32.totalorder %s37, 0
      %p618 = por %p616, %p617
      %s620 = sadd.s32 %s619, 1
      %p623 = scmp.eq.s32.totalorder %s31, 1
      %p624 = scmp.ne.s32.totalorder %s619, %s621
      %p625 = scmp.eq.s32.totalorder %s31, 0
      %p626 = por %p624, %p625
      %p627 = scmp.ne.s32.totalorder %s619, %s621
      %p628 = scmp.eq.s32.totalorder %s36, 1
      %p629 = por %p627, %p628
      %p630 = scmp.ne.s32.totalorder %s621, %s622
      %p631 = scmp.eq.s32.totalorder %s36, 0
      %p632 = por %p630, %p631
      %p633 = scmp.ne.s32.totalorder %s621, %s622
      %p634 = scmp.eq.s32.totalorder %s37, 1
      %p635 = por %p633, %p634
      %p637 = scmp.ne.s32.totalorder %s622, %s636
      %p638 = scmp.eq.s32.totalorder %s37, 0
      %p639 = por %p637, %p638
      %s640 = ssub.s32 %s38, %s50
      %p641 = scmp.eq.s32.totalorder %s640, 0
      %s643 = sadd.s32 %s642, 1
      %s644 = scalar_select %p641, %s642, %s643
      %p647 = pneg %p641
      %p648 = scmp.eq.s32.totalorder %s31, 1
      %p649 = por %p647, %p648
      %p650 = scmp.ne.s32.totalorder %s642, %s645
      %p651 = scmp.eq.s32.totalorder %s31, 0
      %p652 = por %p650, %p651
      %p653 = scmp.ne.s32.totalorder %s642, %s645
      %p654 = scmp.eq.s32.totalorder %s36, 1
      %p655 = por %p653, %p654
      %p656 = scmp.ne.s32.totalorder %s645, %s646
      %p657 = scmp.eq.s32.totalorder %s36, 0
      %p658 = por %p656, %p657
      %p659 = scmp.ne.s32.totalorder %s645, %s646
      %p660 = scmp.eq.s32.totalorder %s37, 1
      %p661 = por %p659, %p660
      %p663 = scmp.ne.s32.totalorder %s646, %s662
      %p664 = scmp.eq.s32.totalorder %s37, 0
      %p665 = por %p663, %p664
      %p666 = scmp.le.s32.totalorder 1, %s31
      %p667 = scmp.lt.s32.totalorder %s31, 3
      %p668 = pnand %p666, %p667
      %p669 = pneg %p668
      // Predicated region
      $region9: #{dino_vit_forward.1} parent=5 // pred_check
        _
      $region10: #{dino_vit_forward.1} parent=5 // pred_check_branch
        %671 = sbr.rel (%p668) target = $region12
      $region11: #{dino_vit_forward.1} parent=5 // pred_region
        %s672 = ssub.s32 %s31, 1
        // Predicated region
        $region13: #{dino_vit_forward.1} parent=11 // pred_check
          %p673 = pneg %p69
        $region14: #{dino_vit_forward.1} parent=11 // pred_check_branch
          %675 = sbr.rel (%p673) target = $region16
        $region15: #{dino_vit_forward.1} parent=11 // pred_region
          %s676 = smul.u32 2, %s40
          %p677 = scmp.lt.s32.totalorder %s676, 1
          %s678 = scalar_select %p677, %s676, 1
          %s679 = smul.addr %s678, 6
          %s680 = smul.addr %s679, 4
          %s681 = scalar_lea.vmem %s0, %s680
          %s682 = smul.u32 2, %s40
        $region16: #{dino_vit_forward.1} parent=11 // pred_fallthru
          _
        // Predicated region
        $region17: #{dino_vit_forward.1} parent=11 // pred_check
          %p683 = pneg %p90
        $region18: #{dino_vit_forward.1} parent=11 // pred_check_branch
          %685 = sbr.rel (%p683) target = $region20
        $region19: #{dino_vit_forward.1} parent=11 // pred_region
          _
        $region20: #{dino_vit_forward.1} parent=11 // pred_fallthru
          _
        // Predicated region
        $region21: #{dino_vit_forward.1} parent=11 // pred_check
          %p686 = pneg %p111
        $region22: #{dino_vit_forward.1} parent=11 // pred_check_branch
          %688 = sbr.rel (%p686) target = $region24
        $region23: #{dino_vit_forward.1} parent=11 // pred_region
          _
        $region24: #{dino_vit_forward.1} parent=11 // pred_fallthru
          _
        // Predicated region
        $region25: #{dino_vit_forward.1} parent=11 // pred_check
          %p689 = pneg %p132
        $region26: #{dino_vit_forward.1} parent=11 // pred_check_branch
          %691 = sbr.rel (%p689) target = $region28
        $region27: #{dino_vit_forward.1} parent=11 // pred_region
          _
        $region28: #{dino_vit_forward.1} parent=11 // pred_fallthru
          _
        // Predicated region
        $region29: #{dino_vit_forward.1} parent=11 // pred_check
          %p692 = pneg %p569
        $region30: #{dino_vit_forward.1} parent=11 // pred_check_branch
          %694 = sbr.rel (%p692) target = $region32
        $region31: #{dino_vit_forward.1} parent=11 // pred_region
          _
        $region32: #{dino_vit_forward.1} parent=11 // pred_fallthru
          _
        // Predicated region
        $region33: #{dino_vit_forward.1} parent=11 // pred_check
          %p695 = pneg %p590
        $region34: #{dino_vit_forward.1} parent=11 // pred_check_branch
          %697 = sbr.rel (%p695) target = $region36
        $region35: #{dino_vit_forward.1} parent=11 // pred_region
          _
        $region36: #{dino_vit_forward.1} parent=11 // pred_fallthru
          _
        // Predicated region
        $region37: #{dino_vit_forward.1} parent=11 // pred_check
          %p698 = pneg %p611
        $region38: #{dino_vit_forward.1} parent=11 // pred_check_branch
          %700 = sbr.rel (%p698) target = $region40
        $region39: #{dino_vit_forward.1} parent=11 // pred_region
          _
        $region40: #{dino_vit_forward.1} parent=11 // pred_fallthru
          _
        // Predicated region
        $region41: #{dino_vit_forward.1} parent=11 // pred_check
          %p701 = pneg %p632
        $region42: #{dino_vit_forward.1} parent=11 // pred_check_branch
          %703 = sbr.rel (%p701) target = $region44
        $region43: #{dino_vit_forward.1} parent=11 // pred_region
          _
        $region44: #{dino_vit_forward.1} parent=11 // pred_fallthru
          _
      $region12: #{dino_vit_forward.1} parent=5 // pred_fallthru
        _
      %p704 = scmp.lt.s32.totalorder %s31, 2
      // Predicated region
      $region45: #{dino_vit_forward.1} parent=5 // pred_check
        %p705 = pneg %p704
      $region46: #{dino_vit_forward.1} parent=5 // pred_check_branch
        %707 = sbr.rel (%p705) target = $region48
      $region47: #{dino_vit_forward.1} parent=5 // pred_region
        // Predicated region
        $region49: #{dino_vit_forward.1} parent=47 // pred_check
          %p708 = pneg %p152
        $region50: #{dino_vit_forward.1} parent=47 // pred_check_branch
          %710 = sbr.rel (%p708) target = $region52
        $region51: #{dino_vit_forward.1} parent=47 // pred_region
          %p711 = scmp.lt.s32.totalorder %s39, 1
          %s712 = scalar_select %p711, %s39, 1
          %s713 = scalar_lea.vmem %s4, %s712
        $region52: #{dino_vit_forward.1} parent=47 // pred_fallthru
          _
        // Predicated region
        $region53: #{dino_vit_forward.1} parent=47 // pred_check
          %p714 = pneg %p178
        $region54: #{dino_vit_forward.1} parent=47 // pred_check_branch
          %716 = sbr.rel (%p714) target = $region56
        $region55: #{dino_vit_forward.1} parent=47 // pred_region
          %p717 = scmp.lt.s32.totalorder %s39, 1
          %s718 = scalar_select %p717, %s39, 1
          %s719 = scalar_lea.vmem %s5, %s718
        $region56: #{dino_vit_forward.1} parent=47 // pred_fallthru
          _
        // Predicated region
        $region57: #{dino_vit_forward.1} parent=47 // pred_check
          %p720 = pneg %p204
        $region58: #{dino_vit_forward.1} parent=47 // pred_check_branch
          %722 = sbr.rel (%p720) target = $region60
        $region59: #{dino_vit_forward.1} parent=47 // pred_region
          %p723 = scmp.lt.s32.totalorder %s39, 1
          %s724 = scalar_select %p723, %s39, 1
          %s725 = smul.addr %s724, 16
          %s726 = smul.addr %s725, 4
          %s727 = scalar_lea.vmem %s6, %s726
        $region60: #{dino_vit_forward.1} parent=47 // pred_fallthru
          _
        // Predicated region
        $region61: #{dino_vit_forward.1} parent=47 // pred_check
          %p728 = pneg %p230
        $region62: #{dino_vit_forward.1} parent=47 // pred_check_branch
          %730 = sbr.rel (%p728) target = $region64
        $region63: #{dino_vit_forward.1} parent=47 // pred_region
          %p731 = scmp.lt.s32.totalorder %s39, 1
          %s732 = scalar_select %p731, %s39, 1
          %s733 = smul.addr %s732, 2
          %s734 = scalar_lea.vmem %s7, %s733
        $region64: #{dino_vit_forward.1} parent=47 // pred_fallthru
          _
        // Predicated region
        $region65: #{dino_vit_forward.1} parent=47 // pred_check
          %p735 = pneg %p256
        $region66: #{dino_vit_forward.1} parent=47 // pred_check_branch
          %737 = sbr.rel (%p735) target = $region68
        $region67: #{dino_vit_forward.1} parent=47 // pred_region
          %p738 = scmp.lt.s32.totalorder %s39, 1
          %s739 = scalar_select %p738, %s39, 1
          %s740 = smul.addr %s739, 16
          %s741 = smul.addr %s740, 4
          %s742 = scalar_lea.vmem %s8, %s741
        $region68: #{dino_vit_forward.1} parent=47 // pred_fallthru
          _
        // Predicated region
        $region69: #{dino_vit_forward.1} parent=47 // pred_check
          %p743 = pneg %p282
        $region70: #{dino_vit_forward.1} parent=47 // pred_check_branch
          %745 = sbr.rel (%p743) target = $region72
        $region71: #{dino_vit_forward.1} parent=47 // pred_region
          %p746 = scmp.lt.s32.totalorder %s39, 1
          %s747 = scalar_select %p746, %s39, 1
          %s748 = smul.addr %s747, 2
          %s749 = scalar_lea.vmem %s9, %s748
        $region72: #{dino_vit_forward.1} parent=47 // pred_fallthru
          _
        // Predicated region
        $region73: #{dino_vit_forward.1} parent=47 // pred_check
          %p750 = pneg %p308
        $region74: #{dino_vit_forward.1} parent=47 // pred_check_branch
          %752 = sbr.rel (%p750) target = $region76
        $region75: #{dino_vit_forward.1} parent=47 // pred_region
          %p753 = scmp.lt.s32.totalorder %s39, 1
          %s754 = scalar_select %p753, %s39, 1
          %s755 = smul.addr %s754, 16
          %s756 = smul.addr %s755, 4
          %s757 = scalar_lea.vmem %s10, %s756
        $region76: #{dino_vit_forward.1} parent=47 // pred_fallthru
          _
        // Predicated region
        $region77: #{dino_vit_forward.1} parent=47 // pred_check
          %p758 = pneg %p334
        $region78: #{dino_vit_forward.1} parent=47 // pred_check_branch
          %760 = sbr.rel (%p758) target = $region80
        $region79: #{dino_vit_forward.1} parent=47 // pred_region
          %p761 = scmp.lt.s32.totalorder %s39, 1
          %s762 = scalar_select %p761, %s39, 1
          %s763 = smul.addr %s762, 2
          %s764 = scalar_lea.vmem %s11, %s763
        $region80: #{dino_vit_forward.1} parent=47 // pred_fallthru
          _
        // Predicated region
        $region81: #{dino_vit_forward.1} parent=47 // pred_check
          %p765 = pneg %p360
        $region82: #{dino_vit_forward.1} parent=47 // pred_check_branch
          %767 = sbr.rel (%p765) target = $region84
        $region83: #{dino_vit_forward.1} parent=47 // pred_region
          %p768 = scmp.lt.s32.totalorder %s39, 1
          %s769 = scalar_select %p768, %s39, 1
          %s770 = smul.addr %s769, 8
          %s771 = smul.addr %s770, 4
          %s772 = scalar_lea.vmem %s12, %s771
        $region84: #{dino_vit_forward.1} parent=47 // pred_fallthru
          _
        // Predicated region
        $region85: #{dino_vit_forward.1} parent=47 // pred_check
          %p773 = pneg %p386
        $region86: #{dino_vit_forward.1} parent=47 // pred_check_branch
          %775 = sbr.rel (%p773) target = $region88
        $region87: #{dino_vit_forward.1} parent=47 // pred_region
          %p776 = scmp.lt.s32.totalorder %s39, 1
          %s777 = scalar_select %p776, %s39, 1
          %s778 = scalar_lea.vmem %s13, %s777
        $region88: #{dino_vit_forward.1} parent=47 // pred_fallthru
          _
        // Predicated region
        $region89: #{dino_vit_forward.1} parent=47 // pred_check
          %p779 = pneg %p412
        $region90: #{dino_vit_forward.1} parent=47 // pred_check_branch
          %781 = sbr.rel (%p779) target = $region92
        $region91: #{dino_vit_forward.1} parent=47 // pred_region
          %p782 = scmp.lt.s32.totalorder %s39, 1
          %s783 = scalar_select %p782, %s39, 1
          %s784 = scalar_lea.vmem %s14, %s783
        $region92: #{dino_vit_forward.1} parent=47 // pred_fallthru
          _
        // Predicated region
        $region93: #{dino_vit_forward.1} parent=47 // pred_check
          %p785 = pneg %p438
        $region94: #{dino_vit_forward.1} parent=47 // pred_check_branch
          %787 = sbr.rel (%p785) target = $region96
        $region95: #{dino_vit_forward.1} parent=47 // pred_region
          %p788 = scmp.lt.s32.totalorder %s39, 1
          %s789 = scalar_select %p788, %s39, 1
          %s790 = scalar_lea.vmem %s15, %s789
        $region96: #{dino_vit_forward.1} parent=47 // pred_fallthru
          _
        // Predicated region
        $region97: #{dino_vit_forward.1} parent=47 // pred_check
          %p791 = pneg %p464
        $region98: #{dino_vit_forward.1} parent=47 // pred_check_branch
          %793 = sbr.rel (%p791) target = $region100
        $region99: #{dino_vit_forward.1} parent=47 // pred_region
          %p794 = scmp.lt.s32.totalorder %s39, 1
          %s795 = scalar_select %p794, %s39, 1
          %s796 = smul.addr %s795, 16
          %s797 = smul.addr %s796, 4
          %s798 = scalar_lea.vmem %s16, %s797
        $region100: #{dino_vit_forward.1} parent=47 // pred_fallthru
          _
        // Predicated region
        $region101: #{dino_vit_forward.1} parent=47 // pred_check
          %p799 = pneg %p490
        $region102: #{dino_vit_forward.1} parent=47 // pred_check_branch
          %801 = sbr.rel (%p799) target = $region104
        $region103: #{dino_vit_forward.1} parent=47 // pred_region
          %p802 = scmp.lt.s32.totalorder %s39, 1
          %s803 = scalar_select %p802, %s39, 1
          %s804 = smul.addr %s803, 2
          %s805 = scalar_lea.vmem %s17, %s804
        $region104: #{dino_vit_forward.1} parent=47 // pred_fallthru
          _
        // Predicated region
        $region105: #{dino_vit_forward.1} parent=47 // pred_check
          %p806 = pneg %p516
        $region106: #{dino_vit_forward.1} parent=47 // pred_check_branch
          %808 = sbr.rel (%p806) target = $region108
        $region107: #{dino_vit_forward.1} parent=47 // pred_region
          %p809 = scmp.lt.s32.totalorder %s39, 1
          %s810 = scalar_select %p809, %s39, 1
          %s811 = smul.addr %s810, 32
          %s812 = smul.addr %s811, 4
          %s813 = scalar_lea.vmem %s18, %s812
        $region108: #{dino_vit_forward.1} parent=47 // pred_fallthru
          _
        // Predicated region
        $region109: #{dino_vit_forward.1} parent=47 // pred_check
          %p814 = pneg %p542
        $region110: #{dino_vit_forward.1} parent=47 // pred_check_branch
          %816 = sbr.rel (%p814) target = $region112
        $region111: #{dino_vit_forward.1} parent=47 // pred_region
          %p817 = scmp.lt.s32.totalorder %s39, 1
          %s818 = scalar_select %p817, %s39, 1
          %s819 = scalar_lea.vmem %s19, %s818
        $region112: #{dino_vit_forward.1} parent=47 // pred_fallthru
          _
      $region48: #{dino_vit_forward.1} parent=5 // pred_fallthru
        _
      %p820 = scmp.le.s32.totalorder 1, %s31
      %p821 = scmp.lt.s32.totalorder %s31, 3
      %p822 = pnand %p820, %p821
      %p823 = pneg %p822
      // Predicated region
      $region113: #{dino_vit_forward.1} parent=5 // pred_check
        _
      $region114: #{dino_vit_forward.1} parent=5 // pred_check_branch
        %825 = sbr.rel (%p822) target = $region116
      $region115: #{dino_vit_forward.1} parent=5 // pred_region
        %s826 = ssub.s32 %s31, 1
        %s827 = smul.u32 2, %s40
        %p828 = scmp.lt.s32.totalorder %s827, 1
        %s829 = scalar_select %p828, %s827, 1
        %s830 = smul.addr %s829, 6
        %s831 = smul.addr %s830, 4
        %s832 = scalar_lea.vmem %s0, %s831
        %p833 = pneg %p69
        %p834 = pneg %p66
        %p835 = pneg %p90
        %p836 = pneg %p87
        %p837 = pneg %p111
        %p838 = pneg %p108
        %p839 = pneg %p132
        %p840 = pneg %p129
        %p841 = scmp.lt.s32.totalorder %s41, 1
        %s842 = scalar_select %p841, %s41, 1
        %s843 = scalar_lea.vmem %s4, %s842
        %p844 = pneg %p158
        %p845 = pneg %p155
        %p846 = scmp.lt.s32.totalorder %s41, 1
        %s847 = scalar_select %p846, %s41, 1
        %s848 = scalar_lea.vmem %s5, %s847
        %p849 = pneg %p184
        %p850 = pneg %p181
        %p851 = scmp.lt.s32.totalorder %s41, 1
        %s852 = scalar_select %p851, %s41, 1
        %s853 = smul.addr %s852, 16
        %s854 = smul.addr %s853, 4
        %s855 = scalar_lea.vmem %s6, %s854
        %p856 = pneg %p210
        %p857 = pneg %p207
        %p858 = scmp.lt.s32.totalorder %s41, 1
        %s859 = scalar_select %p858, %s41, 1
        %s860 = smul.addr %s859, 2
        %s861 = scalar_lea.vmem %s7, %s860
        %p862 = pneg %p236
        %p863 = pneg %p233
        %p864 = scmp.lt.s32.totalorder %s41, 1
        %s865 = scalar_select %p864, %s41, 1
        %s866 = smul.addr %s865, 16
        %s867 = smul.addr %s866, 4
        %s868 = scalar_lea.vmem %s8, %s867
        %p869 = pneg %p262
        %p870 = pneg %p259
        %p871 = scmp.lt.s32.totalorder %s41, 1
        %s872 = scalar_select %p871, %s41, 1
        %s873 = smul.addr %s872, 2
        %s874 = scalar_lea.vmem %s9, %s873
        %p875 = pneg %p288
        %p876 = pneg %p285
        %p877 = scmp.lt.s32.totalorder %s41, 1
        %s878 = scalar_select %p877, %s41, 1
        %s879 = smul.addr %s878, 16
        %s880 = smul.addr %s879, 4
        %s881 = scalar_lea.vmem %s10, %s880
        %p882 = pneg %p314
        %p883 = pneg %p311
        %p884 = scmp.lt.s32.totalorder %s41, 1
        %s885 = scalar_select %p884, %s41, 1
        %s886 = smul.addr %s885, 2
        %s887 = scalar_lea.vmem %s11, %s886
        %p888 = pneg %p340
        %p889 = pneg %p337
        %p890 = scmp.lt.s32.totalorder %s41, 1
        %s891 = scalar_select %p890, %s41, 1
        %s892 = smul.addr %s891, 8
        %s893 = smul.addr %s892, 4
        %s894 = scalar_lea.vmem %s12, %s893
        %p895 = pneg %p366
        %p896 = pneg %p363
        %p897 = scmp.lt.s32.totalorder %s41, 1
        %s898 = scalar_select %p897, %s41, 1
        %s899 = scalar_lea.vmem %s13, %s898
        %p900 = pneg %p392
        %p901 = pneg %p389
        %p902 = scmp.lt.s32.totalorder %s41, 1
        %s903 = scalar_select %p902, %s41, 1
        %s904 = scalar_lea.vmem %s14, %s903
        %p905 = pneg %p418
        %p906 = pneg %p415
        %p907 = scmp.lt.s32.totalorder %s41, 1
        %s908 = scalar_select %p907, %s41, 1
        %s909 = scalar_lea.vmem %s15, %s908
        %p910 = pneg %p444
        %p911 = pneg %p441
        %p912 = scmp.lt.s32.totalorder %s41, 1
        %s913 = scalar_select %p912, %s41, 1
        %s914 = smul.addr %s913, 16
        %s915 = smul.addr %s914, 4
        %s916 = scalar_lea.vmem %s16, %s915
        %p917 = pneg %p470
        %p918 = pneg %p467
        %p919 = scmp.lt.s32.totalorder %s41, 1
        %s920 = scalar_select %p919, %s41, 1
        %s921 = smul.addr %s920, 2
        %s922 = scalar_lea.vmem %s17, %s921
        %p923 = pneg %p496
        %p924 = pneg %p493
        %p925 = scmp.lt.s32.totalorder %s41, 1
        %s926 = scalar_select %p925, %s41, 1
        %s927 = smul.addr %s926, 32
        %s928 = smul.addr %s927, 4
        %s929 = scalar_lea.vmem %s18, %s928
        %p930 = pneg %p522
        %p931 = pneg %p519
        %p932 = scmp.lt.s32.totalorder %s41, 1
        %s933 = scalar_select %p932, %s41, 1
        %s934 = scalar_lea.vmem %s19, %s933
        %p935 = pneg %p548
        %p936 = pneg %p545
        %p937 = pneg %p569
        %p938 = pneg %p566
        %p939 = pneg %p590
        %p940 = pneg %p587
        %p941 = pneg %p611
        %p942 = pneg %p608
        %p943 = pneg %p632
        %p944 = pneg %p629
        %p945 = pneg %p658
        %p946 = pneg %p655
        %s947 = smul.u32 2, %s40
        %p948 = scmp.lt.s32.totalorder %s947, 1
        %s949 = scalar_select %p948, %s947, 1
        %s950 = smul.addr %s949, 6
        %s951 = smul.addr %s950, 4
        %s952 = scalar_lea.vmem %s0, %s951
        %s953 = smul.u32 2, %s40
        %p954 = scmp.lt.s32.totalorder %s41, 1
        %s955 = scalar_select %p954, %s41, 1
        %s956 = scalar_lea.vmem %s4, %s955
        %p957 = scmp.lt.s32.totalorder %s41, 1
        %s958 = scalar_select %p957, %s41, 1
        %s959 = scalar_lea.vmem %s5, %s958
        %p960 = scmp.lt.s32.totalorder %s41, 1
        %s961 = scalar_select %p960, %s41, 1
        %s962 = smul.addr %s961, 16
        %s963 = smul.addr %s962, 4
        %s964 = scalar_lea.vmem %s6, %s963
        %p965 = scmp.lt.s32.totalorder %s41, 1
        %s966 = scalar_select %p965, %s41, 1
        %s967 = smul.addr %s966, 2
        %s968 = scalar_lea.vmem %s7, %s967
        %p969 = scmp.lt.s32.totalorder %s41, 1
        %s970 = scalar_select %p969, %s41, 1
        %s971 = smul.addr %s970, 16
        %s972 = smul.addr %s971, 4
        %s973 = scalar_lea.vmem %s8, %s972
        %p974 = scmp.lt.s32.totalorder %s41, 1
        %s975 = scalar_select %p974, %s41, 1
        %s976 = smul.addr %s975, 2
        %s977 = scalar_lea.vmem %s9, %s976
        %p978 = scmp.lt.s32.totalorder %s41, 1
        %s979 = scalar_select %p978, %s41, 1
        %s980 = smul.addr %s979, 16
        %s981 = smul.addr %s980, 4
        %s982 = scalar_lea.vmem %s10, %s981
        %p983 = scmp.lt.s32.totalorder %s41, 1
        %s984 = scalar_select %p983, %s41, 1
        %s985 = smul.addr %s984, 2
        %s986 = scalar_lea.vmem %s11, %s985
        %p987 = scmp.lt.s32.totalorder %s41, 1
        %s988 = scalar_select %p987, %s41, 1
        %s989 = smul.addr %s988, 8
        %s990 = smul.addr %s989, 4
        %s991 = scalar_lea.vmem %s12, %s990
        %p992 = scmp.lt.s32.totalorder %s41, 1
        %s993 = scalar_select %p992, %s41, 1
        %s994 = scalar_lea.vmem %s13, %s993
        %p995 = scmp.lt.s32.totalorder %s41, 1
        %s996 = scalar_select %p995, %s41, 1
        %s997 = scalar_lea.vmem %s14, %s996
        %p998 = scmp.lt.s32.totalorder %s41, 1
        %s999 = scalar_select %p998, %s41, 1
        %s1000 = scalar_lea.vmem %s15, %s999
        %p1001 = scmp.lt.s32.totalorder %s41, 1
        %s1002 = scalar_select %p1001, %s41, 1
        %s1003 = smul.addr %s1002, 16
        %s1004 = smul.addr %s1003, 4
        %s1005 = scalar_lea.vmem %s16, %s1004
        %p1006 = scmp.lt.s32.totalorder %s41, 1
        %s1007 = scalar_select %p1006, %s41, 1
        %s1008 = smul.addr %s1007, 2
        %s1009 = scalar_lea.vmem %s17, %s1008
        %p1010 = scmp.lt.s32.totalorder %s41, 1
        %s1011 = scalar_select %p1010, %s41, 1
        %s1012 = smul.addr %s1011, 32
        %s1013 = smul.addr %s1012, 4
        %s1014 = scalar_lea.vmem %s18, %s1013
        %p1015 = scmp.lt.s32.totalorder %s41, 1
        %s1016 = scalar_select %p1015, %s41, 1
        %s1017 = scalar_lea.vmem %s19, %s1016
        %p1019 = scmp.eq.s32.totalorder %s41, 0
        // Predicated region
        $region117: #{dino_vit_forward.1} parent=115 // pred_check
          %p1020 = pneg %p1019
        $region118: #{dino_vit_forward.1} parent=115 // pred_check_branch
          %1022 = sbr.rel (%p1020) target = $region120
        $region119: #{dino_vit_forward.1} parent=115 // pred_region
          %v1023 = vld [vmem:[%s952] sm:$0xff]
          %v1024 = vld [vmem:[%s952 + $0x8] sm:$0xff]
          %v1025 = vld [vmem:[%s952 + $0x10] sm:$0xff]
          %v1026 = vld [vmem:[%s952 + $0x18] sm:$0xff]
          %v1027 = vld [vmem:[%s952 + $0x20] sm:$0xff]
          %v1028 = vld [vmem:[%s952 + $0x28] sm:$0xff]
          %v1029 = vld [vmem:[%s2] sm:$0xf]
          %v1030 = vld [vmem:[%s2 + $0x4] sm:$0xf]
          %v1031 = vld [vmem:[%s2 + $0x8] sm:$0xf]
          %v1032 = vld [vmem:[%s2 + $0xc] sm:$0xf]
          %v1033 = vld [vmem:[%s2 + $0x10] sm:$0xf]
          %v1034 = vld [vmem:[%s2 + $0x14] sm:$0xf]
          %v1035 = vld [vmem:[%s2 + $0x18] sm:$0xf]
          %v1036 = vld [vmem:[%s2 + $0x1c] sm:$0xf]
          %v1037 = vld [vmem:[%s2 + $0x20] sm:$0xf]
          %v1038 = vld [vmem:[%s2 + $0x24] sm:$0xf]
          %v1039 = vld [vmem:[%s2 + $0x28] sm:$0xf]
          %v1040 = vld [vmem:[%s2 + $0x2c] sm:$0xf]
          %v1041 = vld [vmem:[%s2 + $0x30] sm:$0xf]
          %v1042 = vld [vmem:[%s2 + $0x34] sm:$0xf]
          %v1043 = vld [vmem:[%s2 + $0x38] sm:$0xf]
          %v1044 = vld [vmem:[%s2 + $0x3c] sm:$0xf]
          %v1045 = vld [vmem:[%s2 + $0x40] sm:$0xf]
          %v1046 = vld [vmem:[%s2 + $0x44] sm:$0xf]
          %v1047 = vld [vmem:[%s2 + $0x48] sm:$0xf]
          %v1048 = vld [vmem:[%s2 + $0x4c] sm:$0xf]
          %v1049 = vld [vmem:[%s2 + $0x50] sm:$0xf]
          %v1050 = vld [vmem:[%s2 + $0x54] sm:$0xf]
          %v1051 = vld [vmem:[%s2 + $0x58] sm:$0xf]
          %v1052 = vld [vmem:[%s2 + $0x5c] sm:$0xf]
          %v1053 = vld [vmem:[%s2 + $0x60] sm:$0xf]
          %v1054 = vld [vmem:[%s2 + $0x64] sm:$0xf]
          %v1055 = vld [vmem:[%s2 + $0x68] sm:$0xf]
          %v1056 = vld [vmem:[%s2 + $0x6c] sm:$0xf]
          %v1057 = vld [vmem:[%s2 + $0x70] sm:$0xf]
          %v1058 = vld [vmem:[%s2 + $0x74] sm:$0xf]
          %v1059 = vld [vmem:[%s2 + $0x78] sm:$0xf]
          %v1060 = vld [vmem:[%s2 + $0x7c] sm:$0xf]
          %v1061 = vld [vmem:[%s2 + $0x80] sm:$0xf]
          %v1062 = vld [vmem:[%s2 + $0x84] sm:$0xf]
          %v1063 = vld [vmem:[%s2 + $0x88] sm:$0xf]
          %v1064 = vld [vmem:[%s2 + $0x8c] sm:$0xf]
          %v1065 = vld [vmem:[%s2 + $0x90] sm:$0xf]
          %v1066 = vld [vmem:[%s2 + $0x94] sm:$0xf]
          %v1067 = vld [vmem:[%s2 + $0x98] sm:$0xf]
          %v1068 = vld [vmem:[%s2 + $0x9c] sm:$0xf]
          %v1069 = vld [vmem:[%s2 + $0xa0] sm:$0xf]
          %v1070 = vld [vmem:[%s2 + $0xa4] sm:$0xf]
          %v1071 = vld [vmem:[%s2 + $0xa8] sm:$0xf]
          %v1072 = vld [vmem:[%s2 + $0xac] sm:$0xf]
          %v1073 = vld [vmem:[%s2 + $0xb0] sm:$0xf]
          %v1074 = vld [vmem:[%s2 + $0xb4] sm:$0xf]
          %v1075 = vld [vmem:[%s2 + $0xb8] sm:$0xf]
          %v1076 = vld [vmem:[%s2 + $0xbc] sm:$0xf]
          %v1077 = vld [vmem:[%s2 + $0xc0] sm:$0xf]
          %v1078 = vld [vmem:[%s2 + $0xc4] sm:$0xf]
          %v1079 = vld [vmem:[%s2 + $0xc8] sm:$0xf]
          %v1080 = vld [vmem:[%s2 + $0xcc] sm:$0xf]
          %v1081 = vld [vmem:[%s2 + $0xd0] sm:$0xf]
          %v1082 = vld [vmem:[%s2 + $0xd4] sm:$0xf]
          %v1083 = vld [vmem:[%s2 + $0xd8] sm:$0xf]
          %v1084 = vld [vmem:[%s2 + $0xdc] sm:$0xf]
          %v1085 = vld [vmem:[%s2 + $0xe0] sm:$0xf]
          %v1086 = vld [vmem:[%s2 + $0xe4] sm:$0xf]
          %v1087 = vld [vmem:[%s2 + $0xe8] sm:$0xf]
          %v1088 = vld [vmem:[%s2 + $0xec] sm:$0xf]
          %v1089 = vld [vmem:[%s2 + $0xf0] sm:$0xf]
          %v1090 = vld [vmem:[%s2 + $0xf4] sm:$0xf]
          %v1091 = vld [vmem:[%s2 + $0xf8] sm:$0xf]
          %v1092 = vld [vmem:[%s2 + $0xfc] sm:$0xf]
          %v1093 = vld [vmem:[%s2 + $0x100] sm:$0xf]
          %v1094 = vld [vmem:[%s2 + $0x104] sm:$0xf]
          %v1095 = vld [vmem:[%s2 + $0x108] sm:$0xf]
          %v1096 = vld [vmem:[%s2 + $0x10c] sm:$0xf]
          %v1097 = vld [vmem:[%s2 + $0x110] sm:$0xf]
          %v1098 = vld [vmem:[%s2 + $0x114] sm:$0xf]
          %v1099 = vld [vmem:[%s2 + $0x118] sm:$0xf]
          %v1100 = vld [vmem:[%s2 + $0x11c] sm:$0xf]
          %v1101 = vld [vmem:[%s2 + $0x120] sm:$0xf]
          %v1102 = vld [vmem:[%s2 + $0x124] sm:$0xf]
          %v1103 = vld [vmem:[%s2 + $0x128] sm:$0xf]
          %v1104 = vld [vmem:[%s2 + $0x12c] sm:$0xf]
          %v1105 = vld [vmem:[%s2 + $0x130] sm:$0xf]
          %v1106 = vld [vmem:[%s2 + $0x134] sm:$0xf]
          %v1107 = vld [vmem:[%s2 + $0x138] sm:$0xf]
          %v1108 = vld [vmem:[%s2 + $0x13c] sm:$0xf]
          %v1109 = vld [vmem:[%s2 + $0x140] sm:$0xf]
          %v1110 = vld [vmem:[%s2 + $0x144] sm:$0xf]
          %v1111 = vld [vmem:[%s2 + $0x148] sm:$0xf]
          %v1112 = vld [vmem:[%s2 + $0x14c] sm:$0xf]
          %v1113 = vld [vmem:[%s2 + $0x150] sm:$0xf]
          %v1114 = vld [vmem:[%s2 + $0x154] sm:$0xf]
          %v1115 = vld [vmem:[%s2 + $0x158] sm:$0xf]
          %v1116 = vld [vmem:[%s2 + $0x15c] sm:$0xf]
          %v1117 = vld [vmem:[%s2 + $0x160] sm:$0xf]
          %v1118 = vld [vmem:[%s2 + $0x164] sm:$0xf]
          %v1119 = vld [vmem:[%s2 + $0x168] sm:$0xf]
          %v1120 = vld [vmem:[%s2 + $0x16c] sm:$0xf]
          %v1121 = vld [vmem:[%s2 + $0x170] sm:$0xf]
          %v1122 = vld [vmem:[%s2 + $0x174] sm:$0xf]
          %v1123 = vld [vmem:[%s2 + $0x178] sm:$0xf]
          %v1124 = vld [vmem:[%s2 + $0x17c] sm:$0xf]
          %v1125 = vld [vmem:[%s1] sm:$0xff]
          %v1126 = vld [vmem:[%s1 + $0x8] sm:$0xff]
          %v1133 = vunpack.c.l.b16 %v1023
          %v1134 = vunpack.c.h.b16 %v1023
          %v1135 = vunpack.c.l.b16 %v1024
          %v1136 = vunpack.c.h.b16 %v1024
          %v1137 = vunpack.c.l.b16 %v1025
          %v1138 = vunpack.c.h.b16 %v1025
          %v1139 = vunpack.c.l.b16 %v1026
          %v1140 = vunpack.c.h.b16 %v1026
          %v1141 = vunpack.c.l.b16 %v1027
          %v1142 = vunpack.c.h.b16 %v1027
          %v1143 = vunpack.c.l.b16 %v1028
          %v1144 = vunpack.c.h.b16 %v1028
          %v1145 = vpack.c.b16 %v1139, %v1133
          %v1146 = vpack.c.b16 %v1140, %v1134
          %v1147 = vpack.c.b16 %v1141, %v1135
          %v1148 = vpack.c.b16 %v1142, %v1136
          %v1149 = vpack.c.b16 %v1143, %v1137
          %v1150 = vpack.c.b16 %v1144, %v1138
          %v1253 = vunpack.c.l.b16 %v1029
          %v1254 = vunpack.c.l.b16 %v1030
          %v1255 = vunpack.c.l.b16 %v1031
          %v1256 = vunpack.c.l.b16 %v1032
          %v1257 = vunpack.c.l.b16 %v1033
          %v1258 = vunpack.c.l.b16 %v1034
          %v1259 = vunpack.c.l.b16 %v1035
          %v1260 = vunpack.c.l.b16 %v1036
          %v1261 = vunpack.c.l.b16 %v1037
          %v1262 = vunpack.c.l.b16 %v1038
          %v1263 = vunpack.c.l.b16 %v1039
          %v1264 = vunpack.c.l.b16 %v1040
          %v1265 = vunpack.c.l.b16 %v1041
          %v1266 = vunpack.c.l.b16 %v1042
          %v1267 = vunpack.c.l.b16 %v1043
          %v1268 = vunpack.c.l.b16 %v1044
          %v1269 = vunpack.c.l.b16 %v1045
          %v1270 = vunpack.c.l.b16 %v1046
          %v1271 = vunpack.c.l.b16 %v1047
          %v1272 = vunpack.c.l.b16 %v1048
          %v1273 = vunpack.c.l.b16 %v1049
          %v1274 = vunpack.c.l.b16 %v1050
          %v1275 = vunpack.c.l.b16 %v1051
          %v1276 = vunpack.c.l.b16 %v1052
          %v1277 = vunpack.c.l.b16 %v1053
          %v1278 = vunpack.c.l.b16 %v1054
          %v1279 = vunpack.c.l.b16 %v1055
          %v1280 = vunpack.c.l.b16 %v1056
          %v1281 = vunpack.c.l.b16 %v1057
          %v1282 = vunpack.c.l.b16 %v1058
          %v1283 = vunpack.c.l.b16 %v1059
          %v1284 = vunpack.c.l.b16 %v1060
          %v1285 = vunpack.c.l.b16 %v1061
          %v1286 = vunpack.c.l.b16 %v1062
          %v1287 = vunpack.c.l.b16 %v1063
          %v1288 = vunpack.c.l.b16 %v1064
          %v1289 = vunpack.c.l.b16 %v1065
          %v1290 = vunpack.c.l.b16 %v1066
          %v1291 = vunpack.c.l.b16 %v1067
          %v1292 = vunpack.c.l.b16 %v1068
          %v1293 = vunpack.c.l.b16 %v1069
          %v1294 = vunpack.c.l.b16 %v1070
          %v1295 = vunpack.c.l.b16 %v1071
          %v1296 = vunpack.c.l.b16 %v1072
          %v1297 = vunpack.c.l.b16 %v1073
          %v1298 = vunpack.c.l.b16 %v1074
          %v1299 = vunpack.c.l.b16 %v1075
          %v1300 = vunpack.c.l.b16 %v1076
          %v1301 = vunpack.c.l.b16 %v1077
          %v1302 = vunpack.c.l.b16 %v1078
          %v1303 = vunpack.c.l.b16 %v1079
          %v1304 = vunpack.c.l.b16 %v1080
          %v1305 = vunpack.c.l.b16 %v1081
          %v1306 = vunpack.c.l.b16 %v1082
          %v1307 = vunpack.c.l.b16 %v1083
          %v1308 = vunpack.c.l.b16 %v1084
          %v1309 = vunpack.c.l.b16 %v1085
          %v1310 = vunpack.c.l.b16 %v1086
          %v1311 = vunpack.c.l.b16 %v1087
          %v1312 = vunpack.c.l.b16 %v1088
          %v1313 = vunpack.c.l.b16 %v1089
          %v1314 = vunpack.c.l.b16 %v1090
          %v1315 = vunpack.c.l.b16 %v1091
          %v1316 = vunpack.c.l.b16 %v1092
          %v1317 = vunpack.c.l.b16 %v1093
          %v1318 = vunpack.c.l.b16 %v1094
          %v1319 = vunpack.c.l.b16 %v1095
          %v1320 = vunpack.c.l.b16 %v1096
          %v1321 = vunpack.c.l.b16 %v1097
          %v1322 = vunpack.c.l.b16 %v1098
          %v1323 = vunpack.c.l.b16 %v1099
          %v1324 = vunpack.c.l.b16 %v1100
          %v1325 = vunpack.c.l.b16 %v1101
          %v1326 = vunpack.c.l.b16 %v1102
          %v1327 = vunpack.c.l.b16 %v1103
          %v1328 = vunpack.c.l.b16 %v1104
          %v1329 = vunpack.c.l.b16 %v1105
          %v1330 = vunpack.c.l.b16 %v1106
          %v1331 = vunpack.c.l.b16 %v1107
          %v1332 = vunpack.c.l.b16 %v1108
          %v1333 = vunpack.c.l.b16 %v1109
          %v1334 = vunpack.c.l.b16 %v1110
          %v1335 = vunpack.c.l.b16 %v1111
          %v1336 = vunpack.c.l.b16 %v1112
          %v1337 = vunpack.c.l.b16 %v1113
          %v1338 = vunpack.c.l.b16 %v1114
          %v1339 = vunpack.c.l.b16 %v1115
          %v1340 = vunpack.c.l.b16 %v1116
          %v1341 = vunpack.c.l.b16 %v1117
          %v1342 = vunpack.c.l.b16 %v1118
          %v1343 = vunpack.c.l.b16 %v1119
          %v1344 = vunpack.c.l.b16 %v1120
          %v1345 = vunpack.c.l.b16 %v1121
          %v1346 = vunpack.c.l.b16 %v1122
          %v1347 = vunpack.c.l.b16 %v1123
          %v1348 = vunpack.c.l.b16 %v1124
          %v1349 = vpack.c.b16 %v1254, %v1253
          %v1350 = vpack.c.b16 %v1256, %v1255
          %v1351 = vpack.c.b16 %v1258, %v1257
          %v1352 = vpack.c.b16 %v1260, %v1259
          %v1353 = vpack.c.b16 %v1262, %v1261
          %v1354 = vpack.c.b16 %v1264, %v1263
          %v1355 = vpack.c.b16 %v1266, %v1265
          %v1356 = vpack.c.b16 %v1268, %v1267
          %v1357 = vpack.c.b16 %v1270, %v1269
          %v1358 = vpack.c.b16 %v1272, %v1271
          %v1359 = vpack.c.b16 %v1274, %v1273
          %v1360 = vpack.c.b16 %v1276, %v1275
          %v1361 = vpack.c.b16 %v1278, %v1277
          %v1362 = vpack.c.b16 %v1280, %v1279
          %v1363 = vpack.c.b16 %v1282, %v1281
          %v1364 = vpack.c.b16 %v1284, %v1283
          %v1365 = vpack.c.b16 %v1286, %v1285
          %v1366 = vpack.c.b16 %v1288, %v1287
          %v1367 = vpack.c.b16 %v1290, %v1289
          %v1368 = vpack.c.b16 %v1292, %v1291
          %v1369 = vpack.c.b16 %v1294, %v1293
          %v1370 = vpack.c.b16 %v1296, %v1295
          %v1371 = vpack.c.b16 %v1298, %v1297
          %v1372 = vpack.c.b16 %v1300, %v1299
          %v1373 = vpack.c.b16 %v1302, %v1301
          %v1374 = vpack.c.b16 %v1304, %v1303
          %v1375 = vpack.c.b16 %v1306, %v1305
          %v1376 = vpack.c.b16 %v1308, %v1307
          %v1377 = vpack.c.b16 %v1310, %v1309
          %v1378 = vpack.c.b16 %v1312, %v1311
          %v1379 = vpack.c.b16 %v1314, %v1313
          %v1380 = vpack.c.b16 %v1316, %v1315
          %v1381 = vpack.c.b16 %v1318, %v1317
          %v1382 = vpack.c.b16 %v1320, %v1319
          %v1383 = vpack.c.b16 %v1322, %v1321
          %v1384 = vpack.c.b16 %v1324, %v1323
          %v1385 = vpack.c.b16 %v1326, %v1325
          %v1386 = vpack.c.b16 %v1328, %v1327
          %v1387 = vpack.c.b16 %v1330, %v1329
          %v1388 = vpack.c.b16 %v1332, %v1331
          %v1389 = vpack.c.b16 %v1334, %v1333
          %v1390 = vpack.c.b16 %v1336, %v1335
          %v1391 = vpack.c.b16 %v1338, %v1337
          %v1392 = vpack.c.b16 %v1340, %v1339
          %v1393 = vpack.c.b16 %v1342, %v1341
          %v1394 = vpack.c.b16 %v1344, %v1343
          %v1395 = vpack.c.b16 %v1346, %v1345
          %v1396 = vpack.c.b16 %v1348, %v1347
          %1445 = vmatprep.subr.bf16.mxu0 0
          %1446 = vmatpush1.bf16.msra.mxu0 %v1356
          %1447 = vmatprep.subr.bf16.mxu0 0
          %1448 = vmatpush1.bf16.msra.mxu0 %v1355
          %1449 = vmatprep.subr.bf16.mxu0 0
          %1450 = vmatpush1.bf16.msra.mxu0 %v1354
          %1451 = vmatprep.subr.bf16.mxu0 0
          %1452 = vmatpush1.bf16.msra.mxu0 %v1353
          %1453 = vmatprep.subr.bf16.mxu0 0
          %1454 = vmatpush1.bf16.msra.mxu0 %v1352
          %1455 = vmatprep.subr.bf16.mxu0 0
          %1456 = vmatpush1.bf16.msra.mxu0 %v1351
          %1457 = vmatprep.subr.bf16.mxu0 0
          %1458 = vmatpush1.bf16.msra.mxu0 %v1350
          %1459 = vmatprep.subr.bf16.mxu0 0
          %1460 = vmatpush1.bf16.msra.mxu0 %v1349
          %1461 = vmatprep.subr.bf16.mxu0 0
          %1462 = vmatpush2.bf16.msra.mxu0 %v1364
          %1463 = vmatprep.subr.bf16.mxu0 0
          %1464 = vmatpush2.bf16.msra.mxu0 %v1363
          %1465 = vmatprep.subr.bf16.mxu0 0
          %1466 = vmatpush2.bf16.msra.mxu0 %v1362
          %1467 = vmatprep.subr.bf16.mxu0 0
          %1468 = vmatpush2.bf16.msra.mxu0 %v1361
          %1469 = vmatprep.subr.bf16.mxu0 0
          %1470 = vmatpush2.bf16.msra.mxu0 %v1360
          %1471 = vmatprep.subr.bf16.mxu0 0
          %1472 = vmatpush2.bf16.msra.mxu0 %v1359
          %1473 = vmatprep.subr.bf16.mxu0 0
          %1474 = vmatpush2.bf16.msra.mxu0 %v1358
          %1475 = vmatprep.subr.bf16.mxu0 0
          %1476 = vmatpush2.bf16.msra.mxu0 %v1357
          %1477 = vmatprep.mubr.bf16.mxu0 %v1146
          %1478 = vmatmul.mubr.bf16.gmra.mxu0 %v1145
          %v1479 = vpop.f32.mrf.mxu0
          %v1480 = vadd.f32 %v1125, %v1479
          %v1481 = vpop.f32.mrf.mxu0
          %v1482 = vpop.f32.mrf.mxu0
          %v1483 = vadd.f32 %v1126, %v1482
          %v1484 = vpop.f32.mrf.mxu0
          %1485 = vdwg.mxu0
          %1486 = vmatprep.subr.bf16.mxu0 0
          %1487 = vmatpush1.bf16.msra.mxu0 %v1372
          %1488 = vmatprep.subr.bf16.mxu0 0
          %1489 = vmatpush1.bf16.msra.mxu0 %v1371
          %1490 = vmatprep.subr.bf16.mxu0 0
          %1491 = vmatpush1.bf16.msra.mxu0 %v1370
          %1492 = vmatprep.subr.bf16.mxu0 0
          %1493 = vmatpush1.bf16.msra.mxu0 %v1369
          %1494 = vmatprep.subr.bf16.mxu0 0
          %1495 = vmatpush1.bf16.msra.mxu0 %v1368
          %1496 = vmatprep.subr.bf16.mxu0 0
          %1497 = vmatpush1.bf16.msra.mxu0 %v1367
          %1498 = vmatprep.subr.bf16.mxu0 0
          %1499 = vmatpush1.bf16.msra.mxu0 %v1366
          %1500 = vmatprep.subr.bf16.mxu0 0
          %1501 = vmatpush1.bf16.msra.mxu0 %v1365
          %1502 = vmatprep.subr.bf16.mxu0 0
          %1503 = vmatpush2.bf16.msra.mxu0 %v1380
          %1504 = vmatprep.subr.bf16.mxu0 0
          %1505 = vmatpush2.bf16.msra.mxu0 %v1379
          %1506 = vmatprep.subr.bf16.mxu0 0
          %1507 = vmatpush2.bf16.msra.mxu0 %v1378
          %1508 = vmatprep.subr.bf16.mxu0 0
          %1509 = vmatpush2.bf16.msra.mxu0 %v1377
          %1510 = vmatprep.subr.bf16.mxu0 0
          %1511 = vmatpush2.bf16.msra.mxu0 %v1376
          %1512 = vmatprep.subr.bf16.mxu0 0
          %1513 = vmatpush2.bf16.msra.mxu0 %v1375
          %1514 = vmatprep.subr.bf16.mxu0 0
          %1515 = vmatpush2.bf16.msra.mxu0 %v1374
          %1516 = vmatprep.subr.bf16.mxu0 0
          %1517 = vmatpush2.bf16.msra.mxu0 %v1373
          %1518 = vmatprep.mubr.bf16.mxu0 %v1148
          %1519 = vmatmul.mubr.bf16.gmra.mxu0 %v1147
          %v1520 = vpop.f32.mrf.mxu0
          %v1521 = vadd.f32 %v1480, %v1520
          %v1522 = vpop.f32.mrf.mxu0
          %v1523 = vpop.f32.mrf.mxu0
          %v1524 = vadd.f32 %v1483, %v1523
          %v1525 = vpop.f32.mrf.mxu0
          %1526 = vdwg.mxu0
          %1527 = vmatprep.subr.bf16.mxu0 0
          %1528 = vmatpush1.bf16.msra.mxu0 %v1388
          %1529 = vmatprep.subr.bf16.mxu0 0
          %1530 = vmatpush1.bf16.msra.mxu0 %v1387
          %1531 = vmatprep.subr.bf16.mxu0 0
          %1532 = vmatpush1.bf16.msra.mxu0 %v1386
          %1533 = vmatprep.subr.bf16.mxu0 0
          %1534 = vmatpush1.bf16.msra.mxu0 %v1385
          %1535 = vmatprep.subr.bf16.mxu0 0
          %1536 = vmatpush1.bf16.msra.mxu0 %v1384
          %1537 = vmatprep.subr.bf16.mxu0 0
          %1538 = vmatpush1.bf16.msra.mxu0 %v1383
          %1539 = vmatprep.subr.bf16.mxu0 0
          %1540 = vmatpush1.bf16.msra.mxu0 %v1382
          %1541 = vmatprep.subr.bf16.mxu0 0
          %1542 = vmatpush1.bf16.msra.mxu0 %v1381
          %1543 = vmatprep.subr.bf16.mxu0 0
          %1544 = vmatpush2.bf16.msra.mxu0 %v1396
          %1545 = vmatprep.subr.bf16.mxu0 0
          %1546 = vmatpush2.bf16.msra.mxu0 %v1395
          %1547 = vmatprep.subr.bf16.mxu0 0
          %1548 = vmatpush2.bf16.msra.mxu0 %v1394
          %1549 = vmatprep.subr.bf16.mxu0 0
          %1550 = vmatpush2.bf16.msra.mxu0 %v1393
          %1551 = vmatprep.subr.bf16.mxu0 0
          %1552 = vmatpush2.bf16.msra.mxu0 %v1392
          %1553 = vmatprep.subr.bf16.mxu0 0
          %1554 = vmatpush2.bf16.msra.mxu0 %v1391
          %1555 = vmatprep.subr.bf16.mxu0 0
          %1556 = vmatpush2.bf16.msra.mxu0 %v1390
          %1557 = vmatprep.subr.bf16.mxu0 0
          %1558 = vmatpush2.bf16.msra.mxu0 %v1389
          %1559 = vmatprep.mubr.bf16.mxu0 %v1150
          %1560 = vmatmul.mubr.bf16.gmra.mxu0 %v1149
          %v1561 = vpop.f32.mrf.mxu0
          %v1562 = vadd.f32 %v1521, %v1561
          %v1563 = vpop.f32.mrf.mxu0
          %v1564 = vpop.f32.mrf.mxu0
          %v1565 = vadd.f32 %v1524, %v1564
          %v1566 = vpop.f32.mrf.mxu0
          %1567 = vdwg.mxu0
          %vm1568 = vcmask 523264
          %1569 = vst.msk [vmem:[#allocation2] sm:$0xff] %vm1568, %v1562
          %1570 = vst.msk [vmem:[#allocation2 + $0x8] sm:$0xff] %vm1568, %v1565
        $region120: #{dino_vit_forward.1} parent=115 // pred_fallthru
          _
        %v1571 = vld [vmem:[#allocation2] sm:$0xff]
        %v1572 = vld [vmem:[#allocation2 + $0x8] sm:$0xff]
        %v1573 = vld [vmem:[%s3] sm:$0x1]
        %v1574 = vld [vmem:[%s956] sm:$0x1]
        %v1575 = vld [vmem:[%s959] sm:$0x1]
        %vm1576 = vcmask 523264
        %v1577 = vsel %vm1576, %v1571, 0.0
        %1578 = vadd.xlane.f32.xlu0 %v1577
        %v1579 = vpop.xlane.xlu0 %1578
        %v1580 = vsel %vm1576, %v1572, 0.0
        %1581 = vadd.xlane.f32.xlu0 %v1580
        %v1582 = vpop.xlane.xlu0 %1581
        %v1583 = vrcp.pop 64.0
        %v1584 = vmul.f32 %v1579, %v1583
        %v1585 = vmul.f32 %v1582, %v1583
        %v1586 = vsub.f32 %v1571, %v1584
        %v1587 = vsub.f32 %v1572, %v1585
        %v1588 = vmul.f32 %v1586, %v1586
        %v1589 = vmul.f32 %v1587, %v1587
        %v1590 = vsel %vm1576, %v1588, 0.0
        %1591 = vadd.xlane.f32.xlu0 %v1590
        %v1592 = vpop.xlane.xlu0 %1591
        %v1593 = vsel %vm1576, %v1589, 0.0
        %1594 = vadd.xlane.f32.xlu0 %v1593
        %v1595 = vpop.xlane.xlu0 %1594
        %v1596 = vmul.f32 %v1592, %v1583
        %v1597 = vmul.f32 %v1595, %v1583
        %v1598 = vadd.f32 %v1596, 1e-06
        %v1599 = vadd.f32 %v1597, 1e-06
        %v1600 = vrsqrt.pop %v1598
        %v1601 = vrsqrt.pop %v1599
        %v1602 = vmul.f32 %v1586, %v1600
        %v1603 = vmul.f32 %v1587, %v1601
        %v1605 = vlaneseq
        %v1606 = vshrl.u32 %v1605, 7
        %v1607 = vsub.s32 0, %v1606
        %v1608 = vrot.slane %v1574, %v1607
        %v1610 = vmul.f32 %v1602, %v1608
        %v1611 = vmul.f32 %v1603, %v1608
        %v1613 = vlaneseq
        %v1614 = vshrl.u32 %v1613, 7
        %v1615 = vsub.s32 0, %v1614
        %v1616 = vrot.slane %v1575, %v1615
        %v1618 = vadd.f32 %v1610, %v1616
        %v1619 = vadd.f32 %v1611, %v1616
        %v1620 = vpack.c.bf16 %v1619, %v1618
        %v1621 = vld [vmem:[%s964] sm:$0xf]
        %v1622 = vld [vmem:[%s964 + $0x4] sm:$0xf]
        %v1623 = vld [vmem:[%s964 + $0x8] sm:$0xf]
        %v1624 = vld [vmem:[%s964 + $0xc] sm:$0xf]
        %v1625 = vld [vmem:[%s964 + $0x10] sm:$0xf]
        %v1626 = vld [vmem:[%s964 + $0x14] sm:$0xf]
        %v1627 = vld [vmem:[%s964 + $0x18] sm:$0xf]
        %v1628 = vld [vmem:[%s964 + $0x1c] sm:$0xf]
        %v1629 = vld [vmem:[%s968] sm:$0x1]
        %v1631 = vlaneseq
        %v1632 = vshrl.u32 %v1631, 7
        %v1633 = vsub.s32 0, %v1632
        %v1634 = vrot.slane %v1629, %v1633
        %v1644 = vunpack.c.l.b16 %v1621
        %v1645 = vunpack.c.l.b16 %v1622
        %v1646 = vunpack.c.l.b16 %v1623
        %v1647 = vunpack.c.l.b16 %v1624
        %v1648 = vunpack.c.l.b16 %v1625
        %v1649 = vunpack.c.l.b16 %v1626
        %v1650 = vunpack.c.l.b16 %v1627
        %v1651 = vunpack.c.l.b16 %v1628
        %v1652 = vpack.c.b16 %v1645, %v1644
        %v1653 = vpack.c.b16 %v1647, %v1646
        %v1654 = vpack.c.b16 %v1649, %v1648
        %v1655 = vpack.c.b16 %v1651, %v1650
        %v1661 = vsel %vm1576, %v1620, 0
        %1663 = vmatprep.subr.bf16.mxu0 0
        %1664 = vmatpush1.bf16.msra.mxu0 0
        %1665 = vmatprep.subr.bf16.mxu0 0
        %1666 = vmatpush1.bf16.msra.mxu0 0
        %1667 = vmatprep.subr.bf16.mxu0 0
        %1668 = vmatpush1.bf16.msra.mxu0 0
        %1669 = vmatprep.subr.bf16.mxu0 0
        %1670 = vmatpush1.bf16.msra.mxu0 0
        %1671 = vmatprep.subr.bf16.mxu0 0
        %1672 = vmatpush1.bf16.msra.mxu0 %v1655
        %1673 = vmatprep.subr.bf16.mxu0 0
        %1674 = vmatpush1.bf16.msra.mxu0 %v1654
        %1675 = vmatprep.subr.bf16.mxu0 0
        %1676 = vmatpush1.bf16.msra.mxu0 %v1653
        %1677 = vmatprep.subr.bf16.mxu0 0
        %1678 = vmatpush1.bf16.msra.mxu0 %v1652
        %1679 = vmatprep.subr.bf16.mxu0 0
        %1680 = vmatpush2.bf16.msra.mxu0 0
        %1681 = vmatprep.subr.bf16.mxu0 0
        %1682 = vmatpush2.bf16.msra.mxu0 0
        %1683 = vmatprep.subr.bf16.mxu0 0
        %1684 = vmatpush2.bf16.msra.mxu0 0
        %1685 = vmatprep.subr.bf16.mxu0 0
        %1686 = vmatpush2.bf16.msra.mxu0 0
        %1687 = vmatprep.subr.bf16.mxu0 0
        %1688 = vmatpush2.bf16.msra.mxu0 0
        %1689 = vmatprep.subr.bf16.mxu0 0
        %1690 = vmatpush2.bf16.msra.mxu0 0
        %1691 = vmatprep.subr.bf16.mxu0 0
        %1692 = vmatpush2.bf16.msra.mxu0 0
        %1693 = vmatprep.subr.bf16.mxu0 0
        %1694 = vmatpush2.bf16.msra.mxu0 0
        %1695 = vmatprep.mubr.bf16.mxu0 0
        %1696 = vmatmul.mubr.bf16.gmra.mxu0 %v1661
        %v1697 = vpop.f32.mrf.mxu0
        %v1698 = vadd.f32 %v1634, %v1697
        %v1699 = vpop.f32.mrf.mxu0
        %v1700 = vpop.f32.mrf.mxu0
        %v1701 = vadd.f32 %v1634, %v1700
        %v1702 = vpop.f32.mrf.mxu0
        %1703 = vdwg.mxu0
        %v1704 = vld [vmem:[%s973] sm:$0xf]
        %v1705 = vld [vmem:[%s973 + $0x4] sm:$0xf]
        %v1706 = vld [vmem:[%s973 + $0x8] sm:$0xf]
        %v1707 = vld [vmem:[%s973 + $0xc] sm:$0xf]
        %v1708 = vld [vmem:[%s973 + $0x10] sm:$0xf]
        %v1709 = vld [vmem:[%s973 + $0x14] sm:$0xf]
        %v1710 = vld [vmem:[%s973 + $0x18] sm:$0xf]
        %v1711 = vld [vmem:[%s973 + $0x1c] sm:$0xf]
        %v1712 = vld [vmem:[%s977] sm:$0x1]
        %v1714 = vlaneseq
        %v1715 = vshrl.u32 %v1714, 7
        %v1716 = vsub.s32 0, %v1715
        %v1717 = vrot.slane %v1712, %v1716
        %v1727 = vunpack.c.l.b16 %v1704
        %v1728 = vunpack.c.l.b16 %v1705
        %v1729 = vunpack.c.l.b16 %v1706
        %v1730 = vunpack.c.l.b16 %v1707
        %v1731 = vunpack.c.l.b16 %v1708
        %v1732 = vunpack.c.l.b16 %v1709
        %v1733 = vunpack.c.l.b16 %v1710
        %v1734 = vunpack.c.l.b16 %v1711
        %v1735 = vpack.c.b16 %v1728, %v1727
        %v1736 = vpack.c.b16 %v1730, %v1729
        %v1737 = vpack.c.b16 %v1732, %v1731
        %v1738 = vpack.c.b16 %v1734, %v1733
        %1743 = vmatprep.subr.bf16.mxu0 0
        %1744 = vmatpush1.bf16.msra.mxu0 0
        %1745 = vmatprep.subr.bf16.mxu0 0
        %1746 = vmatpush1.bf16.msra.mxu0 0
        %1747 = vmatprep.subr.bf16.mxu0 0
        %1748 = vmatpush1.bf16.msra.mxu0 0
        %1749 = vmatprep.subr.bf16.mxu0 0
        %1750 = vmatpush1.bf16.msra.mxu0 0
        %1751 = vmatprep.subr.bf16.mxu0 0
        %1752 = vmatpush1.bf16.msra.mxu0 %v1738
        %1753 = vmatprep.subr.bf16.mxu0 0
        %1754 = vmatpush1.bf16.msra.mxu0 %v1737
        %1755 = vmatprep.subr.bf16.mxu0 0
        %1756 = vmatpush1.bf16.msra.mxu0 %v1736
        %1757 = vmatprep.subr.bf16.mxu0 0
        %1758 = vmatpush1.bf16.msra.mxu0 %v1735
        %1759 = vmatprep.subr.bf16.mxu0 0
        %1760 = vmatpush2.bf16.msra.mxu0 0
        %1761 = vmatprep.subr.bf16.mxu0 0
        %1762 = vmatpush2.bf16.msra.mxu0 0
        %1763 = vmatprep.subr.bf16.mxu0 0
        %1764 = vmatpush2.bf16.msra.mxu0 0
        %1765 = vmatprep.subr.bf16.mxu0 0
        %1766 = vmatpush2.bf16.msra.mxu0 0
        %1767 = vmatprep.subr.bf16.mxu0 0
        %1768 = vmatpush2.bf16.msra.mxu0 0
        %1769 = vmatprep.subr.bf16.mxu0 0
        %1770 = vmatpush2.bf16.msra.mxu0 0
        %1771 = vmatprep.subr.bf16.mxu0 0
        %1772 = vmatpush2.bf16.msra.mxu0 0
        %1773 = vmatprep.subr.bf16.mxu0 0
        %1774 = vmatpush2.bf16.msra.mxu0 0
        %1775 = vmatprep.mubr.bf16.mxu0 0
        %1776 = vmatmul.mubr.bf16.gmra.mxu0 %v1661
        %v1777 = vpop.f32.mrf.mxu0
        %v1778 = vadd.f32 %v1717, %v1777
        %v1779 = vpop.f32.mrf.mxu0
        %v1780 = vpop.f32.mrf.mxu0
        %v1781 = vadd.f32 %v1717, %v1780
        %v1782 = vpop.f32.mrf.mxu0
        %1783 = vdwg.mxu0
        %v1784 = vld [vmem:[%s982] sm:$0xf]
        %v1785 = vld [vmem:[%s982 + $0x4] sm:$0xf]
        %v1786 = vld [vmem:[%s982 + $0x8] sm:$0xf]
        %v1787 = vld [vmem:[%s982 + $0xc] sm:$0xf]
        %v1788 = vld [vmem:[%s982 + $0x10] sm:$0xf]
        %v1789 = vld [vmem:[%s982 + $0x14] sm:$0xf]
        %v1790 = vld [vmem:[%s982 + $0x18] sm:$0xf]
        %v1791 = vld [vmem:[%s982 + $0x1c] sm:$0xf]
        %v1792 = vld [vmem:[%s986] sm:$0x1]
        %v1794 = vlaneseq
        %v1795 = vshrl.u32 %v1794, 7
        %v1796 = vsub.s32 0, %v1795
        %v1797 = vrot.slane %v1792, %v1796
        %v1807 = vunpack.c.l.b16 %v1784
        %v1808 = vunpack.c.l.b16 %v1785
        %v1809 = vunpack.c.l.b16 %v1786
        %v1810 = vunpack.c.l.b16 %v1787
        %v1811 = vunpack.c.l.b16 %v1788
        %v1812 = vunpack.c.l.b16 %v1789
        %v1813 = vunpack.c.l.b16 %v1790
        %v1814 = vunpack.c.l.b16 %v1791
        %v1815 = vpack.c.b16 %v1808, %v1807
        %v1816 = vpack.c.b16 %v1810, %v1809
        %v1817 = vpack.c.b16 %v1812, %v1811
        %v1818 = vpack.c.b16 %v1814, %v1813
        %1823 = vmatprep.subr.bf16.mxu0 0
        %1824 = vmatpush1.bf16.msra.mxu0 0
        %1825 = vmatprep.subr.bf16.mxu0 0
        %1826 = vmatpush1.bf16.msra.mxu0 0
        %1827 = vmatprep.subr.bf16.mxu0 0
        %1828 = vmatpush1.bf16.msra.mxu0 0
        %1829 = vmatprep.subr.bf16.mxu0 0
        %1830 = vmatpush1.bf16.msra.mxu0 0
        %1831 = vmatprep.subr.bf16.mxu0 0
        %1832 = vmatpush1.bf16.msra.mxu0 %v1818
        %1833 = vmatprep.subr.bf16.mxu0 0
        %1834 = vmatpush1.bf16.msra.mxu0 %v1817
        %1835 = vmatprep.subr.bf16.mxu0 0
        %1836 = vmatpush1.bf16.msra.mxu0 %v1816
        %1837 = vmatprep.subr.bf16.mxu0 0
        %1838 = vmatpush1.bf16.msra.mxu0 %v1815
        %1839 = vmatprep.subr.bf16.mxu0 0
        %1840 = vmatpush2.bf16.msra.mxu0 0
        %1841 = vmatprep.subr.bf16.mxu0 0
        %1842 = vmatpush2.bf16.msra.mxu0 0
        %1843 = vmatprep.subr.bf16.mxu0 0
        %1844 = vmatpush2.bf16.msra.mxu0 0
        %1845 = vmatprep.subr.bf16.mxu0 0
        %1846 = vmatpush2.bf16.msra.mxu0 0
        %1847 = vmatprep.subr.bf16.mxu0 0
        %1848 = vmatpush2.bf16.msra.mxu0 0
        %1849 = vmatprep.subr.bf16.mxu0 0
        %1850 = vmatpush2.bf16.msra.mxu0 0
        %1851 = vmatprep.subr.bf16.mxu0 0
        %1852 = vmatpush2.bf16.msra.mxu0 0
        %1853 = vmatprep.subr.bf16.mxu0 0
        %1854 = vmatpush2.bf16.msra.mxu0 0
        %1855 = vmatprep.mubr.bf16.mxu0 0
        %1856 = vmatmul.mubr.bf16.gmra.mxu0 %v1661
        %v1857 = vpop.f32.mrf.mxu0
        %v1858 = vadd.f32 %v1797, %v1857
        %v1859 = vpop.f32.mrf.mxu0
        %v1860 = vpop.f32.mrf.mxu0
        %v1861 = vadd.f32 %v1797, %v1860
        %v1862 = vpop.f32.mrf.mxu0
        %1863 = vdwg.mxu0
        %v1864 = vpack.c.bf16 %v1698, %v1698
        %v1865 = vpack.c.bf16 %v1701, %v1701
        %v1866 = vpack.c.bf16 %v1778, %v1778
        %v1867 = vpack.c.bf16 %v1781, %v1781
        %v1868 = vpack.c.bf16 %v1858, %v1858
        %v1869 = vpack.c.bf16 %v1861, %v1861
        %vm1870 = vcmask 261120
        %v1872 = vsel %vm1870, %v1864, 0
        %v1875 = vsel %vm1870, %v1866, 0
        %1877 = vmatprep.subr.bf16.mxu0 0
        %1878 = vmatpush1.bf16.xpose.msra.mxu0 0
        %1879 = vmatprep.subr.bf16.mxu0 0
        %1880 = vmatpush1.bf16.xpose.msra.mxu0 0
        %1881 = vmatprep.subr.bf16.mxu0 0
        %1882 = vmatpush1.bf16.xpose.msra.mxu0 0
        %1883 = vmatprep.subr.bf16.mxu0 0
        %1884 = vmatpush1.bf16.xpose.msra.mxu0 0
        %1885 = vmatprep.subr.bf16.mxu0 0
        %1886 = vmatpush1.bf16.xpose.msra.mxu0 0
        %1887 = vmatprep.subr.bf16.mxu0 0
        %1888 = vmatpush1.bf16.xpose.msra.mxu0 0
        %1889 = vmatprep.subr.bf16.mxu0 0
        %1890 = vmatpush1.bf16.xpose.msra.mxu0 0
        %1891 = vmatprep.subr.bf16.mxu0 0
        %1892 = vmatpush1.bf16.xpose.msra.mxu0 %v1875
        %1893 = vmatprep.subr.bf16.mxu0 0
        %1894 = vmatpush2.bf16.xpose.msra.mxu0 0
        %1895 = vmatprep.subr.bf16.mxu0 0
        %1896 = vmatpush2.bf16.xpose.msra.mxu0 0
        %1897 = vmatprep.subr.bf16.mxu0 0
        %1898 = vmatpush2.bf16.xpose.msra.mxu0 0
        %1899 = vmatprep.subr.bf16.mxu0 0
        %1900 = vmatpush2.bf16.xpose.msra.mxu0 0
        %1901 = vmatprep.subr.bf16.mxu0 0
        %1902 = vmatpush2.bf16.xpose.msra.mxu0 0
        %1903 = vmatprep.subr.bf16.mxu0 0
        %1904 = vmatpush2.bf16.xpose.msra.mxu0 0
        %1905 = vmatprep.subr.bf16.mxu0 0
        %1906 = vmatpush2.bf16.xpose.msra.mxu0 0
        %1907 = vmatprep.subr.bf16.mxu0 0
        %1908 = vmatpush2.bf16.xpose.msra.mxu0 0
        %1909 = vmatprep.mubr.bf16.mxu0 0
        %1910 = vmatmul.mubr.bf16.gmra.mxu0 %v1872
        %v1911 = vpop.f32.mrf.mxu0
        %v1912 = vadd.f32 0.0, %v1911
        %v1913 = vpop.f32.mrf.mxu0
        %v1914 = vpop.f32.mrf.mxu0
        %v1915 = vpop.f32.mrf.mxu0
        %1916 = vdwg.mxu0
        %v1918 = vsel %vm1870, %v1865, 0
        %v1921 = vsel %vm1870, %v1867, 0
        %1923 = vmatprep.subr.bf16.mxu0 0
        %1924 = vmatpush1.bf16.xpose.msra.mxu0 0
        %1925 = vmatprep.subr.bf16.mxu0 0
        %1926 = vmatpush1.bf16.xpose.msra.mxu0 0
        %1927 = vmatprep.subr.bf16.mxu0 0
        %1928 = vmatpush1.bf16.xpose.msra.mxu0 0
        %1929 = vmatprep.subr.bf16.mxu0 0
        %1930 = vmatpush1.bf16.xpose.msra.mxu0 0
        %1931 = vmatprep.subr.bf16.mxu0 0
        %1932 = vmatpush1.bf16.xpose.msra.mxu0 0
        %1933 = vmatprep.subr.bf16.mxu0 0
        %1934 = vmatpush1.bf16.xpose.msra.mxu0 0
        %1935 = vmatprep.subr.bf16.mxu0 0
        %1936 = vmatpush1.bf16.xpose.msra.mxu0 0
        %1937 = vmatprep.subr.bf16.mxu0 0
        %1938 = vmatpush1.bf16.xpose.msra.mxu0 %v1921
        %1939 = vmatprep.subr.bf16.mxu0 0
        %1940 = vmatpush2.bf16.xpose.msra.mxu0 0
        %1941 = vmatprep.subr.bf16.mxu0 0
        %1942 = vmatpush2.bf16.xpose.msra.mxu0 0
        %1943 = vmatprep.subr.bf16.mxu0 0
        %1944 = vmatpush2.bf16.xpose.msra.mxu0 0
        %1945 = vmatprep.subr.bf16.mxu0 0
        %1946 = vmatpush2.bf16.xpose.msra.mxu0 0
        %1947 = vmatprep.subr.bf16.mxu0 0
        %1948 = vmatpush2.bf16.xpose.msra.mxu0 0
        %1949 = vmatprep.subr.bf16.mxu0 0
        %1950 = vmatpush2.bf16.xpose.msra.mxu0 0
        %1951 = vmatprep.subr.bf16.mxu0 0
        %1952 = vmatpush2.bf16.xpose.msra.mxu0 0
        %1953 = vmatprep.subr.bf16.mxu0 0
        %1954 = vmatpush2.bf16.xpose.msra.mxu0 0
        %1955 = vmatprep.mubr.bf16.mxu0 0
        %1956 = vmatmul.mubr.bf16.gmra.mxu0 %v1918
        %v1957 = vpop.f32.mrf.mxu0
        %v1958 = vadd.f32 0.0, %v1957
        %v1959 = vpop.f32.mrf.mxu0
        %v1960 = vpop.f32.mrf.mxu0
        %v1961 = vpop.f32.mrf.mxu0
        %1962 = vdwg.mxu0
        %v1963 = vmul.f32 %v1912, 0.17677669
        %v1964 = vmul.f32 %v1958, 0.17677669
        %v1966 = vlaneseq
        %v1967 = vshrl.u32 %v1966, 7
        %v1968 = vsub.s32 0, %v1967
        %v1969 = vrot.slane %v1573, %v1968
        %v1971 = vadd.f32 %v1963, %v1969
        %v1972 = vadd.f32 %v1964, %v1969
        %vm1973 = vcmask 64512
        %v1974 = vsel %vm1973, %v1971, -inf
        %1975 = vmax.xlane.f32.xlu0 %v1974
        %v1976 = vpop.xlane.xlu0 %1975
        %v1977 = vsel %vm1973, %v1972, -inf
        %1978 = vmax.xlane.f32.xlu0 %v1977
        %v1979 = vpop.xlane.xlu0 %1978
        %v1980 = vsub.f32 %v1971, %v1976
        %v1981 = vsub.f32 %v1972, %v1979
        %v1982 = vmul.f32 %v1980, 1.442695
        %v1983 = vpow.pop %v1982
        %v1984 = vmul.f32 %v1981, 1.442695
        %v1985 = vpow.pop %v1984
        %v1986 = vsel %vm1973, %v1983, 0.0
        %1987 = vadd.xlane.f32.xlu0 %v1986
        %v1988 = vpop.xlane.xlu0 %1987
        %v1989 = vsel %vm1973, %v1985, 0.0
        %1990 = vadd.xlane.f32.xlu0 %v1989
        %v1991 = vpop.xlane.xlu0 %1990
        %v1992 = vrcp.pop %v1988
        %v1993 = vrcp.pop %v1991
        %v1994 = vmul.f32 %v1983, %v1992
        %v1995 = vmul.f32 %v1985, %v1993
        %v1996 = vpack.c.bf16 %v1994, %v1994
        %v1997 = vpack.c.bf16 %v1995, %v1995
        %v1999 = vsel %vm1973, %v1996, 0
        %vm2001 = vcmask 1043456
        %v2003 = vsel %vm2001, %v1868, 0
        %2005 = vmatprep.subr.bf16.mxu0 0
        %2006 = vmatpush1.bf16.msra.mxu0 0
        %2007 = vmatprep.subr.bf16.mxu0 0
        %2008 = vmatpush1.bf16.msra.mxu0 0
        %2009 = vmatprep.subr.bf16.mxu0 0
        %2010 = vmatpush1.bf16.msra.mxu0 0
        %2011 = vmatprep.subr.bf16.mxu0 0
        %2012 = vmatpush1.bf16.msra.mxu0 0
        %2013 = vmatprep.subr.bf16.mxu0 0
        %2014 = vmatpush1.bf16.msra.mxu0 0
        %2015 = vmatprep.subr.bf16.mxu0 0
        %2016 = vmatpush1.bf16.msra.mxu0 0
        %2017 = vmatprep.subr.bf16.mxu0 0
        %2018 = vmatpush1.bf16.msra.mxu0 0
        %2019 = vmatprep.subr.bf16.mxu0 0
        %2020 = vmatpush1.bf16.msra.mxu0 %v2003
        %2021 = vmatprep.subr.bf16.mxu0 0
        %2022 = vmatpush2.bf16.msra.mxu0 0
        %2023 = vmatprep.subr.bf16.mxu0 0
        %2024 = vmatpush2.bf16.msra.mxu0 0
        %2025 = vmatprep.subr.bf16.mxu0 0
        %2026 = vmatpush2.bf16.msra.mxu0 0
        %2027 = vmatprep.subr.bf16.mxu0 0
        %2028 = vmatpush2.bf16.msra.mxu0 0
        %2029 = vmatprep.subr.bf16.mxu0 0
        %2030 = vmatpush2.bf16.msra.mxu0 0
        %2031 = vmatprep.subr.bf16.mxu0 0
        %2032 = vmatpush2.bf16.msra.mxu0 0
        %2033 = vmatprep.subr.bf16.mxu0 0
        %2034 = vmatpush2.bf16.msra.mxu0 0
        %2035 = vmatprep.subr.bf16.mxu0 0
        %2036 = vmatpush2.bf16.msra.mxu0 0
        %2037 = vmatprep.mubr.bf16.mxu0 0
        %2038 = vmatmul.mubr.bf16.gmra.mxu0 %v1999
        %v2039 = vpop.f32.mrf.mxu0
        %v2040 = vadd.f32 0.0, %v2039
        %v2041 = vpop.f32.mrf.mxu0
        %v2042 = vpop.f32.mrf.mxu0
        %v2043 = vpop.f32.mrf.mxu0
        %2044 = vdwg.mxu0
        %v2046 = vsel %vm1973, %v1997, 0
        %v2049 = vsel %vm2001, %v1869, 0
        %2051 = vmatprep.subr.bf16.mxu0 0
        %2052 = vmatpush1.bf16.msra.mxu0 0
        %2053 = vmatprep.subr.bf16.mxu0 0
        %2054 = vmatpush1.bf16.msra.mxu0 0
        %2055 = vmatprep.subr.bf16.mxu0 0
        %2056 = vmatpush1.bf16.msra.mxu0 0
        %2057 = vmatprep.subr.bf16.mxu0 0
        %2058 = vmatpush1.bf16.msra.mxu0 0
        %2059 = vmatprep.subr.bf16.mxu0 0
        %2060 = vmatpush1.bf16.msra.mxu0 0
        %2061 = vmatprep.subr.bf16.mxu0 0
        %2062 = vmatpush1.bf16.msra.mxu0 0
        %2063 = vmatprep.subr.bf16.mxu0 0
        %2064 = vmatpush1.bf16.msra.mxu0 0
        %2065 = vmatprep.subr.bf16.mxu0 0
        %2066 = vmatpush1.bf16.msra.mxu0 %v2049
        %2067 = vmatprep.subr.bf16.mxu0 0
        %2068 = vmatpush2.bf16.msra.mxu0 0
        %2069 = vmatprep.subr.bf16.mxu0 0
        %2070 = vmatpush2.bf16.msra.mxu0 0
        %2071 = vmatprep.subr.bf16.mxu0 0
        %2072 = vmatpush2.bf16.msra.mxu0 0
        %2073 = vmatprep.subr.bf16.mxu0 0
        %2074 = vmatpush2.bf16.msra.mxu0 0
        %2075 = vmatprep.subr.bf16.mxu0 0
        %2076 = vmatpush2.bf16.msra.mxu0 0
        %2077 = vmatprep.subr.bf16.mxu0 0
        %2078 = vmatpush2.bf16.msra.mxu0 0
        %2079 = vmatprep.subr.bf16.mxu0 0
        %2080 = vmatpush2.bf16.msra.mxu0 0
        %2081 = vmatprep.subr.bf16.mxu0 0
        %2082 = vmatpush2.bf16.msra.mxu0 0
        %2083 = vmatprep.mubr.bf16.mxu0 0
        %2084 = vmatmul.mubr.bf16.gmra.mxu0 %v2046
        %v2085 = vpop.f32.mrf.mxu0
        %v2086 = vadd.f32 0.0, %v2085
        %v2087 = vpop.f32.mrf.mxu0
        %v2088 = vpop.f32.mrf.mxu0
        %v2089 = vpop.f32.mrf.mxu0
        %2090 = vdwg.mxu0
        %v2091 = vpack.c.bf16 %v2086, %v2040
        %v2092 = vld [vmem:[%s991] sm:$0xf]
        %v2093 = vld [vmem:[%s991 + $0x4] sm:$0xf]
        %v2094 = vld [vmem:[%s991 + $0x8] sm:$0xf]
        %v2095 = vld [vmem:[%s991 + $0xc] sm:$0xf]
        %s2096 = scalar_lea.vmem %s964, 32
        %v2097 = vld [vmem:[%s2096] sm:$0xf]
        %v2098 = vld [vmem:[%s2096 + $0x4] sm:$0xf]
        %v2099 = vld [vmem:[%s2096 + $0x8] sm:$0xf]
        %v2100 = vld [vmem:[%s2096 + $0xc] sm:$0xf]
        %v2101 = vld [vmem:[%s2096 + $0x10] sm:$0xf]
        %v2102 = vld [vmem:[%s2096 + $0x14] sm:$0xf]
        %v2103 = vld [vmem:[%s2096 + $0x18] sm:$0xf]
        %v2104 = vld [vmem:[%s2096 + $0x1c] sm:$0xf]
        %s2105 = scalar_lea.vmem %s968, 1
        %v2106 = vld [vmem:[%s2105] sm:$0x1]
        %v2108 = vlaneseq
        %v2109 = vshrl.u32 %v2108, 7
        %v2110 = vsub.s32 0, %v2109
        %v2111 = vrot.slane %v2106, %v2110
        %v2121 = vunpack.c.l.b16 %v2097
        %v2122 = vunpack.c.l.b16 %v2098
        %v2123 = vunpack.c.l.b16 %v2099
        %v2124 = vunpack.c.l.b16 %v2100
        %v2125 = vunpack.c.l.b16 %v2101
        %v2126 = vunpack.c.l.b16 %v2102
        %v2127 = vunpack.c.l.b16 %v2103
        %v2128 = vunpack.c.l.b16 %v2104
        %v2129 = vpack.c.b16 %v2122, %v2121
        %v2130 = vpack.c.b16 %v2124, %v2123
        %v2131 = vpack.c.b16 %v2126, %v2125
        %v2132 = vpack.c.b16 %v2128, %v2127
        %2137 = vmatprep.subr.bf16.mxu0 0
        %2138 = vmatpush1.bf16.msra.mxu0 0
        %2139 = vmatprep.subr.bf16.mxu0 0
        %2140 = vmatpush1.bf16.msra.mxu0 0
        %2141 = vmatprep.subr.bf16.mxu0 0
        %2142 = vmatpush1.bf16.msra.mxu0 0
        %2143 = vmatprep.subr.bf16.mxu0 0
        %2144 = vmatpush1.bf16.msra.mxu0 0
        %2145 = vmatprep.subr.bf16.mxu0 0
        %2146 = vmatpush1.bf16.msra.mxu0 %v2132
        %2147 = vmatprep.subr.bf16.mxu0 0
        %2148 = vmatpush1.bf16.msra.mxu0 %v2131
        %2149 = vmatprep.subr.bf16.mxu0 0
        %2150 = vmatpush1.bf16.msra.mxu0 %v2130
        %2151 = vmatprep.subr.bf16.mxu0 0
        %2152 = vmatpush1.bf16.msra.mxu0 %v2129
        %2153 = vmatprep.subr.bf16.mxu0 0
        %2154 = vmatpush2.bf16.msra.mxu0 0
        %2155 = vmatprep.subr.bf16.mxu0 0
        %2156 = vmatpush2.bf16.msra.mxu0 0
        %2157 = vmatprep.subr.bf16.mxu0 0
        %2158 = vmatpush2.bf16.msra.mxu0 0
        %2159 = vmatprep.subr.bf16.mxu0 0
        %2160 = vmatpush2.bf16.msra.mxu0 0
        %2161 = vmatprep.subr.bf16.mxu0 0
        %2162 = vmatpush2.bf16.msra.mxu0 0
        %2163 = vmatprep.subr.bf16.mxu0 0
        %2164 = vmatpush2.bf16.msra.mxu0 0
        %2165 = vmatprep.subr.bf16.mxu0 0
        %2166 = vmatpush2.bf16.msra.mxu0 0
        %2167 = vmatprep.subr.bf16.mxu0 0
        %2168 = vmatpush2.bf16.msra.mxu0 0
        %2169 = vmatprep.mubr.bf16.mxu0 0
        %2170 = vmatmul.mubr.bf16.gmra.mxu0 %v1661
        %v2171 = vpop.f32.mrf.mxu0
        %v2172 = vadd.f32 %v2111, %v2171
        %v2173 = vpop.f32.mrf.mxu0
        %v2174 = vpop.f32.mrf.mxu0
        %v2175 = vadd.f32 %v2111, %v2174
        %v2176 = vpop.f32.mrf.mxu0
        %2177 = vdwg.mxu0
        %s2178 = scalar_lea.vmem %s973, 32
        %v2179 = vld [vmem:[%s2178] sm:$0xf]
        %v2180 = vld [vmem:[%s2178 + $0x4] sm:$0xf]
        %v2181 = vld [vmem:[%s2178 + $0x8] sm:$0xf]
        %v2182 = vld [vmem:[%s2178 + $0xc] sm:$0xf]
        %v2183 = vld [vmem:[%s2178 + $0x10] sm:$0xf]
        %v2184 = vld [vmem:[%s2178 + $0x14] sm:$0xf]
        %v2185 = vld [vmem:[%s2178 + $0x18] sm:$0xf]
        %v2186 = vld [vmem:[%s2178 + $0x1c] sm:$0xf]
        %s2187 = scalar_lea.vmem %s977, 1
        %v2188 = vld [vmem:[%s2187] sm:$0x1]
        %v2190 = vlaneseq
        %v2191 = vshrl.u32 %v2190, 7
        %v2192 = vsub.s32 0, %v2191
        %v2193 = vrot.slane %v2188, %v2192
        %v2203 = vunpack.c.l.b16 %v2179
        %v2204 = vunpack.c.l.b16 %v2180
        %v2205 = vunpack.c.l.b16 %v2181
        %v2206 = vunpack.c.l.b16 %v2182
        %v2207 = vunpack.c.l.b16 %v2183
        %v2208 = vunpack.c.l.b16 %v2184
        %v2209 = vunpack.c.l.b16 %v2185
        %v2210 = vunpack.c.l.b16 %v2186
        %v2211 = vpack.c.b16 %v2204, %v2203
        %v2212 = vpack.c.b16 %v2206, %v2205
        %v2213 = vpack.c.b16 %v2208, %v2207
        %v2214 = vpack.c.b16 %v2210, %v2209
        %2219 = vmatprep.subr.bf16.mxu0 0
        %2220 = vmatpush1.bf16.msra.mxu0 0
        %2221 = vmatprep.subr.bf16.mxu0 0
        %2222 = vmatpush1.bf16.msra.mxu0 0
        %2223 = vmatprep.subr.bf16.mxu0 0
        %2224 = vmatpush1.bf16.msra.mxu0 0
        %2225 = vmatprep.subr.bf16.mxu0 0
        %2226 = vmatpush1.bf16.msra.mxu0 0
        %2227 = vmatprep.subr.bf16.mxu0 0
        %2228 = vmatpush1.bf16.msra.mxu0 %v2214
        %2229 = vmatprep.subr.bf16.mxu0 0
        %2230 = vmatpush1.bf16.msra.mxu0 %v2213
        %2231 = vmatprep.subr.bf16.mxu0 0
        %2232 = vmatpush1.bf16.msra.mxu0 %v2212
        %2233 = vmatprep.subr.bf16.mxu0 0
        %2234 = vmatpush1.bf16.msra.mxu0 %v2211
        %2235 = vmatprep.subr.bf16.mxu0 0
        %2236 = vmatpush2.bf16.msra.mxu0 0
        %2237 = vmatprep.subr.bf16.mxu0 0
        %2238 = vmatpush2.bf16.msra.mxu0 0
        %2239 = vmatprep.subr.bf16.mxu0 0
        %2240 = vmatpush2.bf16.msra.mxu0 0
        %2241 = vmatprep.subr.bf16.mxu0 0
        %2242 = vmatpush2.bf16.msra.mxu0 0
        %2243 = vmatprep.subr.bf16.mxu0 0
        %2244 = vmatpush2.bf16.msra.mxu0 0
        %2245 = vmatprep.subr.bf16.mxu0 0
        %2246 = vmatpush2.bf16.msra.mxu0 0
        %2247 = vmatprep.subr.bf16.mxu0 0
        %2248 = vmatpush2.bf16.msra.mxu0 0
        %2249 = vmatprep.subr.bf16.mxu0 0
        %2250 = vmatpush2.bf16.msra.mxu0 0
        %2251 = vmatprep.mubr.bf16.mxu0 0
        %2252 = vmatmul.mubr.bf16.gmra.mxu0 %v1661
        %v2253 = vpop.f32.mrf.mxu0
        %v2254 = vadd.f32 %v2193, %v2253
        %v2255 = vpop.f32.mrf.mxu0
        %v2256 = vpop.f32.mrf.mxu0
        %v2257 = vadd.f32 %v2193, %v2256
        %v2258 = vpop.f32.mrf.mxu0
        %2259 = vdwg.mxu0
        %s2260 = scalar_lea.vmem %s982, 32
        %v2261 = vld [vmem:[%s2260] sm:$0xf]
        %v2262 = vld [vmem:[%s2260 + $0x4] sm:$0xf]
        %v2263 = vld [vmem:[%s2260 + $0x8] sm:$0xf]
        %v2264 = vld [vmem:[%s2260 + $0xc] sm:$0xf]
        %v2265 = vld [vmem:[%s2260 + $0x10] sm:$0xf]
        %v2266 = vld [vmem:[%s2260 + $0x14] sm:$0xf]
        %v2267 = vld [vmem:[%s2260 + $0x18] sm:$0xf]
        %v2268 = vld [vmem:[%s2260 + $0x1c] sm:$0xf]
        %s2269 = scalar_lea.vmem %s986, 1
        %v2270 = vld [vmem:[%s2269] sm:$0x1]
        %v2272 = vlaneseq
        %v2273 = vshrl.u32 %v2272, 7
        %v2274 = vsub.s32 0, %v2273
        %v2275 = vrot.slane %v2270, %v2274
        %v2285 = vunpack.c.l.b16 %v2261
        %v2286 = vunpack.c.l.b16 %v2262
        %v2287 = vunpack.c.l.b16 %v2263
        %v2288 = vunpack.c.l.b16 %v2264
        %v2289 = vunpack.c.l.b16 %v2265
        %v2290 = vunpack.c.l.b16 %v2266
        %v2291 = vunpack.c.l.b16 %v2267
        %v2292 = vunpack.c.l.b16 %v2268
        %v2293 = vpack.c.b16 %v2286, %v2285
        %v2294 = vpack.c.b16 %v2288, %v2287
        %v2295 = vpack.c.b16 %v2290, %v2289
        %v2296 = vpack.c.b16 %v2292, %v2291
        %2301 = vmatprep.subr.bf16.mxu0 0
        %2302 = vmatpush1.bf16.msra.mxu0 0
        %2303 = vmatprep.subr.bf16.mxu0 0
        %2304 = vmatpush1.bf16.msra.mxu0 0
        %2305 = vmatprep.subr.bf16.mxu0 0
        %2306 = vmatpush1.bf16.msra.mxu0 0
        %2307 = vmatprep.subr.bf16.mxu0 0
        %2308 = vmatpush1.bf16.msra.mxu0 0
        %2309 = vmatprep.subr.bf16.mxu0 0
        %2310 = vmatpush1.bf16.msra.mxu0 %v2296
        %2311 = vmatprep.subr.bf16.mxu0 0
        %2312 = vmatpush1.bf16.msra.mxu0 %v2295
        %2313 = vmatprep.subr.bf16.mxu0 0
        %2314 = vmatpush1.bf16.msra.mxu0 %v2294
        %2315 = vmatprep.subr.bf16.mxu0 0
        %2316 = vmatpush1.bf16.msra.mxu0 %v2293
        %2317 = vmatprep.subr.bf16.mxu0 0
        %2318 = vmatpush2.bf16.msra.mxu0 0
        %2319 = vmatprep.subr.bf16.mxu0 0
        %2320 = vmatpush2.bf16.msra.mxu0 0
        %2321 = vmatprep.subr.bf16.mxu0 0
        %2322 = vmatpush2.bf16.msra.mxu0 0
        %2323 = vmatprep.subr.bf16.mxu0 0
        %2324 = vmatpush2.bf16.msra.mxu0 0
        %2325 = vmatprep.subr.bf16.mxu0 0
        %2326 = vmatpush2.bf16.msra.mxu0 0
        %2327 = vmatprep.subr.bf16.mxu0 0
        %2328 = vmatpush2.bf16.msra.mxu0 0
        %2329 = vmatprep.subr.bf16.mxu0 0
        %2330 = vmatpush2.bf16.msra.mxu0 0
        %2331 = vmatprep.subr.bf16.mxu0 0
        %2332 = vmatpush2.bf16.msra.mxu0 0
        %2333 = vmatprep.mubr.bf16.mxu0 0
        %2334 = vmatmul.mubr.bf16.gmra.mxu0 %v1661
        %v2335 = vpop.f32.mrf.mxu0
        %v2336 = vadd.f32 %v2275, %v2335
        %v2337 = vpop.f32.mrf.mxu0
        %v2338 = vpop.f32.mrf.mxu0
        %v2339 = vadd.f32 %v2275, %v2338
        %v2340 = vpop.f32.mrf.mxu0
        %2341 = vdwg.mxu0
        %v2342 = vpack.c.bf16 %v2172, %v2172
        %v2343 = vpack.c.bf16 %v2175, %v2175
        %v2344 = vpack.c.bf16 %v2254, %v2254
        %v2345 = vpack.c.bf16 %v2257, %v2257
        %v2346 = vpack.c.bf16 %v2336, %v2336
        %v2347 = vpack.c.bf16 %v2339, %v2339
        %v2349 = vsel %vm1870, %v2342, 0
        %v2352 = vsel %vm1870, %v2344, 0
        %2354 = vmatprep.subr.bf16.mxu0 0
        %2355 = vmatpush1.bf16.xpose.msra.mxu0 0
        %2356 = vmatprep.subr.bf16.mxu0 0
        %2357 = vmatpush1.bf16.xpose.msra.mxu0 0
        %2358 = vmatprep.subr.bf16.mxu0 0
        %2359 = vmatpush1.bf16.xpose.msra.mxu0 0
        %2360 = vmatprep.subr.bf16.mxu0 0
        %2361 = vmatpush1.bf16.xpose.msra.mxu0 0
        %2362 = vmatprep.subr.bf16.mxu0 0
        %2363 = vmatpush1.bf16.xpose.msra.mxu0 0
        %2364 = vmatprep.subr.bf16.mxu0 0
        %2365 = vmatpush1.bf16.xpose.msra.mxu0 0
        %2366 = vmatprep.subr.bf16.mxu0 0
        %2367 = vmatpush1.bf16.xpose.msra.mxu0 0
        %2368 = vmatprep.subr.bf16.mxu0 0
        %2369 = vmatpush1.bf16.xpose.msra.mxu0 %v2352
        %2370 = vmatprep.subr.bf16.mxu0 0
        %2371 = vmatpush2.bf16.xpose.msra.mxu0 0
        %2372 = vmatprep.subr.bf16.mxu0 0
        %2373 = vmatpush2.bf16.xpose.msra.mxu0 0
        %2374 = vmatprep.subr.bf16.mxu0 0
        %2375 = vmatpush2.bf16.xpose.msra.mxu0 0
        %2376 = vmatprep.subr.bf16.mxu0 0
        %2377 = vmatpush2.bf16.xpose.msra.mxu0 0
        %2378 = vmatprep.subr.bf16.mxu0 0
        %2379 = vmatpush2.bf16.xpose.msra.mxu0 0
        %2380 = vmatprep.subr.bf16.mxu0 0
        %2381 = vmatpush2.bf16.xpose.msra.mxu0 0
        %2382 = vmatprep.subr.bf16.mxu0 0
        %2383 = vmatpush2.bf16.xpose.msra.mxu0 0
        %2384 = vmatprep.subr.bf16.mxu0 0
        %2385 = vmatpush2.bf16.xpose.msra.mxu0 0
        %2386 = vmatprep.mubr.bf16.mxu0 0
        %2387 = vmatmul.mubr.bf16.gmra.mxu0 %v2349
        %v2388 = vpop.f32.mrf.mxu0
        %v2389 = vadd.f32 0.0, %v2388
        %v2390 = vpop.f32.mrf.mxu0
        %v2391 = vpop.f32.mrf.mxu0
        %v2392 = vpop.f32.mrf.mxu0
        %2393 = vdwg.mxu0
        %v2395 = vsel %vm1870, %v2343, 0
        %v2398 = vsel %vm1870, %v2345, 0
        %2400 = vmatprep.subr.bf16.mxu0 0
        %2401 = vmatpush1.bf16.xpose.msra.mxu0 0
        %2402 = vmatprep.subr.bf16.mxu0 0
        %2403 = vmatpush1.bf16.xpose.msra.mxu0 0
        %2404 = vmatprep.subr.bf16.mxu0 0
        %2405 = vmatpush1.bf16.xpose.msra.mxu0 0
        %2406 = vmatprep.subr.bf16.mxu0 0
        %2407 = vmatpush1.bf16.xpose.msra.mxu0 0
        %2408 = vmatprep.subr.bf16.mxu0 0
        %2409 = vmatpush1.bf16.xpose.msra.mxu0 0
        %2410 = vmatprep.subr.bf16.mxu0 0
        %2411 = vmatpush1.bf16.xpose.msra.mxu0 0
        %2412 = vmatprep.subr.bf16.mxu0 0
        %2413 = vmatpush1.bf16.xpose.msra.mxu0 0
        %2414 = vmatprep.subr.bf16.mxu0 0
        %2415 = vmatpush1.bf16.xpose.msra.mxu0 %v2398
        %2416 = vmatprep.subr.bf16.mxu0 0
        %2417 = vmatpush2.bf16.xpose.msra.mxu0 0
        %2418 = vmatprep.subr.bf16.mxu0 0
        %2419 = vmatpush2.bf16.xpose.msra.mxu0 0
        %2420 = vmatprep.subr.bf16.mxu0 0
        %2421 = vmatpush2.bf16.xpose.msra.mxu0 0
        %2422 = vmatprep.subr.bf16.mxu0 0
        %2423 = vmatpush2.bf16.xpose.msra.mxu0 0
        %2424 = vmatprep.subr.bf16.mxu0 0
        %2425 = vmatpush2.bf16.xpose.msra.mxu0 0
        %2426 = vmatprep.subr.bf16.mxu0 0
        %2427 = vmatpush2.bf16.xpose.msra.mxu0 0
        %2428 = vmatprep.subr.bf16.mxu0 0
        %2429 = vmatpush2.bf16.xpose.msra.mxu0 0
        %2430 = vmatprep.subr.bf16.mxu0 0
        %2431 = vmatpush2.bf16.xpose.msra.mxu0 0
        %2432 = vmatprep.mubr.bf16.mxu0 0
        %2433 = vmatmul.mubr.bf16.gmra.mxu0 %v2395
        %v2434 = vpop.f32.mrf.mxu0
        %v2435 = vadd.f32 0.0, %v2434
        %v2436 = vpop.f32.mrf.mxu0
        %v2437 = vpop.f32.mrf.mxu0
        %v2438 = vpop.f32.mrf.mxu0
        %2439 = vdwg.mxu0
        %v2440 = vmul.f32 %v2389, 0.17677669
        %v2441 = vmul.f32 %v2435, 0.17677669
        %v2442 = vadd.f32 %v2440, %v1969
        %v2443 = vadd.f32 %v2441, %v1969
        %v2444 = vsel %vm1973, %v2442, -inf
        %2445 = vmax.xlane.f32.xlu0 %v2444
        %v2446 = vpop.xlane.xlu0 %2445
        %v2447 = vsel %vm1973, %v2443, -inf
        %2448 = vmax.xlane.f32.xlu0 %v2447
        %v2449 = vpop.xlane.xlu0 %2448
        %v2450 = vsub.f32 %v2442, %v2446
        %v2451 = vsub.f32 %v2443, %v2449
        %v2452 = vmul.f32 %v2450, 1.442695
        %v2453 = vpow.pop %v2452
        %v2454 = vmul.f32 %v2451, 1.442695
        %v2455 = vpow.pop %v2454
        %v2456 = vsel %vm1973, %v2453, 0.0
        %2457 = vadd.xlane.f32.xlu0 %v2456
        %v2458 = vpop.xlane.xlu0 %2457
        %v2459 = vsel %vm1973, %v2455, 0.0
        %2460 = vadd.xlane.f32.xlu0 %v2459
        %v2461 = vpop.xlane.xlu0 %2460
        %v2462 = vrcp.pop %v2458
        %v2463 = vrcp.pop %v2461
        %v2464 = vmul.f32 %v2453, %v2462
        %v2465 = vmul.f32 %v2455, %v2463
        %v2466 = vpack.c.bf16 %v2464, %v2464
        %v2467 = vpack.c.bf16 %v2465, %v2465
        %v2469 = vsel %vm1973, %v2466, 0
        %v2472 = vsel %vm2001, %v2346, 0
        %2474 = vmatprep.subr.bf16.mxu0 0
        %2475 = vmatpush1.bf16.msra.mxu0 0
        %2476 = vmatprep.subr.bf16.mxu0 0
        %2477 = vmatpush1.bf16.msra.mxu0 0
        %2478 = vmatprep.subr.bf16.mxu0 0
        %2479 = vmatpush1.bf16.msra.mxu0 0
        %2480 = vmatprep.subr.bf16.mxu0 0
        %2481 = vmatpush1.bf16.msra.mxu0 0
        %2482 = vmatprep.subr.bf16.mxu0 0
        %2483 = vmatpush1.bf16.msra.mxu0 0
        %2484 = vmatprep.subr.bf16.mxu0 0
        %2485 = vmatpush1.bf16.msra.mxu0 0
        %2486 = vmatprep.subr.bf16.mxu0 0
        %2487 = vmatpush1.bf16.msra.mxu0 0
        %2488 = vmatprep.subr.bf16.mxu0 0
        %2489 = vmatpush1.bf16.msra.mxu0 %v2472
        %2490 = vmatprep.subr.bf16.mxu0 0
        %2491 = vmatpush2.bf16.msra.mxu0 0
        %2492 = vmatprep.subr.bf16.mxu0 0
        %2493 = vmatpush2.bf16.msra.mxu0 0
        %2494 = vmatprep.subr.bf16.mxu0 0
        %2495 = vmatpush2.bf16.msra.mxu0 0
        %2496 = vmatprep.subr.bf16.mxu0 0
        %2497 = vmatpush2.bf16.msra.mxu0 0
        %2498 = vmatprep.subr.bf16.mxu0 0
        %2499 = vmatpush2.bf16.msra.mxu0 0
        %2500 = vmatprep.subr.bf16.mxu0 0
        %2501 = vmatpush2.bf16.msra.mxu0 0
        %2502 = vmatprep.subr.bf16.mxu0 0
        %2503 = vmatpush2.bf16.msra.mxu0 0
        %2504 = vmatprep.subr.bf16.mxu0 0
        %2505 = vmatpush2.bf16.msra.mxu0 0
        %2506 = vmatprep.mubr.bf16.mxu0 0
        %2507 = vmatmul.mubr.bf16.gmra.mxu0 %v2469
        %v2508 = vpop.f32.mrf.mxu0
        %v2509 = vadd.f32 0.0, %v2508
        %v2510 = vpop.f32.mrf.mxu0
        %v2511 = vpop.f32.mrf.mxu0
        %v2512 = vpop.f32.mrf.mxu0
        %2513 = vdwg.mxu0
        %v2515 = vsel %vm1973, %v2467, 0
        %v2518 = vsel %vm2001, %v2347, 0
        %2520 = vmatprep.subr.bf16.mxu0 0
        %2521 = vmatpush1.bf16.msra.mxu0 0
        %2522 = vmatprep.subr.bf16.mxu0 0
        %2523 = vmatpush1.bf16.msra.mxu0 0
        %2524 = vmatprep.subr.bf16.mxu0 0
        %2525 = vmatpush1.bf16.msra.mxu0 0
        %2526 = vmatprep.subr.bf16.mxu0 0
        %2527 = vmatpush1.bf16.msra.mxu0 0
        %2528 = vmatprep.subr.bf16.mxu0 0
        %2529 = vmatpush1.bf16.msra.mxu0 0
        %2530 = vmatprep.subr.bf16.mxu0 0
        %2531 = vmatpush1.bf16.msra.mxu0 0
        %2532 = vmatprep.subr.bf16.mxu0 0
        %2533 = vmatpush1.bf16.msra.mxu0 0
        %2534 = vmatprep.subr.bf16.mxu0 0
        %2535 = vmatpush1.bf16.msra.mxu0 %v2518
        %2536 = vmatprep.subr.bf16.mxu0 0
        %2537 = vmatpush2.bf16.msra.mxu0 0
        %2538 = vmatprep.subr.bf16.mxu0 0
        %2539 = vmatpush2.bf16.msra.mxu0 0
        %2540 = vmatprep.subr.bf16.mxu0 0
        %2541 = vmatpush2.bf16.msra.mxu0 0
        %2542 = vmatprep.subr.bf16.mxu0 0
        %2543 = vmatpush2.bf16.msra.mxu0 0
        %2544 = vmatprep.subr.bf16.mxu0 0
        %2545 = vmatpush2.bf16.msra.mxu0 0
        %2546 = vmatprep.subr.bf16.mxu0 0
        %2547 = vmatpush2.bf16.msra.mxu0 0
        %2548 = vmatprep.subr.bf16.mxu0 0
        %2549 = vmatpush2.bf16.msra.mxu0 0
        %2550 = vmatprep.subr.bf16.mxu0 0
        %2551 = vmatpush2.bf16.msra.mxu0 0
        %2552 = vmatprep.mubr.bf16.mxu0 0
        %2553 = vmatmul.mubr.bf16.gmra.mxu0 %v2515
        %v2554 = vpop.f32.mrf.mxu0
        %v2555 = vadd.f32 0.0, %v2554
        %v2556 = vpop.f32.mrf.mxu0
        %v2557 = vpop.f32.mrf.mxu0
        %v2558 = vpop.f32.mrf.mxu0
        %2559 = vdwg.mxu0
        %v2560 = vpack.c.bf16 %v2555, %v2509
        %s2561 = scalar_lea.vmem %s991, 16
        %v2562 = vld [vmem:[%s2561] sm:$0xf]
        %v2563 = vld [vmem:[%s2561 + $0x4] sm:$0xf]
        %v2564 = vld [vmem:[%s2561 + $0x8] sm:$0xf]
        %v2565 = vld [vmem:[%s2561 + $0xc] sm:$0xf]
        %v2570 = vunpack.c.l.b16 %v2562
        %v2571 = vunpack.c.l.b16 %v2563
        %v2572 = vunpack.c.l.b16 %v2564
        %v2573 = vunpack.c.l.b16 %v2565
        %v2574 = vpack.c.b16 %v2571, %v2570
        %v2575 = vpack.c.b16 %v2573, %v2572
        %v2579 = vsel %vm1870, %v2560, 0
        %2581 = vmatprep.subr.bf16.mxu0 0
        %2582 = vmatpush1.bf16.msra.mxu0 0
        %2583 = vmatprep.subr.bf16.mxu0 0
        %2584 = vmatpush1.bf16.msra.mxu0 0
        %2585 = vmatprep.subr.bf16.mxu0 0
        %2586 = vmatpush1.bf16.msra.mxu0 0
        %2587 = vmatprep.subr.bf16.mxu0 0
        %2588 = vmatpush1.bf16.msra.mxu0 0
        %2589 = vmatprep.subr.bf16.mxu0 0
        %2590 = vmatpush1.bf16.msra.mxu0 0
        %2591 = vmatprep.subr.bf16.mxu0 0
        %2592 = vmatpush1.bf16.msra.mxu0 0
        %2593 = vmatprep.subr.bf16.mxu0 0
        %2594 = vmatpush1.bf16.msra.mxu0 %v2575
        %2595 = vmatprep.subr.bf16.mxu0 0
        %2596 = vmatpush1.bf16.msra.mxu0 %v2574
        %2597 = vmatprep.subr.bf16.mxu0 0
        %2598 = vmatpush2.bf16.msra.mxu0 0
        %2599 = vmatprep.subr.bf16.mxu0 0
        %2600 = vmatpush2.bf16.msra.mxu0 0
        %2601 = vmatprep.subr.bf16.mxu0 0
        %2602 = vmatpush2.bf16.msra.mxu0 0
        %2603 = vmatprep.subr.bf16.mxu0 0
        %2604 = vmatpush2.bf16.msra.mxu0 0
        %2605 = vmatprep.subr.bf16.mxu0 0
        %2606 = vmatpush2.bf16.msra.mxu0 0
        %2607 = vmatprep.subr.bf16.mxu0 0
        %2608 = vmatpush2.bf16.msra.mxu0 0
        %2609 = vmatprep.subr.bf16.mxu0 0
        %2610 = vmatpush2.bf16.msra.mxu0 0
        %2611 = vmatprep.subr.bf16.mxu0 0
        %2612 = vmatpush2.bf16.msra.mxu0 0
        %2613 = vmatprep.mubr.bf16.mxu0 0
        %2614 = vmatmul.mubr.bf16.gmra.mxu0 %v2579
        %v2615 = vpop.f32.mrf.mxu0
        %v2616 = vadd.f32 0.0, %v2615
        %v2617 = vpop.f32.mrf.mxu0
        %v2618 = vpop.f32.mrf.mxu0
        %v2619 = vadd.f32 0.0, %v2618
        %v2620 = vpop.f32.mrf.mxu0
        %2621 = vdwg.mxu0
        %v2626 = vunpack.c.l.b16 %v2092
        %v2627 = vunpack.c.l.b16 %v2093
        %v2628 = vunpack.c.l.b16 %v2094
        %v2629 = vunpack.c.l.b16 %v2095
        %v2630 = vpack.c.b16 %v2627, %v2626
        %v2631 = vpack.c.b16 %v2629, %v2628
        %v2635 = vsel %vm1870, %v2091, 0
        %2637 = vmatprep.subr.bf16.mxu0 0
        %2638 = vmatpush1.bf16.msra.mxu0 0
        %2639 = vmatprep.subr.bf16.mxu0 0
        %2640 = vmatpush1.bf16.msra.mxu0 0
        %2641 = vmatprep.subr.bf16.mxu0 0
        %2642 = vmatpush1.bf16.msra.mxu0 0
        %2643 = vmatprep.subr.bf16.mxu0 0
        %2644 = vmatpush1.bf16.msra.mxu0 0
        %2645 = vmatprep.subr.bf16.mxu0 0
        %2646 = vmatpush1.bf16.msra.mxu0 0
        %2647 = vmatprep.subr.bf16.mxu0 0
        %2648 = vmatpush1.bf16.msra.mxu0 0
        %2649 = vmatprep.subr.bf16.mxu0 0
        %2650 = vmatpush1.bf16.msra.mxu0 %v2631
        %2651 = vmatprep.subr.bf16.mxu0 0
        %2652 = vmatpush1.bf16.msra.mxu0 %v2630
        %2653 = vmatprep.subr.bf16.mxu0 0
        %2654 = vmatpush2.bf16.msra.mxu0 0
        %2655 = vmatprep.subr.bf16.mxu0 0
        %2656 = vmatpush2.bf16.msra.mxu0 0
        %2657 = vmatprep.subr.bf16.mxu0 0
        %2658 = vmatpush2.bf16.msra.mxu0 0
        %2659 = vmatprep.subr.bf16.mxu0 0
        %2660 = vmatpush2.bf16.msra.mxu0 0
        %2661 = vmatprep.subr.bf16.mxu0 0
        %2662 = vmatpush2.bf16.msra.mxu0 0
        %2663 = vmatprep.subr.bf16.mxu0 0
        %2664 = vmatpush2.bf16.msra.mxu0 0
        %2665 = vmatprep.subr.bf16.mxu0 0
        %2666 = vmatpush2.bf16.msra.mxu0 0
        %2667 = vmatprep.subr.bf16.mxu0 0
        %2668 = vmatpush2.bf16.msra.mxu0 0
        %2669 = vmatprep.mubr.bf16.mxu0 0
        %2670 = vmatmul.mubr.bf16.gmra.mxu0 %v2635
        %v2671 = vpop.f32.mrf.mxu0
        %v2672 = vadd.f32 %v2616, %v2671
        %v2673 = vpop.f32.mrf.mxu0
        %v2674 = vpop.f32.mrf.mxu0
        %v2675 = vadd.f32 %v2619, %v2674
        %v2676 = vpop.f32.mrf.mxu0
        %2677 = vdwg.mxu0
        %v2678 = vadd.f32 %v1571, %v2672
        %v2679 = vadd.f32 %v1572, %v2675
        %v2680 = vld [vmem:[%s994] sm:$0x1]
        %v2682 = vlaneseq
        %v2683 = vshrl.u32 %v2682, 7
        %v2684 = vsub.s32 0, %v2683
        %v2685 = vrot.slane %v2680, %v2684
        %v2687 = vadd.f32 %v2678, %v2685
        %v2688 = vadd.f32 %v2679, %v2685
        %v2689 = vld [vmem:[%s997] sm:$0x1]
        %v2690 = vld [vmem:[%s1000] sm:$0x1]
        %v2691 = vsel %vm1576, %v2687, 0.0
        %2692 = vadd.xlane.f32.xlu0 %v2691
        %v2693 = vpop.xlane.xlu0 %2692
        %v2694 = vsel %vm1576, %v2688, 0.0
        %2695 = vadd.xlane.f32.xlu0 %v2694
        %v2696 = vpop.xlane.xlu0 %2695
        %v2697 = vmul.f32 %v2693, %v1583
        %v2698 = vmul.f32 %v2696, %v1583
        %v2699 = vsub.f32 %v2687, %v2697
        %v2700 = vsub.f32 %v2688, %v2698
        %v2701 = vmul.f32 %v2699, %v2699
        %v2702 = vmul.f32 %v2700, %v2700
        %v2703 = vsel %vm1576, %v2701, 0.0
        %2704 = vadd.xlane.f32.xlu0 %v2703
        %v2705 = vpop.xlane.xlu0 %2704
        %v2706 = vsel %vm1576, %v2702, 0.0
        %2707 = vadd.xlane.f32.xlu0 %v2706
        %v2708 = vpop.xlane.xlu0 %2707
        %v2709 = vmul.f32 %v2705, %v1583
        %v2710 = vmul.f32 %v2708, %v1583
        %v2711 = vadd.f32 %v2709, 1e-06
        %v2712 = vadd.f32 %v2710, 1e-06
        %v2713 = vrsqrt.pop %v2711
        %v2714 = vrsqrt.pop %v2712
        %v2715 = vmul.f32 %v2699, %v2713
        %v2716 = vmul.f32 %v2700, %v2714
        %v2718 = vlaneseq
        %v2719 = vshrl.u32 %v2718, 7
        %v2720 = vsub.s32 0, %v2719
        %v2721 = vrot.slane %v2689, %v2720
        %v2723 = vmul.f32 %v2715, %v2721
        %v2724 = vmul.f32 %v2716, %v2721
        %v2726 = vlaneseq
        %v2727 = vshrl.u32 %v2726, 7
        %v2728 = vsub.s32 0, %v2727
        %v2729 = vrot.slane %v2690, %v2728
        %v2731 = vadd.f32 %v2723, %v2729
        %v2732 = vadd.f32 %v2724, %v2729
        %v2733 = vpack.c.bf16 %v2732, %v2731
        %v2734 = vld [vmem:[%s1005] sm:$0xff]
        %v2735 = vld [vmem:[%s1005 + $0x8] sm:$0xff]
        %v2736 = vld [vmem:[%s1005 + $0x10] sm:$0xff]
        %v2737 = vld [vmem:[%s1005 + $0x18] sm:$0xff]
        %v2738 = vld [vmem:[%s1005 + $0x20] sm:$0xff]
        %v2739 = vld [vmem:[%s1005 + $0x28] sm:$0xff]
        %v2740 = vld [vmem:[%s1005 + $0x30] sm:$0xff]
        %v2741 = vld [vmem:[%s1005 + $0x38] sm:$0xff]
        %v2742 = vld [vmem:[%s1009] sm:$0x3]
        %v2744 = vlaneseq
        %v2745 = vshrl.u32 %v2744, 7
        %v2746 = vsub.s32 0, %v2745
        %v2747 = vrot.slane %v2742, %v2746
        %v2748 = vlaneseq
        %v2749 = vshrl.u32 %v2748, 7
        %v2750 = vsub.s32 1, %v2749
        %v2751 = vrot.slane %v2742, %v2750
        %v2762 = vunpack.c.l.b16 %v2734
        %v2763 = vunpack.c.h.b16 %v2734
        %v2764 = vunpack.c.l.b16 %v2735
        %v2765 = vunpack.c.h.b16 %v2735
        %v2766 = vunpack.c.l.b16 %v2736
        %v2767 = vunpack.c.h.b16 %v2736
        %v2768 = vunpack.c.l.b16 %v2737
        %v2769 = vunpack.c.h.b16 %v2737
        %v2770 = vunpack.c.l.b16 %v2738
        %v2771 = vunpack.c.h.b16 %v2738
        %v2772 = vunpack.c.l.b16 %v2739
        %v2773 = vunpack.c.h.b16 %v2739
        %v2774 = vunpack.c.l.b16 %v2740
        %v2775 = vunpack.c.h.b16 %v2740
        %v2776 = vunpack.c.l.b16 %v2741
        %v2777 = vunpack.c.h.b16 %v2741
        %v2778 = vpack.c.b16 %v2764, %v2762
        %v2779 = vpack.c.b16 %v2765, %v2763
        %v2780 = vpack.c.b16 %v2768, %v2766
        %v2781 = vpack.c.b16 %v2769, %v2767
        %v2782 = vpack.c.b16 %v2772, %v2770
        %v2783 = vpack.c.b16 %v2773, %v2771
        %v2784 = vpack.c.b16 %v2776, %v2774
        %v2785 = vpack.c.b16 %v2777, %v2775
        %v2795 = vsel %vm1576, %v2733, 0
        %2797 = vmatprep.subr.bf16.mxu0 0
        %2798 = vmatpush1.bf16.msra.mxu0 0
        %2799 = vmatprep.subr.bf16.mxu0 0
        %2800 = vmatpush1.bf16.msra.mxu0 0
        %2801 = vmatprep.subr.bf16.mxu0 0
        %2802 = vmatpush1.bf16.msra.mxu0 0
        %2803 = vmatprep.subr.bf16.mxu0 0
        %2804 = vmatpush1.bf16.msra.mxu0 0
        %2805 = vmatprep.subr.bf16.mxu0 %v2785
        %2806 = vmatpush1.bf16.msra.mxu0 %v2784
        %2807 = vmatprep.subr.bf16.mxu0 %v2783
        %2808 = vmatpush1.bf16.msra.mxu0 %v2782
        %2809 = vmatprep.subr.bf16.mxu0 %v2781
        %2810 = vmatpush1.bf16.msra.mxu0 %v2780
        %2811 = vmatprep.subr.bf16.mxu0 %v2779
        %2812 = vmatpush1.bf16.msra.mxu0 %v2778
        %2813 = vmatprep.subr.bf16.mxu0 0
        %2814 = vmatpush2.bf16.msra.mxu0 0
        %2815 = vmatprep.subr.bf16.mxu0 0
        %2816 = vmatpush2.bf16.msra.mxu0 0
        %2817 = vmatprep.subr.bf16.mxu0 0
        %2818 = vmatpush2.bf16.msra.mxu0 0
        %2819 = vmatprep.subr.bf16.mxu0 0
        %2820 = vmatpush2.bf16.msra.mxu0 0
        %2821 = vmatprep.subr.bf16.mxu0 0
        %2822 = vmatpush2.bf16.msra.mxu0 0
        %2823 = vmatprep.subr.bf16.mxu0 0
        %2824 = vmatpush2.bf16.msra.mxu0 0
        %2825 = vmatprep.subr.bf16.mxu0 0
        %2826 = vmatpush2.bf16.msra.mxu0 0
        %2827 = vmatprep.subr.bf16.mxu0 0
        %2828 = vmatpush2.bf16.msra.mxu0 0
        %2829 = vmatprep.mubr.bf16.mxu0 0
        %2830 = vmatmul.mubr.bf16.gmra.mxu0 %v2795
        %v2831 = vpop.f32.mrf.mxu0
        %v2832 = vadd.f32 %v2747, %v2831
        %v2833 = vpop.f32.mrf.mxu0
        %v2834 = vadd.f32 %v2751, %v2833
        %v2835 = vpop.f32.mrf.mxu0
        %v2836 = vadd.f32 %v2747, %v2835
        %v2837 = vpop.f32.mrf.mxu0
        %v2838 = vadd.f32 %v2751, %v2837
        %2839 = vdwg.mxu0
        %v2840 = vmul.f32 %v2832, 0.5
        %v2841 = vmul.f32 %v2834, 0.5
        %v2842 = vmul.f32 %v2836, 0.5
        %v2843 = vmul.f32 %v2838, 0.5
        %v2844 = vmul.f32 %v2832, 0.70710677
        %v2845 = vmul.f32 %v2834, 0.70710677
        %v2846 = vmul.f32 %v2836, 0.70710677
        %v2847 = vmul.f32 %v2838, 0.70710677
        %v2848 = vand.u32 2147483647, %v2844
        %v2849 = vand.u32 2147483647, %v2845
        %v2850 = vand.u32 2147483647, %v2846
        %v2851 = vand.u32 2147483647, %v2847
        %v2852 = vmul.f32 %v2848, 0.3275911
        %v2853 = vmul.f32 %v2849, 0.3275911
        %v2854 = vmul.f32 %v2850, 0.3275911
        %v2855 = vmul.f32 %v2851, 0.3275911
        %v2856 = vadd.f32 %v2852, 1.0
        %v2857 = vadd.f32 %v2853, 1.0
        %v2858 = vadd.f32 %v2854, 1.0
        %v2859 = vadd.f32 %v2855, 1.0
        %v2860 = vrcp.pop %v2856
        %v2861 = vmul.f32 1.0, %v2860
        %v2862 = vrcp.pop %v2857
        %v2863 = vmul.f32 1.0, %v2862
        %v2864 = vrcp.pop %v2858
        %v2865 = vmul.f32 1.0, %v2864
        %v2866 = vrcp.pop %v2859
        %v2867 = vmul.f32 1.0, %v2866
        %v2868 = vmul.f32 %v2861, 1.0614054
        %v2869 = vmul.f32 %v2863, 1.0614054
        %v2870 = vmul.f32 %v2865, 1.0614054
        %v2871 = vmul.f32 %v2867, 1.0614054
        %v2872 = vadd.f32 %v2868, -1.4531521
        %v2873 = vadd.f32 %v2869, -1.4531521
        %v2874 = vadd.f32 %v2870, -1.4531521
        %v2875 = vadd.f32 %v2871, -1.4531521
        %v2876 = vmul.f32 %v2872, %v2861
        %v2877 = vmul.f32 %v2873, %v2863
        %v2878 = vmul.f32 %v2874, %v2865
        %v2879 = vmul.f32 %v2875, %v2867
        %v2880 = vadd.f32 %v2876, 1.4214138
        %v2881 = vadd.f32 %v2877, 1.4214138
        %v2882 = vadd.f32 %v2878, 1.4214138
        %v2883 = vadd.f32 %v2879, 1.4214138
        %v2884 = vmul.f32 %v2880, %v2861
        %v2885 = vmul.f32 %v2881, %v2863
        %v2886 = vmul.f32 %v2882, %v2865
        %v2887 = vmul.f32 %v2883, %v2867
        %v2888 = vadd.f32 %v2884, -0.28449672
        %v2889 = vadd.f32 %v2885, -0.28449672
        %v2890 = vadd.f32 %v2886, -0.28449672
        %v2891 = vadd.f32 %v2887, -0.28449672
        %v2892 = vmul.f32 %v2888, %v2861
        %v2893 = vmul.f32 %v2889, %v2863
        %v2894 = vmul.f32 %v2890, %v2865
        %v2895 = vmul.f32 %v2891, %v2867
        %v2896 = vadd.f32 %v2892, 0.2548296
        %v2897 = vadd.f32 %v2893, 0.2548296
        %v2898 = vadd.f32 %v2894, 0.2548296
        %v2899 = vadd.f32 %v2895, 0.2548296
        %v2900 = vmul.f32 %v2896, %v2861
        %v2901 = vmul.f32 %v2897, %v2863
        %v2902 = vmul.f32 %v2898, %v2865
        %v2903 = vmul.f32 %v2899, %v2867
        %v2904 = vsub.f32 0.0, %v2848
        %v2905 = vsub.f32 0.0, %v2849
        %v2906 = vsub.f32 0.0, %v2850
        %v2907 = vsub.f32 0.0, %v2851
        %v2908 = vmul.f32 %v2904, %v2848
        %v2909 = vmul.f32 %v2905, %v2849
        %v2910 = vmul.f32 %v2906, %v2850
        %v2911 = vmul.f32 %v2907, %v2851
        %v2912 = vmul.f32 %v2908, 1.442695
        %v2913 = vpow.pop %v2912
        %v2914 = vmul.f32 %v2909, 1.442695
        %v2915 = vpow.pop %v2914
        %v2916 = vmul.f32 %v2910, 1.442695
        %v2917 = vpow.pop %v2916
        %v2918 = vmul.f32 %v2911, 1.442695
        %v2919 = vpow.pop %v2918
        %v2920 = vmul.f32 %v2900, %v2913
        %v2921 = vmul.f32 %v2901, %v2915
        %v2922 = vmul.f32 %v2902, %v2917
        %v2923 = vmul.f32 %v2903, %v2919
        %v2924 = vsub.f32 1.0, %v2920
        %v2925 = vsub.f32 1.0, %v2921
        %v2926 = vsub.f32 1.0, %v2922
        %v2927 = vsub.f32 1.0, %v2923
        %vm2928 = vcmp.ge.f32.partialorder %v2844, 0.0
        %vm2929 = vcmp.ge.f32.partialorder %v2845, 0.0
        %vm2930 = vcmp.ge.f32.partialorder %v2846, 0.0
        %vm2931 = vcmp.ge.f32.partialorder %v2847, 0.0
        %v2932 = vsub.f32 0.0, %v2924
        %v2933 = vsub.f32 0.0, %v2925
        %v2934 = vsub.f32 0.0, %v2926
        %v2935 = vsub.f32 0.0, %v2927
        %v2936 = vsel %vm2928, %v2924, %v2932
        %v2937 = vsel %vm2929, %v2925, %v2933
        %v2938 = vsel %vm2930, %v2926, %v2934
        %v2939 = vsel %vm2931, %v2927, %v2935
        %v2940 = vadd.f32 %v2936, 1.0
        %v2941 = vadd.f32 %v2937, 1.0
        %v2942 = vadd.f32 %v2938, 1.0
        %v2943 = vadd.f32 %v2939, 1.0
        %v2944 = vmul.f32 %v2840, %v2940
        %v2945 = vmul.f32 %v2841, %v2941
        %v2946 = vmul.f32 %v2842, %v2942
        %v2947 = vmul.f32 %v2843, %v2943
        %v2948 = vpack.c.bf16 %v2946, %v2944
        %v2949 = vpack.c.bf16 %v2947, %v2945
        %v2950 = vld [vmem:[%s1014] sm:$0xf]
        %v2951 = vld [vmem:[%s1014 + $0x4] sm:$0xf]
        %v2952 = vld [vmem:[%s1014 + $0x8] sm:$0xf]
        %v2953 = vld [vmem:[%s1014 + $0xc] sm:$0xf]
        %v2954 = vld [vmem:[%s1014 + $0x10] sm:$0xf]
        %v2955 = vld [vmem:[%s1014 + $0x14] sm:$0xf]
        %v2956 = vld [vmem:[%s1014 + $0x18] sm:$0xf]
        %v2957 = vld [vmem:[%s1014 + $0x1c] sm:$0xf]
        %v2958 = vld [vmem:[%s1014 + $0x20] sm:$0xf]
        %v2959 = vld [vmem:[%s1014 + $0x24] sm:$0xf]
        %v2960 = vld [vmem:[%s1014 + $0x28] sm:$0xf]
        %v2961 = vld [vmem:[%s1014 + $0x2c] sm:$0xf]
        %v2962 = vld [vmem:[%s1014 + $0x30] sm:$0xf]
        %v2963 = vld [vmem:[%s1014 + $0x34] sm:$0xf]
        %v2964 = vld [vmem:[%s1014 + $0x38] sm:$0xf]
        %v2965 = vld [vmem:[%s1014 + $0x3c] sm:$0xf]
        %v2966 = vld [vmem:[%s1014 + $0x40] sm:$0xf]
        %v2967 = vld [vmem:[%s1014 + $0x44] sm:$0xf]
        %v2968 = vld [vmem:[%s1014 + $0x48] sm:$0xf]
        %v2969 = vld [vmem:[%s1014 + $0x4c] sm:$0xf]
        %v2970 = vld [vmem:[%s1014 + $0x50] sm:$0xf]
        %v2971 = vld [vmem:[%s1014 + $0x54] sm:$0xf]
        %v2972 = vld [vmem:[%s1014 + $0x58] sm:$0xf]
        %v2973 = vld [vmem:[%s1014 + $0x5c] sm:$0xf]
        %v2974 = vld [vmem:[%s1014 + $0x60] sm:$0xf]
        %v2975 = vld [vmem:[%s1014 + $0x64] sm:$0xf]
        %v2976 = vld [vmem:[%s1014 + $0x68] sm:$0xf]
        %v2977 = vld [vmem:[%s1014 + $0x6c] sm:$0xf]
        %v2978 = vld [vmem:[%s1014 + $0x70] sm:$0xf]
        %v2979 = vld [vmem:[%s1014 + $0x74] sm:$0xf]
        %v2980 = vld [vmem:[%s1014 + $0x78] sm:$0xf]
        %v2981 = vld [vmem:[%s1014 + $0x7c] sm:$0xf]
        %v2982 = vld [vmem:[%s1017] sm:$0x1]
        %v2984 = vlaneseq
        %v2985 = vshrl.u32 %v2984, 7
        %v2986 = vsub.s32 0, %v2985
        %v2987 = vrot.slane %v2982, %v2986
        %v3021 = vunpack.c.l.b16 %v2950
        %v3022 = vunpack.c.l.b16 %v2951
        %v3023 = vunpack.c.l.b16 %v2952
        %v3024 = vunpack.c.l.b16 %v2953
        %v3025 = vunpack.c.l.b16 %v2954
        %v3026 = vunpack.c.l.b16 %v2955
        %v3027 = vunpack.c.l.b16 %v2956
        %v3028 = vunpack.c.l.b16 %v2957
        %v3029 = vunpack.c.l.b16 %v2958
        %v3030 = vunpack.c.l.b16 %v2959
        %v3031 = vunpack.c.l.b16 %v2960
        %v3032 = vunpack.c.l.b16 %v2961
        %v3033 = vunpack.c.l.b16 %v2962
        %v3034 = vunpack.c.l.b16 %v2963
        %v3035 = vunpack.c.l.b16 %v2964
        %v3036 = vunpack.c.l.b16 %v2965
        %v3037 = vunpack.c.l.b16 %v2966
        %v3038 = vunpack.c.l.b16 %v2967
        %v3039 = vunpack.c.l.b16 %v2968
        %v3040 = vunpack.c.l.b16 %v2969
        %v3041 = vunpack.c.l.b16 %v2970
        %v3042 = vunpack.c.l.b16 %v2971
        %v3043 = vunpack.c.l.b16 %v2972
        %v3044 = vunpack.c.l.b16 %v2973
        %v3045 = vunpack.c.l.b16 %v2974
        %v3046 = vunpack.c.l.b16 %v2975
        %v3047 = vunpack.c.l.b16 %v2976
        %v3048 = vunpack.c.l.b16 %v2977
        %v3049 = vunpack.c.l.b16 %v2978
        %v3050 = vunpack.c.l.b16 %v2979
        %v3051 = vunpack.c.l.b16 %v2980
        %v3052 = vunpack.c.l.b16 %v2981
        %v3053 = vpack.c.b16 %v3022, %v3021
        %v3054 = vpack.c.b16 %v3024, %v3023
        %v3055 = vpack.c.b16 %v3026, %v3025
        %v3056 = vpack.c.b16 %v3028, %v3027
        %v3057 = vpack.c.b16 %v3030, %v3029
        %v3058 = vpack.c.b16 %v3032, %v3031
        %v3059 = vpack.c.b16 %v3034, %v3033
        %v3060 = vpack.c.b16 %v3036, %v3035
        %v3061 = vpack.c.b16 %v3038, %v3037
        %v3062 = vpack.c.b16 %v3040, %v3039
        %v3063 = vpack.c.b16 %v3042, %v3041
        %v3064 = vpack.c.b16 %v3044, %v3043
        %v3065 = vpack.c.b16 %v3046, %v3045
        %v3066 = vpack.c.b16 %v3048, %v3047
        %v3067 = vpack.c.b16 %v3050, %v3049
        %v3068 = vpack.c.b16 %v3052, %v3051
        %3085 = vmatprep.subr.bf16.mxu0 0
        %3086 = vmatpush1.bf16.msra.mxu0 %v3060
        %3087 = vmatprep.subr.bf16.mxu0 0
        %3088 = vmatpush1.bf16.msra.mxu0 %v3059
        %3089 = vmatprep.subr.bf16.mxu0 0
        %3090 = vmatpush1.bf16.msra.mxu0 %v3058
        %3091 = vmatprep.subr.bf16.mxu0 0
        %3092 = vmatpush1.bf16.msra.mxu0 %v3057
        %3093 = vmatprep.subr.bf16.mxu0 0
        %3094 = vmatpush1.bf16.msra.mxu0 %v3056
        %3095 = vmatprep.subr.bf16.mxu0 0
        %3096 = vmatpush1.bf16.msra.mxu0 %v3055
        %3097 = vmatprep.subr.bf16.mxu0 0
        %3098 = vmatpush1.bf16.msra.mxu0 %v3054
        %3099 = vmatprep.subr.bf16.mxu0 0
        %3100 = vmatpush1.bf16.msra.mxu0 %v3053
        %3101 = vmatprep.subr.bf16.mxu0 0
        %3102 = vmatpush2.bf16.msra.mxu0 %v3068
        %3103 = vmatprep.subr.bf16.mxu0 0
        %3104 = vmatpush2.bf16.msra.mxu0 %v3067
        %3105 = vmatprep.subr.bf16.mxu0 0
        %3106 = vmatpush2.bf16.msra.mxu0 %v3066
        %3107 = vmatprep.subr.bf16.mxu0 0
        %3108 = vmatpush2.bf16.msra.mxu0 %v3065
        %3109 = vmatprep.subr.bf16.mxu0 0
        %3110 = vmatpush2.bf16.msra.mxu0 %v3064
        %3111 = vmatprep.subr.bf16.mxu0 0
        %3112 = vmatpush2.bf16.msra.mxu0 %v3063
        %3113 = vmatprep.subr.bf16.mxu0 0
        %3114 = vmatpush2.bf16.msra.mxu0 %v3062
        %3115 = vmatprep.subr.bf16.mxu0 0
        %3116 = vmatpush2.bf16.msra.mxu0 %v3061
        %3117 = vmatprep.mubr.bf16.mxu0 %v2949
        %3118 = vmatmul.mubr.bf16.gmra.mxu0 %v2948
        %v3119 = vpop.f32.mrf.mxu0
        %v3120 = vadd.f32 %v2987, %v3119
        %v3121 = vpop.f32.mrf.mxu0
        %v3122 = vpop.f32.mrf.mxu0
        %v3123 = vadd.f32 %v2987, %v3122
        %v3124 = vpop.f32.mrf.mxu0
        %3125 = vdwg.mxu0
        %v3126 = vadd.f32 %v2687, %v3120
        %v3127 = vadd.f32 %v2688, %v3123
        %3128 = vst.msk [vmem:[#allocation2] sm:$0xff] %vm1576, %v3126
        %3129 = vst.msk [vmem:[#allocation2 + $0x8] sm:$0xff] %vm1576, %v3127
        %p3130 = scmp.eq.s32.totalorder %s41, 1
        // Predicated region
        $region121: #{dino_vit_forward.1} parent=115 // pred_check
          %p3131 = pneg %p3130
        $region122: #{dino_vit_forward.1} parent=115 // pred_check_branch
          %3133 = sbr.rel (%p3131) target = $region124
        $region123: #{dino_vit_forward.1} parent=115 // pred_region
          %v3134 = vld [vmem:[%s20] sm:$0x1]
          %v3135 = vld [vmem:[%s21] sm:$0x1]
          %v3138 = vrot.slane %v3127, 7
          %vm3139 = vcmask 1041409
          %v3140 = vsel %vm3139, %v3138, %v3126
          %vm3142 = vcmask 517120
          %v3143 = vsel %vm3142, %v3140, 0.0
          %3144 = vadd.xlane.f32.xlu0 %v3143
          %v3145 = vpop.xlane.xlu0 %3144
          %v3146 = vmul.f32 %v3145, %v1583
          %v3148 = vrot.slane %v3146, 1
          %v3151 = vsub.f32 %v3126, %v3146
          %v3152 = vsub.f32 %v3127, %v3148
          %v3153 = vmul.f32 %v3151, %v3151
          %v3154 = vmul.f32 %v3152, %v3152
          %v3157 = vrot.slane %v3154, 7
          %v3158 = vsel %vm3139, %v3157, %v3153
          %v3160 = vsel %vm3142, %v3158, 0.0
          %3161 = vadd.xlane.f32.xlu0 %v3160
          %v3162 = vpop.xlane.xlu0 %3161
          %v3163 = vmul.f32 %v3162, %v1583
          %v3164 = vadd.f32 %v3163, 1e-06
          %v3165 = vrsqrt.pop %v3164
          %v3167 = vrot.slane %v3165, 1
          %v3170 = vmul.f32 %v3151, %v3165
          %v3171 = vmul.f32 %v3152, %v3167
          %v3173 = vlaneseq
          %v3174 = vshrl.u32 %v3173, 7
          %v3175 = vsub.s32 0, %v3174
          %v3176 = vrot.slane %v3134, %v3175
          %v3178 = vmul.f32 %v3170, %v3176
          %v3179 = vmul.f32 %v3171, %v3176
          %v3181 = vlaneseq
          %v3182 = vshrl.u32 %v3181, 7
          %v3183 = vsub.s32 0, %v3182
          %v3184 = vrot.slane %v3135, %v3183
          %v3186 = vadd.f32 %v3178, %v3184
          %v3187 = vadd.f32 %v3179, %v3184
          %v3188 = vpack.c.bf16 %v3186, %v3186
          %v3189 = vpack.c.bf16 %v3187, %v3187
          %v3190 = vld [vmem:[%s22] sm:$0xf]
          %v3191 = vld [vmem:[%s22 + $0x4] sm:$0xf]
          %v3192 = vld [vmem:[%s22 + $0x8] sm:$0xf]
          %v3193 = vld [vmem:[%s22 + $0xc] sm:$0xf]
          %v3194 = vld [vmem:[%s22 + $0x10] sm:$0xf]
          %v3195 = vld [vmem:[%s22 + $0x14] sm:$0xf]
          %v3196 = vld [vmem:[%s22 + $0x18] sm:$0xf]
          %v3197 = vld [vmem:[%s22 + $0x1c] sm:$0xf]
          %v3198 = vld [vmem:[%s23] sm:$0x1]
          %v3200 = vlaneseq
          %v3201 = vshrl.u32 %v3200, 7
          %v3202 = vsub.s32 0, %v3201
          %v3203 = vrot.slane %v3198, %v3202
          %v3207 = vunpack.c.l.b16 %v3188
          %v3208 = vunpack.c.l.b16 %v3189
          %v3209 = vrot.slane %v3208, 7
          %v3210 = vsel %vm3139, %v3209, %v3207
          %v3211 = vpack.c.b16 %v3210, %v3210
          %v3220 = vunpack.c.l.b16 %v3190
          %v3221 = vunpack.c.l.b16 %v3191
          %v3222 = vunpack.c.l.b16 %v3192
          %v3223 = vunpack.c.l.b16 %v3193
          %v3224 = vunpack.c.l.b16 %v3194
          %v3225 = vunpack.c.l.b16 %v3195
          %v3226 = vunpack.c.l.b16 %v3196
          %v3227 = vunpack.c.l.b16 %v3197
          %v3228 = vpack.c.b16 %v3221, %v3220
          %v3229 = vpack.c.b16 %v3223, %v3222
          %v3230 = vpack.c.b16 %v3225, %v3224
          %v3231 = vpack.c.b16 %v3227, %v3226
          %v3237 = vsel %vm1576, %v3211, 0
          %3239 = vmatprep.subr.bf16.mxu0 0
          %3240 = vmatpush1.bf16.msra.mxu0 0
          %3241 = vmatprep.subr.bf16.mxu0 0
          %3242 = vmatpush1.bf16.msra.mxu0 0
          %3243 = vmatprep.subr.bf16.mxu0 0
          %3244 = vmatpush1.bf16.msra.mxu0 0
          %3245 = vmatprep.subr.bf16.mxu0 0
          %3246 = vmatpush1.bf16.msra.mxu0 0
          %3247 = vmatprep.subr.bf16.mxu0 0
          %3248 = vmatpush1.bf16.msra.mxu0 %v3231
          %3249 = vmatprep.subr.bf16.mxu0 0
          %3250 = vmatpush1.bf16.msra.mxu0 %v3230
          %3251 = vmatprep.subr.bf16.mxu0 0
          %3252 = vmatpush1.bf16.msra.mxu0 %v3229
          %3253 = vmatprep.subr.bf16.mxu0 0
          %3254 = vmatpush1.bf16.msra.mxu0 %v3228
          %3255 = vmatprep.subr.bf16.mxu0 0
          %3256 = vmatpush2.bf16.msra.mxu0 0
          %3257 = vmatprep.subr.bf16.mxu0 0
          %3258 = vmatpush2.bf16.msra.mxu0 0
          %3259 = vmatprep.subr.bf16.mxu0 0
          %3260 = vmatpush2.bf16.msra.mxu0 0
          %3261 = vmatprep.subr.bf16.mxu0 0
          %3262 = vmatpush2.bf16.msra.mxu0 0
          %3263 = vmatprep.subr.bf16.mxu0 0
          %3264 = vmatpush2.bf16.msra.mxu0 0
          %3265 = vmatprep.subr.bf16.mxu0 0
          %3266 = vmatpush2.bf16.msra.mxu0 0
          %3267 = vmatprep.subr.bf16.mxu0 0
          %3268 = vmatpush2.bf16.msra.mxu0 0
          %3269 = vmatprep.subr.bf16.mxu0 0
          %3270 = vmatpush2.bf16.msra.mxu0 0
          %3271 = vmatprep.mubr.bf16.mxu0 0
          %3272 = vmatmul.mubr.bf16.gmra.mxu0 %v3237
          %v3273 = vpop.f32.mrf.mxu0
          %v3274 = vadd.f32 %v3203, %v3273
          %v3275 = vpop.f32.mrf.mxu0
          %v3276 = vpop.f32.mrf.mxu0
          %v3277 = vpop.f32.mrf.mxu0
          %3278 = vdwg.mxu0
          %3279 = vst [vmem:[#allocation3] sm:$0x3] %v3274
        $region124: #{dino_vit_forward.1} parent=115 // pred_fallthru
          _
        // Predicated region
        $region125: #{dino_vit_forward.1} parent=115 // pred_check
          %p3280 = pneg %p655
        $region126: #{dino_vit_forward.1} parent=115 // pred_check_branch
          %3282 = sbr.rel (%p3280) target = $region128
        $region127: #{dino_vit_forward.1} parent=115 // pred_region
          %s3284 = ssub.s32 32, 32
          %3285 = vsyncadd [#allocation4], %s3284
          %s3286 = smul.addr %s40, 32
          %s3287 = scalar_lea.hbm %s24, %s3286
          %s3289 = sshll.u32 [#allocation3], 4
          %s3290 = int_to_ptr.vmem [resolvable:$true] %s3289
          %3292 = dma.vmem_to_hbm [thread:$0]  %s3290, 32, %s3287, [#allocation4]
        $region128: #{dino_vit_forward.1} parent=115 // pred_fallthru
          _
        // Predicated region
        $region129: #{dino_vit_forward.1} parent=115 // pred_check
          %p3293 = pneg %p655
        $region130: #{dino_vit_forward.1} parent=115 // pred_check_branch
          %3295 = sbr.rel (%p3293) target = $region132
        $region131: #{dino_vit_forward.1} parent=115 // pred_region
          %3296 = dma.done [#allocation4], 32
        $region132: #{dino_vit_forward.1} parent=115 // pred_fallthru
          _
      $region116: #{dino_vit_forward.1} parent=5 // pred_fallthru
        _
      %p3297 = scmp.le.s32.totalorder 2, %s31
      // Predicated region
      $region133: #{dino_vit_forward.1} parent=5 // pred_check
        %p3298 = pneg %p3297
      $region134: #{dino_vit_forward.1} parent=5 // pred_check_branch
        %3300 = sbr.rel (%p3298) target = $region136
      $region135: #{dino_vit_forward.1} parent=5 // pred_region
        %s3301 = ssub.s32 %s31, 2
      $region136: #{dino_vit_forward.1} parent=5 // pred_fallthru
        _
    $region6: #{dino_vit_forward.1} parent=1 // loop_footer
      %s35 = sadd.s32 1, %s31
    $region7: #{dino_vit_forward.1} parent=1 // loop_footer_branch
      %30 = sbr.rel target = $region3
    $region8: #{dino_vit_forward.1} parent=1 // loop_exit
      _
    %3302 = vsyncpa [#allocation4], 1
    %s3303 = scalar_lea.sflag [#allocation4], 1
    %3304 = vsyncpa %s3303, 1

</llo_original>
